<compile_context>
chip_gen: v7x
topology: tpu7x:2x2x1
jax: 0.10.0
libtpu: 0.0.40
codegen_flags: <defaults>
</compile_context>

<pallas_src>
import functools

import jax
import jax.numpy as jnp
import numpy as np
from jax import lax
from jax.experimental import pallas as pl
from jax.experimental.pallas import tpu as pltpu


def _round_up(x, m):
    return (x + m - 1) // m * m


# ----------------------------------------------------------------------------
# Fused Pallas kernel: one output-channel tile of conv + bias + ReLU + BN
# ----------------------------------------------------------------------------
def _cbr2d_kernel(xp_ref, w_ref, b_ref, g_ref, bt_ref, o_ref, lhs_ref, *,
                  N, Ho, Wo, Cin, kh, kw, sh, sw, K, eps):
    """Fused CBR2d forward for one channel tile.

    xp_ref  : (N, Hp, Wp, Cin) bf16 padded NHWC input (block index is constant
              across grid steps -> fetched once, stays VMEM-resident)
    w_ref   : (Kp, Ct)  bf16  folded weight slice, rows ordered (dy, dx, ci),
              zero-padded to Kp rows
    b_ref   : (1, Ct)   f32   conv-bias slice
    g_ref   : (1, Ct)   f32   BN gamma slice
    bt_ref  : (1, Ct)   f32   BN beta slice
    o_ref   : (M, Ct)   f32   output slice, M = N*Ho*Wo (doubles as y buffer)
    lhs_ref : (M, Kp)   bf16  scratch: lane-dense im2col LHS
    """
    M = N * Ho * Wo
    Kp = lhs_ref.shape[1]

    def tap_ds(start, size, stride):
        return pl.ds(start, size) if stride == 1 else pl.ds(start, size, stride)

    # ---- in-VMEM im2col into a lane-dense (M, Kp) bf16 scratch -------------
    if K < Kp:
        # Zero the pad columns: the matching weight rows are zero, but
        # uninitialized VMEM could hold NaN and NaN * 0 would poison the acc.
        lhs_ref[:, K:] = jnp.zeros((M, Kp - K), jnp.bfloat16)
    for dy in range(kh):
        for dx in range(kw):
            t = dy * kw + dx
            tap = xp_ref[:, tap_ds(dy, Ho, sh), tap_ds(dx, Wo, sw), :]
            lhs_ref[:, t * Cin:(t + 1) * Cin] = tap.reshape(M, Cin)

    # ---- conv: ONE MXU matmul with f32 accumulation, then bias + ReLU ------
    # o_ref is used as the activation buffer (no separate acc/y/out f32 live).
    o_ref[...] = jnp.maximum(
        jnp.dot(lhs_ref[...], w_ref[...], preferred_element_type=jnp.float32)
        + b_ref[...], 0.0)

    # ---- training-mode BatchNorm2d: single-pass exact batch stats ----------
    y = o_ref[...]
    inv_m = 1.0 / float(M)
    mean = jnp.sum(y, axis=0, keepdims=True) * inv_m
    var = jnp.maximum(
        jnp.sum(y * y, axis=0, keepdims=True) * inv_m - mean * mean, 0.0)
    scale = g_ref[...] * lax.rsqrt(var + eps)      # gamma / sqrt(var + eps)
    shift = bt_ref[...] - mean * scale             # beta - mean * scale
    o_ref[...] = y * scale + shift                 # in-place normalize+affine


# ----------------------------------------------------------------------------
# Wrapper
# ----------------------------------------------------------------------------
def cbr2d_forward(x_nchw, w, b, gamma, beta, *, stride, padding, eps=1e-5,
                  c_tile=256, vmem_limit_bytes=48 * 1024 * 1024,
                  mxu_dtype=jnp.bfloat16):
    """CBR2d forward: relu(conv2d(x, w, b)) -> BatchNorm2d (batch stats).

    x_nchw : (N, Cin, H, W)       (PyTorch layout)
    w      : (Cout, Cin, kh, kw)
    b, gamma, beta : (Cout,)
    c_tile : output-channel tile width (use 256 for v6e/v7x MXU, 128 on v5e).
    mxu_dtype : MXU operand dtype (bf16; pass jnp.float32 for tighter parity).
    """
    N, Cin, H, W = x_nchw.shape
    Cout, Cin_w, kh, kw = w.shape
    assert Cin == Cin_w, (Cin, Cin_w)
    sh, sw = stride
    ph, pw = padding
    Ho = (H + 2 * ph - kh) // sh + 1
    Wo = (W + 2 * pw - kw) // sw + 1
    Hp, Wp = H + 2 * ph, W + 2 * pw
    M = N * Ho * Wo
    K = kh * kw * Cin
    Kp = _round_up(K, 128)                 # lane-dense contraction dim
    Cp = _round_up(Cout, 128)              # lane-dense channel dim
    ct = c_tile if (c_tile <= Cp and Cp % c_tile == 0) else 128
    n_ct = Cp // ct

    # NCHW -> NHWC once at the boundary; spatial zero-pad; MXU dtype.
    x = jnp.transpose(x_nchw, (0, 2, 3, 1))
    xp = jnp.pad(x, ((0, 0), (ph, ph), (pw, pw), (0, 0))).astype(mxu_dtype)

    # Fold the taps into the contraction dim: (Cout,Cin,kh,kw) ->
    # (kh,kw,Cin,Cout) -> (K, Cout) with rows ordered (dy, dx, ci) to match the
    # in-kernel im2col column order; zero-pad to (Kp, Cp).
    wt = jnp.transpose(w, (2, 3, 1, 0)).reshape(K, Cout).astype(jnp.float32)
    wt = jnp.pad(wt, ((0, Kp - K), (0, Cp - Cout))).astype(mxu_dtype)

    def per_channel(v):
        return jnp.pad(v.astype(jnp.float32), (0, Cp - Cout)).reshape(1, Cp)

    bp, gp, btp = per_channel(b), per_channel(gamma), per_channel(beta)

    kernel = functools.partial(
        _cbr2d_kernel, N=N, Ho=Ho, Wo=Wo, Cin=Cin, kh=kh, kw=kw,
        sh=sh, sw=sw, K=K, eps=eps)

    out = pl.pallas_call(
        kernel,
        out_shape=jax.ShapeDtypeStruct((M, Cp), jnp.float32),
        grid=(n_ct,),
        in_specs=[
            # Padded input: same block for every channel step -> resident.
            pl.BlockSpec((N, Hp, Wp, Cin), lambda c: (0, 0, 0, 0)),
            pl.BlockSpec((Kp, ct), lambda c: (0, c)),   # folded weights slice
            pl.BlockSpec((1, ct), lambda c: (0, c)),    # conv bias slice
            pl.BlockSpec((1, ct), lambda c: (0, c)),    # BN gamma slice
            pl.BlockSpec((1, ct), lambda c: (0, c)),    # BN beta slice
        ],
        out_specs=pl.BlockSpec((M, ct), lambda c: (0, c)),
        scratch_shapes=[pltpu.VMEM((M, Kp), mxu_dtype)],   # im2col LHS
        compiler_params=pltpu.CompilerParams(
            dimension_semantics=("parallel",),          # v7x megacore; free elsewhere
            vmem_limit_bytes=vmem_limit_bytes),
    )(xp, wt, bp, gp, btp)

    # Channel slice + leading-dim-split reshape + NHWC->NCHW transpose fuse
    # into a single XLA copy (the transpose to NCHW is required by the module).
    y = out[:, :Cout].reshape(N, Ho, Wo, Cout)
    return jnp.transpose(y, (0, 3, 1, 2))


# ----------------------------------------------------------------------------
# Pure-JAX reference (mirrors the PyTorch forward) for a sanity check
# ----------------------------------------------------------------------------
def cbr2d_reference(x, w, b, gamma, beta, *, stride, padding, eps=1e-5):
    y = lax.conv_general_dilated(
        x, w, window_strides=stride,
        padding=[(padding[0], padding[0]), (padding[1], padding[1])],
        dimension_numbers=("NCHW", "OIHW", "NCHW"))
    y = jnp.maximum(y + b.reshape(1, -1, 1, 1), 0.0)
    mean = jnp.mean(y, axis=(0, 2, 3), keepdims=True)
    var = jnp.mean(jnp.square(y - mean), axis=(0, 2, 3), keepdims=True)
    y = (y - mean) * lax.rsqrt(var + eps)
    return y * gamma.reshape(1, -1, 1, 1) + beta.reshape(1, -1, 1, 1)


# ----------------------------------------------------------------------------
# Demo / self-test
# ----------------------------------------------------------------------------
if __name__ == "__main__":
    key = jax.random.PRNGKey(0)

    # (N, Cin, H, W, Cout, k, s, p)
    configs = [
        (2, 4, 16, 16, 32, 3, 1, 1),    # Cout < 128: channel pad + slice path
        (2, 8, 12, 12, 320, 3, 2, 1),   # stride 2, 3 channel-tile grid steps
        (1, 16, 8, 8, 512, 3, 1, 1),    # 256-wide channel tiles, Kp = 256
    ]

    for idx, (N, Cin, H, W, Cout, k, s, p) in enumerate(configs):
        key, kx, kwt, kb, kg, kbt = jax.random.split(key, 6)
        x = jax.random.normal(kx, (N, Cin, H, W), jnp.float32)
        fan_in = Cin * k * k
        bound = 1.0 / np.sqrt(fan_in)
        w = jax.random.uniform(kwt, (Cout, Cin, k, k), jnp.float32,
                               -bound, bound)
        b = jax.random.uniform(kb, (Cout,), jnp.float32, -bound, bound)
        # Random affine params to exercise the full BN math (a fresh PyTorch
        # module uses gamma=1, beta=0; the forward formula is identical).
        gamma = jax.random.uniform(kg, (Cout,), jnp.float32, 0.5, 1.5)
        beta = jax.random.uniform(kbt, (Cout,), jnp.float32, -0.5, 0.5)

        fwd = jax.jit(functools.partial(cbr2d_forward, stride=(s, s),
                                        padding=(p, p)))
        out = jax.block_until_ready(fwd(x, w, b, gamma, beta))
        Ho = (H + 2 * p - k) // s + 1
        Wo = (W + 2 * p - k) // s + 1
        assert out.shape == (N, Cout, Ho, Wo), (idx, out.shape)

        ref = jax.block_until_ready(
            cbr2d_reference(x, w, b, gamma, beta, stride=(s, s),
                            padding=(p, p)))
        max_err = float(np.max(np.abs(np.asarray(out) - np.asarray(ref))))
        assert np.allclose(np.asarray(out), np.asarray(ref),
                           rtol=5e-2, atol=5e-2), (
            "config %d mismatch vs reference, max abs diff = %g"
            % (idx, max_err))

    print("KERNEL_OK")
</pallas_src>

<mosaic_0001>
module attributes {stable_mosaic.version = 11 : i64} {
  func.func @_cbr2d_kernel(%arg0: i32, %arg1: memref<2x18x18x4xbf16, #tpu.memory_space<vmem>>, %arg2: memref<128x128xbf16, #tpu.memory_space<vmem>>, %arg3: memref<1x128xf32, #tpu.memory_space<vmem>>, %arg4: memref<1x128xf32, #tpu.memory_space<vmem>>, %arg5: memref<1x128xf32, #tpu.memory_space<vmem>>, %arg6: memref<512x128xf32, #tpu.memory_space<vmem>>, %arg7: memref<512x128xbf16, #tpu.memory_space<vmem>>) attributes {dimension_semantics = [#tpu.dimension_semantics<parallel>], iteration_bounds = array<i64: 1>, scalar_prefetch = 0 : i64, scratch_operands = 1 : i64, tpu.core_type = #tpu.core_type<tc>, window_params = [{pipeline_mode = #tpu.pipeline_mode<synchronous>, transform_indices = @transform_0, window_bounds = array<i64: 2, 18, 18, 4>}, {transform_indices = @transform_1, window_bounds = array<i64: 128, 128>}, {transform_indices = @transform_2, window_bounds = array<i64: 1, 128>}, {transform_indices = @transform_3, window_bounds = array<i64: 1, 128>}, {transform_indices = @transform_4, window_bounds = array<i64: 1, 128>}, {transform_indices = @transform_5, window_bounds = array<i64: 512, 128>}]} {
    %cst = arith.constant 0.000000e+00 : bf16
    %0 = vector.broadcast %cst : bf16 to vector<512x92xbf16>
    %c0 = arith.constant 0 : index
    %c36 = arith.constant 36 : index
    %1 = vector.load %arg7[%c0, %c36] : memref<512x128xbf16, #tpu.memory_space<vmem>>, vector<512x92xbf16>
    tpu.vector_store %arg7[%c0, %c36], %0 {strides = array<i32>} : memref<512x128xbf16, #tpu.memory_space<vmem>>, vector<512x92xbf16>,
    %c0_0 = arith.constant 0 : index
    %c0_1 = arith.constant 0 : index
    %c0_2 = arith.constant 0 : index
    %c0_3 = arith.constant 0 : index
    %2 = vector.load %arg1[%c0_0, %c0_1, %c0_2, %c0_3] : memref<2x18x18x4xbf16, #tpu.memory_space<vmem>>, vector<2x16x16x4xbf16>
    %3 = vector.shape_cast %2 : vector<2x16x16x4xbf16> to vector<512x4xbf16>
    %c0_4 = arith.constant 0 : index
    %c0_5 = arith.constant 0 : index
    %4 = vector.load %arg7[%c0_4, %c0_5] : memref<512x128xbf16, #tpu.memory_space<vmem>>, vector<512x4xbf16>
    tpu.vector_store %arg7[%c0_4, %c0_5], %3 {strides = array<i32>} : memref<512x128xbf16, #tpu.memory_space<vmem>>, vector<512x4xbf16>,
    %c0_6 = arith.constant 0 : index
    %c0_7 = arith.constant 0 : index
    %c1 = arith.constant 1 : index
    %c0_8 = arith.constant 0 : index
    %5 = vector.load %arg1[%c0_6, %c0_7, %c1, %c0_8] : memref<2x18x18x4xbf16, #tpu.memory_space<vmem>>, vector<2x16x16x4xbf16>
    %6 = vector.shape_cast %5 : vector<2x16x16x4xbf16> to vector<512x4xbf16>
    %c0_9 = arith.constant 0 : index
    %c4 = arith.constant 4 : index
    %7 = vector.load %arg7[%c0_9, %c4] : memref<512x128xbf16, #tpu.memory_space<vmem>>, vector<512x4xbf16>
    tpu.vector_store %arg7[%c0_9, %c4], %6 {strides = array<i32>} : memref<512x128xbf16, #tpu.memory_space<vmem>>, vector<512x4xbf16>,
    %c0_10 = arith.constant 0 : index
    %c0_11 = arith.constant 0 : index
    %c2 = arith.constant 2 : index
    %c0_12 = arith.constant 0 : index
    %8 = vector.load %arg1[%c0_10, %c0_11, %c2, %c0_12] : memref<2x18x18x4xbf16, #tpu.memory_space<vmem>>, vector<2x16x16x4xbf16>
    %9 = vector.shape_cast %8 : vector<2x16x16x4xbf16> to vector<512x4xbf16>
    %c0_13 = arith.constant 0 : index
    %c8 = arith.constant 8 : index
    %10 = vector.load %arg7[%c0_13, %c8] : memref<512x128xbf16, #tpu.memory_space<vmem>>, vector<512x4xbf16>
    tpu.vector_store %arg7[%c0_13, %c8], %9 {strides = array<i32>} : memref<512x128xbf16, #tpu.memory_space<vmem>>, vector<512x4xbf16>,
    %c0_14 = arith.constant 0 : index
    %c1_15 = arith.constant 1 : index
    %c0_16 = arith.constant 0 : index
    %c0_17 = arith.constant 0 : index
    %11 = vector.load %arg1[%c0_14, %c1_15, %c0_16, %c0_17] : memref<2x18x18x4xbf16, #tpu.memory_space<vmem>>, vector<2x16x16x4xbf16>
    %12 = vector.shape_cast %11 : vector<2x16x16x4xbf16> to vector<512x4xbf16>
    %c0_18 = arith.constant 0 : index
    %c12 = arith.constant 12 : index
    %13 = vector.load %arg7[%c0_18, %c12] : memref<512x128xbf16, #tpu.memory_space<vmem>>, vector<512x4xbf16>
    tpu.vector_store %arg7[%c0_18, %c12], %12 {strides = array<i32>} : memref<512x128xbf16, #tpu.memory_space<vmem>>, vector<512x4xbf16>,
    %c0_19 = arith.constant 0 : index
    %c1_20 = arith.constant 1 : index
    %c1_21 = arith.constant 1 : index
    %c0_22 = arith.constant 0 : index
    %14 = vector.load %arg1[%c0_19, %c1_20, %c1_21, %c0_22] : memref<2x18x18x4xbf16, #tpu.memory_space<vmem>>, vector<2x16x16x4xbf16>
    %15 = vector.shape_cast %14 : vector<2x16x16x4xbf16> to vector<512x4xbf16>
    %c0_23 = arith.constant 0 : index
    %c16 = arith.constant 16 : index
    %16 = vector.load %arg7[%c0_23, %c16] : memref<512x128xbf16, #tpu.memory_space<vmem>>, vector<512x4xbf16>
    tpu.vector_store %arg7[%c0_23, %c16], %15 {strides = array<i32>} : memref<512x128xbf16, #tpu.memory_space<vmem>>, vector<512x4xbf16>,
    %c0_24 = arith.constant 0 : index
    %c1_25 = arith.constant 1 : index
    %c2_26 = arith.constant 2 : index
    %c0_27 = arith.constant 0 : index
    %17 = vector.load %arg1[%c0_24, %c1_25, %c2_26, %c0_27] : memref<2x18x18x4xbf16, #tpu.memory_space<vmem>>, vector<2x16x16x4xbf16>
    %18 = vector.shape_cast %17 : vector<2x16x16x4xbf16> to vector<512x4xbf16>
    %c0_28 = arith.constant 0 : index
    %c20 = arith.constant 20 : index
    %19 = vector.load %arg7[%c0_28, %c20] : memref<512x128xbf16, #tpu.memory_space<vmem>>, vector<512x4xbf16>
    tpu.vector_store %arg7[%c0_28, %c20], %18 {strides = array<i32>} : memref<512x128xbf16, #tpu.memory_space<vmem>>, vector<512x4xbf16>,
    %c0_29 = arith.constant 0 : index
    %c2_30 = arith.constant 2 : index
    %c0_31 = arith.constant 0 : index
    %c0_32 = arith.constant 0 : index
    %20 = vector.load %arg1[%c0_29, %c2_30, %c0_31, %c0_32] : memref<2x18x18x4xbf16, #tpu.memory_space<vmem>>, vector<2x16x16x4xbf16>
    %21 = vector.shape_cast %20 : vector<2x16x16x4xbf16> to vector<512x4xbf16>
    %c0_33 = arith.constant 0 : index
    %c24 = arith.constant 24 : index
    %22 = vector.load %arg7[%c0_33, %c24] : memref<512x128xbf16, #tpu.memory_space<vmem>>, vector<512x4xbf16>
    tpu.vector_store %arg7[%c0_33, %c24], %21 {strides = array<i32>} : memref<512x128xbf16, #tpu.memory_space<vmem>>, vector<512x4xbf16>,
    %c0_34 = arith.constant 0 : index
    %c2_35 = arith.constant 2 : index
    %c1_36 = arith.constant 1 : index
    %c0_37 = arith.constant 0 : index
    %23 = vector.load %arg1[%c0_34, %c2_35, %c1_36, %c0_37] : memref<2x18x18x4xbf16, #tpu.memory_space<vmem>>, vector<2x16x16x4xbf16>
    %24 = vector.shape_cast %23 : vector<2x16x16x4xbf16> to vector<512x4xbf16>
    %c0_38 = arith.constant 0 : index
    %c28 = arith.constant 28 : index
    %25 = vector.load %arg7[%c0_38, %c28] : memref<512x128xbf16, #tpu.memory_space<vmem>>, vector<512x4xbf16>
    tpu.vector_store %arg7[%c0_38, %c28], %24 {strides = array<i32>} : memref<512x128xbf16, #tpu.memory_space<vmem>>, vector<512x4xbf16>,
    %c0_39 = arith.constant 0 : index
    %c2_40 = arith.constant 2 : index
    %c2_41 = arith.constant 2 : index
    %c0_42 = arith.constant 0 : index
    %26 = vector.load %arg1[%c0_39, %c2_40, %c2_41, %c0_42] : memref<2x18x18x4xbf16, #tpu.memory_space<vmem>>, vector<2x16x16x4xbf16>
    %27 = vector.shape_cast %26 : vector<2x16x16x4xbf16> to vector<512x4xbf16>
    %c0_43 = arith.constant 0 : index
    %c32 = arith.constant 32 : index
    %28 = vector.load %arg7[%c0_43, %c32] : memref<512x128xbf16, #tpu.memory_space<vmem>>, vector<512x4xbf16>
    tpu.vector_store %arg7[%c0_43, %c32], %27 {strides = array<i32>} : memref<512x128xbf16, #tpu.memory_space<vmem>>, vector<512x4xbf16>,
    %c0_44 = arith.constant 0 : index
    %c0_45 = arith.constant 0 : index
    %29 = vector.load %arg7[%c0_44, %c0_45] : memref<512x128xbf16, #tpu.memory_space<vmem>>, vector<512x128xbf16>
    %c0_46 = arith.constant 0 : index
    %c0_47 = arith.constant 0 : index
    %30 = vector.load %arg2[%c0_46, %c0_47] : memref<128x128xbf16, #tpu.memory_space<vmem>>, vector<128x128xbf16>
    %cst_48 = arith.constant dense<0.000000e+00> : vector<512x128xf32>
    %31 = tpu.matmul %29, %30, %cst_48 {dimension_numbers = #tpu.dot_dimension_numbers<[1], [0], [0], [1], [0, 0, 1, 1], [], []>} : vector<512x128xbf16>, vector<128x128xbf16>, vector<512x128xf32> -> vector<512x128xf32>
    %c0_49 = arith.constant 0 : index
    %c0_50 = arith.constant 0 : index
    %32 = vector.load %arg3[%c0_49, %c0_50] : memref<1x128xf32, #tpu.memory_space<vmem>>, vector<1x128xf32>
    %33 = vector.broadcast %32 : vector<1x128xf32> to vector<512x128xf32>
    %34 = arith.addf %31, %33 : vector<512x128xf32>
    %cst_51 = arith.constant 0.000000e+00 : f32
    %35 = vector.broadcast %cst_51 : f32 to vector<512x128xf32>
    %36 = arith.maximumf %34, %35 : vector<512x128xf32>
    %c0_52 = arith.constant 0 : index
    %c0_53 = arith.constant 0 : index
    %37 = vector.load %arg6[%c0_52, %c0_53] : memref<512x128xf32, #tpu.memory_space<vmem>>, vector<512x128xf32>
    tpu.vector_store %arg6[%c0_52, %c0_53], %36 {strides = array<i32>} : memref<512x128xf32, #tpu.memory_space<vmem>>, vector<512x128xf32>,
    %c0_54 = arith.constant 0 : index
    %c0_55 = arith.constant 0 : index
    %38 = vector.load %arg6[%c0_54, %c0_55] : memref<512x128xf32, #tpu.memory_space<vmem>>, vector<512x128xf32>
    %cst_56 = arith.constant dense<0.000000e+00> : vector<128xf32>
    %39 = vector.multi_reduction <add>, %38, %cst_56 [0] : vector<512x128xf32> to vector<128xf32>
    %40 = vector.shape_cast %39 : vector<128xf32> to vector<1x128xf32>
    %cst_57 = arith.constant 0.001953125 : f32
    %41 = vector.broadcast %cst_57 : f32 to vector<1x128xf32>
    %42 = arith.mulf %40, %41 : vector<1x128xf32>
    %43 = arith.mulf %38, %38 : vector<512x128xf32>
    %cst_58 = arith.constant dense<0.000000e+00> : vector<128xf32>
    %44 = vector.multi_reduction <add>, %43, %cst_58 [0] : vector<512x128xf32> to vector<128xf32>
    %45 = vector.shape_cast %44 : vector<128xf32> to vector<1x128xf32>
    %cst_59 = arith.constant 0.001953125 : f32
    %46 = vector.broadcast %cst_59 : f32 to vector<1x128xf32>
    %47 = arith.mulf %45, %46 : vector<1x128xf32>
    %48 = arith.mulf %42, %42 : vector<1x128xf32>
    %49 = arith.subf %47, %48 : vector<1x128xf32>
    %cst_60 = arith.constant 0.000000e+00 : f32
    %50 = vector.broadcast %cst_60 : f32 to vector<1x128xf32>
    %51 = arith.maximumf %49, %50 : vector<1x128xf32>
    %c0_61 = arith.constant 0 : index
    %c0_62 = arith.constant 0 : index
    %52 = vector.load %arg4[%c0_61, %c0_62] : memref<1x128xf32, #tpu.memory_space<vmem>>, vector<1x128xf32>
    %cst_63 = arith.constant 9.99999974E-6 : f32
    %53 = vector.broadcast %cst_63 : f32 to vector<1x128xf32>
    %54 = arith.addf %51, %53 : vector<1x128xf32>
    %55 = math.rsqrt %54 : vector<1x128xf32>
    %56 = arith.mulf %52, %55 : vector<1x128xf32>
    %c0_64 = arith.constant 0 : index
    %c0_65 = arith.constant 0 : index
    %57 = vector.load %arg5[%c0_64, %c0_65] : memref<1x128xf32, #tpu.memory_space<vmem>>, vector<1x128xf32>
    %58 = arith.mulf %42, %56 : vector<1x128xf32>
    %59 = arith.subf %57, %58 : vector<1x128xf32>
    %60 = vector.broadcast %56 : vector<1x128xf32> to vector<512x128xf32>
    %61 = arith.mulf %38, %60 : vector<512x128xf32>
    %62 = vector.broadcast %59 : vector<1x128xf32> to vector<512x128xf32>
    %63 = arith.addf %61, %62 : vector<512x128xf32>
    %c0_66 = arith.constant 0 : index
    %c0_67 = arith.constant 0 : index
    %64 = vector.load %arg6[%c0_66, %c0_67] : memref<512x128xf32, #tpu.memory_space<vmem>>, vector<512x128xf32>
    tpu.vector_store %arg6[%c0_66, %c0_67], %63 {strides = array<i32>} : memref<512x128xf32, #tpu.memory_space<vmem>>, vector<512x128xf32>,
    return
  }
  func.func @transform_0(%arg0: i32) -> (i32, i32, i32, i32) {
    %c0_i32 = arith.constant 0 : i32
    %c0_i32_0 = arith.constant 0 : i32
    %c0_i32_1 = arith.constant 0 : i32
    %c0_i32_2 = arith.constant 0 : i32
    %c0_i32_3 = arith.constant 0 : i32
    return %c0_i32, %c0_i32_0, %c0_i32_1, %c0_i32_2 : i32, i32, i32, i32
  }
  func.func @transform_1(%arg0: i32) -> (i32, i32) {
    %c0_i32 = arith.constant 0 : i32
    %c0_i32_0 = arith.constant 0 : i32
    return %c0_i32, %arg0 : i32, i32
  }
  func.func @transform_2(%arg0: i32) -> (i32, i32) {
    %c0_i32 = arith.constant 0 : i32
    %c0_i32_0 = arith.constant 0 : i32
    return %c0_i32, %arg0 : i32, i32
  }
  func.func @transform_3(%arg0: i32) -> (i32, i32) {
    %c0_i32 = arith.constant 0 : i32
    %c0_i32_0 = arith.constant 0 : i32
    return %c0_i32, %arg0 : i32, i32
  }
  func.func @transform_4(%arg0: i32) -> (i32, i32) {
    %c0_i32 = arith.constant 0 : i32
    %c0_i32_0 = arith.constant 0 : i32
    return %c0_i32, %arg0 : i32, i32
  }
  func.func @transform_5(%arg0: i32) -> (i32, i32) {
    %c0_i32 = arith.constant 0 : i32
    %c0_i32_0 = arith.constant 0 : i32
    return %c0_i32, %arg0 : i32, i32
  }
}

</mosaic_0001>

<llo_original>
// kernel: cbr2d_forward.1
$region0: #{cbr2d_forward.1}
  #allocation0 [shape = 'u32[]', space=smem, size = 0x4, offset = 0x4, fixed_abs, tag = 'smem constant byte address 0x4 - core index']
  #allocation1 [shape = 'u32[144,128]{1,0:T(1,128)}', space=vmem, size = 0x12000, scoped, tag = 'internal scratch']
  #allocation2 [shape = 'bf16[512,128]{1,0:T(16,128)(2,1)}', space=vmem, size = 0x20000, scoped, tag = 'scratch operand']
  %s0 = inlined_call_operand.vmem [shape: bf16[2,18,18,4], index: 0, kind: input, shape index: {}]
  %s1 = inlined_call_operand.vmem [shape: bf16[128,128], index: 1, kind: input, shape index: {}]
  %s2 = inlined_call_operand.vmem [shape: f32[1,128], index: 2, kind: input, shape index: {}]
  %s3 = inlined_call_operand.vmem [shape: f32[1,128], index: 3, kind: input, shape index: {}]
  %s4 = inlined_call_operand.vmem [shape: f32[1,128], index: 4, kind: input, shape index: {}]
  %s5 = inlined_call_operand.hbm [shape: f32[512,128], index: 5, kind: output, shape index: {}]
  %s6 = sld [smem:[#allocation0]]
  $region30: #{cbr2d_forward.1} parent=0
    _
  %s8 = ssub.s32 1, %s6
  %s9 = scalar_select 0, %s8, %s6
  $region1: #{cbr2d_forward.1} parent=0
    #allocation3 [shape = 'u8[262144]{0}', space=vmem, size = 0x40000, scoped, tag = 'output window, operand 0, single buffered']
    #allocation4 [shape = 's32[1]{0}', space=sflag, size = 0x4, scoped, tag = 'scoped memory for cbr2d_forward.1']
    %10 = vsyncpa [#allocation4], 0
    // Predicated region
    $region2: #{cbr2d_forward.1} parent=1 // pred_check
      _
    $region3: #{cbr2d_forward.1} parent=1 // pred_check_branch
      %12 = sbr.rel (0) target = $region5
    $region4: #{cbr2d_forward.1} parent=1 // pred_region
      _
    $region5: #{cbr2d_forward.1} parent=1 // pred_fallthru
      _
    // Predicated region
    $region6: #{cbr2d_forward.1} parent=1 // pred_check
      _
    $region7: #{cbr2d_forward.1} parent=1 // pred_check_branch
      %14 = sbr.rel (0) target = $region9
    $region8: #{cbr2d_forward.1} parent=1 // pred_region
      _
    $region9: #{cbr2d_forward.1} parent=1 // pred_fallthru
      _
    // Predicated region
    $region10: #{cbr2d_forward.1} parent=1 // pred_check
      _
    $region11: #{cbr2d_forward.1} parent=1 // pred_check_branch
      %16 = sbr.rel (0) target = $region13
    $region12: #{cbr2d_forward.1} parent=1 // pred_region
      _
    $region13: #{cbr2d_forward.1} parent=1 // pred_fallthru
      _
    // Predicated region
    $region14: #{cbr2d_forward.1} parent=1 // pred_check
      _
    $region15: #{cbr2d_forward.1} parent=1 // pred_check_branch
      %18 = sbr.rel (0) target = $region17
    $region16: #{cbr2d_forward.1} parent=1 // pred_region
      _
    $region17: #{cbr2d_forward.1} parent=1 // pred_fallthru
      _
    // Predicated region
    $region18: #{cbr2d_forward.1} parent=1 // pred_check
      _
    $region19: #{cbr2d_forward.1} parent=1 // pred_check_branch
      %20 = sbr.rel (0) target = $region21
    $region20: #{cbr2d_forward.1} parent=1 // pred_region
      _
    $region21: #{cbr2d_forward.1} parent=1 // pred_fallthru
      _
    %vm22 = vcmask 1047840
    %23 = vst.msk [vmem:[#allocation2] sm:$0xff] %vm22, 0
    %24 = vst.msk [vmem:[#allocation2 + $0x8] sm:$0xff] %vm22, 0
    %25 = vst.msk [vmem:[#allocation2 + $0x10] sm:$0xff] %vm22, 0
    %26 = vst.msk [vmem:[#allocation2 + $0x18] sm:$0xff] %vm22, 0
    %27 = vst.msk [vmem:[#allocation2 + $0x20] sm:$0xff] %vm22, 0
    %28 = vst.msk [vmem:[#allocation2 + $0x28] sm:$0xff] %vm22, 0
    %29 = vst.msk [vmem:[#allocation2 + $0x30] sm:$0xff] %vm22, 0
    %30 = vst.msk [vmem:[#allocation2 + $0x38] sm:$0xff] %vm22, 0
    %31 = vst.msk [vmem:[#allocation2 + $0x40] sm:$0xff] %vm22, 0
    %32 = vst.msk [vmem:[#allocation2 + $0x48] sm:$0xff] %vm22, 0
    %33 = vst.msk [vmem:[#allocation2 + $0x50] sm:$0xff] %vm22, 0
    %34 = vst.msk [vmem:[#allocation2 + $0x58] sm:$0xff] %vm22, 0
    %35 = vst.msk [vmem:[#allocation2 + $0x60] sm:$0xff] %vm22, 0
    %36 = vst.msk [vmem:[#allocation2 + $0x68] sm:$0xff] %vm22, 0
    %37 = vst.msk [vmem:[#allocation2 + $0x70] sm:$0xff] %vm22, 0
    %38 = vst.msk [vmem:[#allocation2 + $0x78] sm:$0xff] %vm22, 0
    %39 = vst.msk [vmem:[#allocation2 + $0x80] sm:$0xff] %vm22, 0
    %40 = vst.msk [vmem:[#allocation2 + $0x88] sm:$0xff] %vm22, 0
    %41 = vst.msk [vmem:[#allocation2 + $0x90] sm:$0xff] %vm22, 0
    %42 = vst.msk [vmem:[#allocation2 + $0x98] sm:$0xff] %vm22, 0
    %43 = vst.msk [vmem:[#allocation2 + $0xa0] sm:$0xff] %vm22, 0
    %44 = vst.msk [vmem:[#allocation2 + $0xa8] sm:$0xff] %vm22, 0
    %45 = vst.msk [vmem:[#allocation2 + $0xb0] sm:$0xff] %vm22, 0
    %46 = vst.msk [vmem:[#allocation2 + $0xb8] sm:$0xff] %vm22, 0
    %47 = vst.msk [vmem:[#allocation2 + $0xc0] sm:$0xff] %vm22, 0
    %48 = vst.msk [vmem:[#allocation2 + $0xc8] sm:$0xff] %vm22, 0
    %49 = vst.msk [vmem:[#allocation2 + $0xd0] sm:$0xff] %vm22, 0
    %50 = vst.msk [vmem:[#allocation2 + $0xd8] sm:$0xff] %vm22, 0
    %51 = vst.msk [vmem:[#allocation2 + $0xe0] sm:$0xff] %vm22, 0
    %52 = vst.msk [vmem:[#allocation2 + $0xe8] sm:$0xff] %vm22, 0
    %53 = vst.msk [vmem:[#allocation2 + $0xf0] sm:$0xff] %vm22, 0
    %54 = vst.msk [vmem:[#allocation2 + $0xf8] sm:$0xff] %vm22, 0
    %v55 = vld [vmem:[%s0] sm:$0xf]
    %v56 = vld [vmem:[%s0 + $0x4] sm:$0xf]
    %v57 = vld [vmem:[%s0 + $0xc] sm:$0xf]
    %v58 = vld [vmem:[%s0 + $0x10] sm:$0xf]
    %v59 = vld [vmem:[%s0 + $0x18] sm:$0xf]
    %v60 = vld [vmem:[%s0 + $0x1c] sm:$0xf]
    %v61 = vld [vmem:[%s0 + $0x24] sm:$0xf]
    %v62 = vld [vmem:[%s0 + $0x28] sm:$0xf]
    %v63 = vld [vmem:[%s0 + $0x30] sm:$0xf]
    %v64 = vld [vmem:[%s0 + $0x34] sm:$0xf]
    %v65 = vld [vmem:[%s0 + $0x3c] sm:$0xf]
    %v66 = vld [vmem:[%s0 + $0x40] sm:$0xf]
    %v67 = vld [vmem:[%s0 + $0x48] sm:$0xf]
    %v68 = vld [vmem:[%s0 + $0x4c] sm:$0xf]
    %v69 = vld [vmem:[%s0 + $0x54] sm:$0xf]
    %v70 = vld [vmem:[%s0 + $0x58] sm:$0xf]
    %v71 = vld [vmem:[%s0 + $0x60] sm:$0xf]
    %v72 = vld [vmem:[%s0 + $0x64] sm:$0xf]
    %v73 = vld [vmem:[%s0 + $0x6c] sm:$0xf]
    %v74 = vld [vmem:[%s0 + $0x70] sm:$0xf]
    %v75 = vld [vmem:[%s0 + $0x78] sm:$0xf]
    %v76 = vld [vmem:[%s0 + $0x7c] sm:$0xf]
    %v77 = vld [vmem:[%s0 + $0x84] sm:$0xf]
    %v78 = vld [vmem:[%s0 + $0x88] sm:$0xf]
    %v79 = vld [vmem:[%s0 + $0x90] sm:$0xf]
    %v80 = vld [vmem:[%s0 + $0x94] sm:$0xf]
    %v81 = vld [vmem:[%s0 + $0x9c] sm:$0xf]
    %v82 = vld [vmem:[%s0 + $0xa0] sm:$0xf]
    %v83 = vld [vmem:[%s0 + $0xa8] sm:$0xf]
    %v84 = vld [vmem:[%s0 + $0xac] sm:$0xf]
    %v85 = vld [vmem:[%s0 + $0xb4] sm:$0xf]
    %v86 = vld [vmem:[%s0 + $0xb8] sm:$0xf]
    %v87 = vld [vmem:[%s0 + $0xd8] sm:$0xf]
    %v88 = vld [vmem:[%s0 + $0xdc] sm:$0xf]
    %v89 = vld [vmem:[%s0 + $0xe4] sm:$0xf]
    %v90 = vld [vmem:[%s0 + $0xe8] sm:$0xf]
    %v91 = vld [vmem:[%s0 + $0xf0] sm:$0xf]
    %v92 = vld [vmem:[%s0 + $0xf4] sm:$0xf]
    %v93 = vld [vmem:[%s0 + $0xfc] sm:$0xf]
    %v94 = vld [vmem:[%s0 + $0x100] sm:$0xf]
    %v95 = vld [vmem:[%s0 + $0x108] sm:$0xf]
    %v96 = vld [vmem:[%s0 + $0x10c] sm:$0xf]
    %v97 = vld [vmem:[%s0 + $0x114] sm:$0xf]
    %v98 = vld [vmem:[%s0 + $0x118] sm:$0xf]
    %v99 = vld [vmem:[%s0 + $0x120] sm:$0xf]
    %v100 = vld [vmem:[%s0 + $0x124] sm:$0xf]
    %v101 = vld [vmem:[%s0 + $0x12c] sm:$0xf]
    %v102 = vld [vmem:[%s0 + $0x130] sm:$0xf]
    %v103 = vld [vmem:[%s0 + $0x138] sm:$0xf]
    %v104 = vld [vmem:[%s0 + $0x13c] sm:$0xf]
    %v105 = vld [vmem:[%s0 + $0x144] sm:$0xf]
    %v106 = vld [vmem:[%s0 + $0x148] sm:$0xf]
    %v107 = vld [vmem:[%s0 + $0x150] sm:$0xf]
    %v108 = vld [vmem:[%s0 + $0x154] sm:$0xf]
    %v109 = vld [vmem:[%s0 + $0x15c] sm:$0xf]
    %v110 = vld [vmem:[%s0 + $0x160] sm:$0xf]
    %v111 = vld [vmem:[%s0 + $0x168] sm:$0xf]
    %v112 = vld [vmem:[%s0 + $0x16c] sm:$0xf]
    %v113 = vld [vmem:[%s0 + $0x174] sm:$0xf]
    %v114 = vld [vmem:[%s0 + $0x178] sm:$0xf]
    %v115 = vld [vmem:[%s0 + $0x180] sm:$0xf]
    %v116 = vld [vmem:[%s0 + $0x184] sm:$0xf]
    %v117 = vld [vmem:[%s0 + $0x18c] sm:$0xf]
    %v118 = vld [vmem:[%s0 + $0x190] sm:$0xf]
    %v183 = vunpack.c.l.b16 %v55
    %v184 = vunpack.c.l.b16 %v56
    %v185 = vunpack.c.l.b16 %v57
    %v186 = vunpack.c.l.b16 %v58
    %v187 = vunpack.c.l.b16 %v59
    %v188 = vunpack.c.l.b16 %v60
    %v189 = vunpack.c.l.b16 %v61
    %v190 = vunpack.c.l.b16 %v62
    %v191 = vunpack.c.l.b16 %v63
    %v192 = vunpack.c.l.b16 %v64
    %v193 = vunpack.c.l.b16 %v65
    %v194 = vunpack.c.l.b16 %v66
    %v195 = vunpack.c.l.b16 %v67
    %v196 = vunpack.c.l.b16 %v68
    %v197 = vunpack.c.l.b16 %v69
    %v198 = vunpack.c.l.b16 %v70
    %v199 = vunpack.c.l.b16 %v71
    %v200 = vunpack.c.l.b16 %v72
    %v201 = vunpack.c.l.b16 %v73
    %v202 = vunpack.c.l.b16 %v74
    %v203 = vunpack.c.l.b16 %v75
    %v204 = vunpack.c.l.b16 %v76
    %v205 = vunpack.c.l.b16 %v77
    %v206 = vunpack.c.l.b16 %v78
    %v207 = vunpack.c.l.b16 %v79
    %v208 = vunpack.c.l.b16 %v80
    %v209 = vunpack.c.l.b16 %v81
    %v210 = vunpack.c.l.b16 %v82
    %v211 = vunpack.c.l.b16 %v83
    %v212 = vunpack.c.l.b16 %v84
    %v213 = vunpack.c.l.b16 %v85
    %v214 = vunpack.c.l.b16 %v86
    %v215 = vunpack.c.l.b16 %v87
    %v216 = vunpack.c.l.b16 %v88
    %v217 = vunpack.c.l.b16 %v89
    %v218 = vunpack.c.l.b16 %v90
    %v219 = vunpack.c.l.b16 %v91
    %v220 = vunpack.c.l.b16 %v92
    %v221 = vunpack.c.l.b16 %v93
    %v222 = vunpack.c.l.b16 %v94
    %v223 = vunpack.c.l.b16 %v95
    %v224 = vunpack.c.l.b16 %v96
    %v225 = vunpack.c.l.b16 %v97
    %v226 = vunpack.c.l.b16 %v98
    %v227 = vunpack.c.l.b16 %v99
    %v228 = vunpack.c.l.b16 %v100
    %v229 = vunpack.c.l.b16 %v101
    %v230 = vunpack.c.l.b16 %v102
    %v231 = vunpack.c.l.b16 %v103
    %v232 = vunpack.c.l.b16 %v104
    %v233 = vunpack.c.l.b16 %v105
    %v234 = vunpack.c.l.b16 %v106
    %v235 = vunpack.c.l.b16 %v107
    %v236 = vunpack.c.l.b16 %v108
    %v237 = vunpack.c.l.b16 %v109
    %v238 = vunpack.c.l.b16 %v110
    %v239 = vunpack.c.l.b16 %v111
    %v240 = vunpack.c.l.b16 %v112
    %v241 = vunpack.c.l.b16 %v113
    %v242 = vunpack.c.l.b16 %v114
    %v243 = vunpack.c.l.b16 %v115
    %v244 = vunpack.c.l.b16 %v116
    %v245 = vunpack.c.l.b16 %v117
    %v246 = vunpack.c.l.b16 %v118
    %v247 = vpack.c.b16 %v184, %v183
    %v248 = vpack.c.b16 %v186, %v185
    %v249 = vpack.c.b16 %v188, %v187
    %v250 = vpack.c.b16 %v190, %v189
    %v251 = vpack.c.b16 %v192, %v191
    %v252 = vpack.c.b16 %v194, %v193
    %v253 = vpack.c.b16 %v196, %v195
    %v254 = vpack.c.b16 %v198, %v197
    %v255 = vpack.c.b16 %v200, %v199
    %v256 = vpack.c.b16 %v202, %v201
    %v257 = vpack.c.b16 %v204, %v203
    %v258 = vpack.c.b16 %v206, %v205
    %v259 = vpack.c.b16 %v208, %v207
    %v260 = vpack.c.b16 %v210, %v209
    %v261 = vpack.c.b16 %v212, %v211
    %v262 = vpack.c.b16 %v214, %v213
    %v263 = vpack.c.b16 %v216, %v215
    %v264 = vpack.c.b16 %v218, %v217
    %v265 = vpack.c.b16 %v220, %v219
    %v266 = vpack.c.b16 %v222, %v221
    %v267 = vpack.c.b16 %v224, %v223
    %v268 = vpack.c.b16 %v226, %v225
    %v269 = vpack.c.b16 %v228, %v227
    %v270 = vpack.c.b16 %v230, %v229
    %v271 = vpack.c.b16 %v232, %v231
    %v272 = vpack.c.b16 %v234, %v233
    %v273 = vpack.c.b16 %v236, %v235
    %v274 = vpack.c.b16 %v238, %v237
    %v275 = vpack.c.b16 %v240, %v239
    %v276 = vpack.c.b16 %v242, %v241
    %v277 = vpack.c.b16 %v244, %v243
    %v278 = vpack.c.b16 %v246, %v245
    %vm311 = vcmask 31744
    %312 = vst.msk [vmem:[#allocation2] sm:$0xff] %vm311, %v247
    %313 = vst.msk [vmem:[#allocation2 + $0x8] sm:$0xff] %vm311, %v248
    %314 = vst.msk [vmem:[#allocation2 + $0x10] sm:$0xff] %vm311, %v249
    %315 = vst.msk [vmem:[#allocation2 + $0x18] sm:$0xff] %vm311, %v250
    %316 = vst.msk [vmem:[#allocation2 + $0x20] sm:$0xff] %vm311, %v251
    %317 = vst.msk [vmem:[#allocation2 + $0x28] sm:$0xff] %vm311, %v252
    %318 = vst.msk [vmem:[#allocation2 + $0x30] sm:$0xff] %vm311, %v253
    %319 = vst.msk [vmem:[#allocation2 + $0x38] sm:$0xff] %vm311, %v254
    %320 = vst.msk [vmem:[#allocation2 + $0x40] sm:$0xff] %vm311, %v255
    %321 = vst.msk [vmem:[#allocation2 + $0x48] sm:$0xff] %vm311, %v256
    %322 = vst.msk [vmem:[#allocation2 + $0x50] sm:$0xff] %vm311, %v257
    %323 = vst.msk [vmem:[#allocation2 + $0x58] sm:$0xff] %vm311, %v258
    %324 = vst.msk [vmem:[#allocation2 + $0x60] sm:$0xff] %vm311, %v259
    %325 = vst.msk [vmem:[#allocation2 + $0x68] sm:$0xff] %vm311, %v260
    %326 = vst.msk [vmem:[#allocation2 + $0x70] sm:$0xff] %vm311, %v261
    %327 = vst.msk [vmem:[#allocation2 + $0x78] sm:$0xff] %vm311, %v262
    %328 = vst.msk [vmem:[#allocation2 + $0x80] sm:$0xff] %vm311, %v263
    %329 = vst.msk [vmem:[#allocation2 + $0x88] sm:$0xff] %vm311, %v264
    %330 = vst.msk [vmem:[#allocation2 + $0x90] sm:$0xff] %vm311, %v265
    %331 = vst.msk [vmem:[#allocation2 + $0x98] sm:$0xff] %vm311, %v266
    %332 = vst.msk [vmem:[#allocation2 + $0xa0] sm:$0xff] %vm311, %v267
    %333 = vst.msk [vmem:[#allocation2 + $0xa8] sm:$0xff] %vm311, %v268
    %334 = vst.msk [vmem:[#allocation2 + $0xb0] sm:$0xff] %vm311, %v269
    %335 = vst.msk [vmem:[#allocation2 + $0xb8] sm:$0xff] %vm311, %v270
    %336 = vst.msk [vmem:[#allocation2 + $0xc0] sm:$0xff] %vm311, %v271
    %337 = vst.msk [vmem:[#allocation2 + $0xc8] sm:$0xff] %vm311, %v272
    %338 = vst.msk [vmem:[#allocation2 + $0xd0] sm:$0xff] %vm311, %v273
    %339 = vst.msk [vmem:[#allocation2 + $0xd8] sm:$0xff] %vm311, %v274
    %340 = vst.msk [vmem:[#allocation2 + $0xe0] sm:$0xff] %vm311, %v275
    %341 = vst.msk [vmem:[#allocation2 + $0xe8] sm:$0xff] %vm311, %v276
    %342 = vst.msk [vmem:[#allocation2 + $0xf0] sm:$0xff] %vm311, %v277
    %343 = vst.msk [vmem:[#allocation2 + $0xf8] sm:$0xff] %vm311, %v278
    %v344 = vld [vmem:[%s0] sm:$0xf]
    %v345 = vld [vmem:[%s0 + $0x4] sm:$0xf]
    %v346 = vld [vmem:[%s0 + $0x8] sm:$0x1]
    %v347 = vld [vmem:[%s0 + $0xc] sm:$0xf]
    %v348 = vld [vmem:[%s0 + $0x10] sm:$0xf]
    %v349 = vld [vmem:[%s0 + $0x14] sm:$0x1]
    %v350 = vld [vmem:[%s0 + $0x18] sm:$0xf]
    %v351 = vld [vmem:[%s0 + $0x1c] sm:$0xf]
    %v352 = vld [vmem:[%s0 + $0x20] sm:$0x1]
    %v353 = vld [vmem:[%s0 + $0x24] sm:$0xf]
    %v354 = vld [vmem:[%s0 + $0x28] sm:$0xf]
    %v355 = vld [vmem:[%s0 + $0x2c] sm:$0x1]
    %v356 = vld [vmem:[%s0 + $0x30] sm:$0xf]
    %v357 = vld [vmem:[%s0 + $0x34] sm:$0xf]
    %v358 = vld [vmem:[%s0 + $0x38] sm:$0x1]
    %v359 = vld [vmem:[%s0 + $0x3c] sm:$0xf]
    %v360 = vld [vmem:[%s0 + $0x40] sm:$0xf]
    %v361 = vld [vmem:[%s0 + $0x44] sm:$0x1]
    %v362 = vld [vmem:[%s0 + $0x48] sm:$0xf]
    %v363 = vld [vmem:[%s0 + $0x4c] sm:$0xf]
    %v364 = vld [vmem:[%s0 + $0x50] sm:$0x1]
    %v365 = vld [vmem:[%s0 + $0x54] sm:$0xf]
    %v366 = vld [vmem:[%s0 + $0x58] sm:$0xf]
    %v367 = vld [vmem:[%s0 + $0x5c] sm:$0x1]
    %v368 = vld [vmem:[%s0 + $0x60] sm:$0xf]
    %v369 = vld [vmem:[%s0 + $0x64] sm:$0xf]
    %v370 = vld [vmem:[%s0 + $0x68] sm:$0x1]
    %v371 = vld [vmem:[%s0 + $0x6c] sm:$0xf]
    %v372 = vld [vmem:[%s0 + $0x70] sm:$0xf]
    %v373 = vld [vmem:[%s0 + $0x74] sm:$0x1]
    %v374 = vld [vmem:[%s0 + $0x78] sm:$0xf]
    %v375 = vld [vmem:[%s0 + $0x7c] sm:$0xf]
    %v376 = vld [vmem:[%s0 + $0x80] sm:$0x1]
    %v377 = vld [vmem:[%s0 + $0x84] sm:$0xf]
    %v378 = vld [vmem:[%s0 + $0x88] sm:$0xf]
    %v379 = vld [vmem:[%s0 + $0x8c] sm:$0x1]
    %v380 = vld [vmem:[%s0 + $0x90] sm:$0xf]
    %v381 = vld [vmem:[%s0 + $0x94] sm:$0xf]
    %v382 = vld [vmem:[%s0 + $0x98] sm:$0x1]
    %v383 = vld [vmem:[%s0 + $0x9c] sm:$0xf]
    %v384 = vld [vmem:[%s0 + $0xa0] sm:$0xf]
    %v385 = vld [vmem:[%s0 + $0xa4] sm:$0x1]
    %v386 = vld [vmem:[%s0 + $0xa8] sm:$0xf]
    %v387 = vld [vmem:[%s0 + $0xac] sm:$0xf]
    %v388 = vld [vmem:[%s0 + $0xb0] sm:$0x1]
    %v389 = vld [vmem:[%s0 + $0xb4] sm:$0xf]
    %v390 = vld [vmem:[%s0 + $0xb8] sm:$0xf]
    %v391 = vld [vmem:[%s0 + $0xbc] sm:$0x1]
    %v392 = vld [vmem:[%s0 + $0xd8] sm:$0xf]
    %v393 = vld [vmem:[%s0 + $0xdc] sm:$0xf]
    %v394 = vld [vmem:[%s0 + $0xe0] sm:$0x1]
    %v395 = vld [vmem:[%s0 + $0xe4] sm:$0xf]
    %v396 = vld [vmem:[%s0 + $0xe8] sm:$0xf]
    %v397 = vld [vmem:[%s0 + $0xec] sm:$0x1]
    %v398 = vld [vmem:[%s0 + $0xf0] sm:$0xf]
    %v399 = vld [vmem:[%s0 + $0xf4] sm:$0xf]
    %v400 = vld [vmem:[%s0 + $0xf8] sm:$0x1]
    %v401 = vld [vmem:[%s0 + $0xfc] sm:$0xf]
    %v402 = vld [vmem:[%s0 + $0x100] sm:$0xf]
    %v403 = vld [vmem:[%s0 + $0x104] sm:$0x1]
    %v404 = vld [vmem:[%s0 + $0x108] sm:$0xf]
    %v405 = vld [vmem:[%s0 + $0x10c] sm:$0xf]
    %v406 = vld [vmem:[%s0 + $0x110] sm:$0x1]
    %v407 = vld [vmem:[%s0 + $0x114] sm:$0xf]
    %v408 = vld [vmem:[%s0 + $0x118] sm:$0xf]
    %v409 = vld [vmem:[%s0 + $0x11c] sm:$0x1]
    %v410 = vld [vmem:[%s0 + $0x120] sm:$0xf]
    %v411 = vld [vmem:[%s0 + $0x124] sm:$0xf]
    %v412 = vld [vmem:[%s0 + $0x128] sm:$0x1]
    %v413 = vld [vmem:[%s0 + $0x12c] sm:$0xf]
    %v414 = vld [vmem:[%s0 + $0x130] sm:$0xf]
    %v415 = vld [vmem:[%s0 + $0x134] sm:$0x1]
    %v416 = vld [vmem:[%s0 + $0x138] sm:$0xf]
    %v417 = vld [vmem:[%s0 + $0x13c] sm:$0xf]
    %v418 = vld [vmem:[%s0 + $0x140] sm:$0x1]
    %v419 = vld [vmem:[%s0 + $0x144] sm:$0xf]
    %v420 = vld [vmem:[%s0 + $0x148] sm:$0xf]
    %v421 = vld [vmem:[%s0 + $0x14c] sm:$0x1]
    %v422 = vld [vmem:[%s0 + $0x150] sm:$0xf]
    %v423 = vld [vmem:[%s0 + $0x154] sm:$0xf]
    %v424 = vld [vmem:[%s0 + $0x158] sm:$0x1]
    %v425 = vld [vmem:[%s0 + $0x15c] sm:$0xf]
    %v426 = vld [vmem:[%s0 + $0x160] sm:$0xf]
    %v427 = vld [vmem:[%s0 + $0x164] sm:$0x1]
    %v428 = vld [vmem:[%s0 + $0x168] sm:$0xf]
    %v429 = vld [vmem:[%s0 + $0x16c] sm:$0xf]
    %v430 = vld [vmem:[%s0 + $0x170] sm:$0x1]
    %v431 = vld [vmem:[%s0 + $0x174] sm:$0xf]
    %v432 = vld [vmem:[%s0 + $0x178] sm:$0xf]
    %v433 = vld [vmem:[%s0 + $0x17c] sm:$0x1]
    %v434 = vld [vmem:[%s0 + $0x180] sm:$0xf]
    %v435 = vld [vmem:[%s0 + $0x184] sm:$0xf]
    %v436 = vld [vmem:[%s0 + $0x188] sm:$0x1]
    %v437 = vld [vmem:[%s0 + $0x18c] sm:$0xf]
    %v438 = vld [vmem:[%s0 + $0x190] sm:$0xf]
    %v439 = vld [vmem:[%s0 + $0x194] sm:$0x1]
    %vm440 = vsmask.f32 3328
    %vm441 = vsmask.f32 7440
    %vm442 = vmor %vm440, %vm441
    %v444 = vshrl.u32 %v344, 16
    %v446 = vrot.slane %v444, 4
    %v447 = vshll.u32 %v344, 16
    %v449 = vrot.slane %v447, 5
    %v450 = vor.u32 %v446, %v449
    %v451 = vrot.slane %v450, 4
    %v453 = vshll.u32 %v345, 16
    %v455 = vrot.slane %v453, 5
    %v456 = vsel %vm442, %v451, %v455
    %v457 = vshrl.u32 %v345, 16
    %v459 = vrot.slane %v457, 4
    %v460 = vor.u32 %v459, %v455
    %v461 = vrot.slane %v460, 4
    %v463 = vshll.u32 %v346, 16
    %v465 = vrot.slane %v463, 5
    %v466 = vsel %vm442, %v461, %v465
    %v468 = vshrl.u32 %v347, 16
    %v470 = vrot.slane %v468, 4
    %v471 = vshll.u32 %v347, 16
    %v473 = vrot.slane %v471, 5
    %v474 = vor.u32 %v470, %v473
    %v475 = vrot.slane %v474, 4
    %v477 = vshll.u32 %v348, 16
    %v479 = vrot.slane %v477, 5
    %v480 = vsel %vm442, %v475, %v479
    %v481 = vshrl.u32 %v348, 16
    %v483 = vrot.slane %v481, 4
    %v484 = vor.u32 %v483, %v479
    %v485 = vrot.slane %v484, 4
    %v487 = vshll.u32 %v349, 16
    %v489 = vrot.slane %v487, 5
    %v490 = vsel %vm442, %v485, %v489
    %v492 = vshrl.u32 %v350, 16
    %v494 = vrot.slane %v492, 4
    %v495 = vshll.u32 %v350, 16
    %v497 = vrot.slane %v495, 5
    %v498 = vor.u32 %v494, %v497
    %v499 = vrot.slane %v498, 4
    %v501 = vshll.u32 %v351, 16
    %v503 = vrot.slane %v501, 5
    %v504 = vsel %vm442, %v499, %v503
    %v505 = vshrl.u32 %v351, 16
    %v507 = vrot.slane %v505, 4
    %v508 = vor.u32 %v507, %v503
    %v509 = vrot.slane %v508, 4
    %v511 = vshll.u32 %v352, 16
    %v513 = vrot.slane %v511, 5
    %v514 = vsel %vm442, %v509, %v513
    %v516 = vshrl.u32 %v353, 16
    %v518 = vrot.slane %v516, 4
    %v519 = vshll.u32 %v353, 16
    %v521 = vrot.slane %v519, 5
    %v522 = vor.u32 %v518, %v521
    %v523 = vrot.slane %v522, 4
    %v525 = vshll.u32 %v354, 16
    %v527 = vrot.slane %v525, 5
    %v528 = vsel %vm442, %v523, %v527
    %v529 = vshrl.u32 %v354, 16
    %v531 = vrot.slane %v529, 4
    %v532 = vor.u32 %v531, %v527
    %v533 = vrot.slane %v532, 4
    %v535 = vshll.u32 %v355, 16
    %v537 = vrot.slane %v535, 5
    %v538 = vsel %vm442, %v533, %v537
    %v540 = vshrl.u32 %v356, 16
    %v542 = vrot.slane %v540, 4
    %v543 = vshll.u32 %v356, 16
    %v545 = vrot.slane %v543, 5
    %v546 = vor.u32 %v542, %v545
    %v547 = vrot.slane %v546, 4
    %v549 = vshll.u32 %v357, 16
    %v551 = vrot.slane %v549, 5
    %v552 = vsel %vm442, %v547, %v551
    %v553 = vshrl.u32 %v357, 16
    %v555 = vrot.slane %v553, 4
    %v556 = vor.u32 %v555, %v551
    %v557 = vrot.slane %v556, 4
    %v559 = vshll.u32 %v358, 16
    %v561 = vrot.slane %v559, 5
    %v562 = vsel %vm442, %v557, %v561
    %v564 = vshrl.u32 %v359, 16
    %v566 = vrot.slane %v564, 4
    %v567 = vshll.u32 %v359, 16
    %v569 = vrot.slane %v567, 5
    %v570 = vor.u32 %v566, %v569
    %v571 = vrot.slane %v570, 4
    %v573 = vshll.u32 %v360, 16
    %v575 = vrot.slane %v573, 5
    %v576 = vsel %vm442, %v571, %v575
    %v577 = vshrl.u32 %v360, 16
    %v579 = vrot.slane %v577, 4
    %v580 = vor.u32 %v579, %v575
    %v581 = vrot.slane %v580, 4
    %v583 = vshll.u32 %v361, 16
    %v585 = vrot.slane %v583, 5
    %v586 = vsel %vm442, %v581, %v585
    %v588 = vshrl.u32 %v362, 16
    %v590 = vrot.slane %v588, 4
    %v591 = vshll.u32 %v362, 16
    %v593 = vrot.slane %v591, 5
    %v594 = vor.u32 %v590, %v593
    %v595 = vrot.slane %v594, 4
    %v597 = vshll.u32 %v363, 16
    %v599 = vrot.slane %v597, 5
    %v600 = vsel %vm442, %v595, %v599
    %v601 = vshrl.u32 %v363, 16
    %v603 = vrot.slane %v601, 4
    %v604 = vor.u32 %v603, %v599
    %v605 = vrot.slane %v604, 4
    %v607 = vshll.u32 %v364, 16
    %v609 = vrot.slane %v607, 5
    %v610 = vsel %vm442, %v605, %v609
    %v612 = vshrl.u32 %v365, 16
    %v614 = vrot.slane %v612, 4
    %v615 = vshll.u32 %v365, 16
    %v617 = vrot.slane %v615, 5
    %v618 = vor.u32 %v614, %v617
    %v619 = vrot.slane %v618, 4
    %v621 = vshll.u32 %v366, 16
    %v623 = vrot.slane %v621, 5
    %v624 = vsel %vm442, %v619, %v623
    %v625 = vshrl.u32 %v366, 16
    %v627 = vrot.slane %v625, 4
    %v628 = vor.u32 %v627, %v623
    %v629 = vrot.slane %v628, 4
    %v631 = vshll.u32 %v367, 16
    %v633 = vrot.slane %v631, 5
    %v634 = vsel %vm442, %v629, %v633
    %v636 = vshrl.u32 %v368, 16
    %v638 = vrot.slane %v636, 4
    %v639 = vshll.u32 %v368, 16
    %v641 = vrot.slane %v639, 5
    %v642 = vor.u32 %v638, %v641
    %v643 = vrot.slane %v642, 4
    %v645 = vshll.u32 %v369, 16
    %v647 = vrot.slane %v645, 5
    %v648 = vsel %vm442, %v643, %v647
    %v649 = vshrl.u32 %v369, 16
    %v651 = vrot.slane %v649, 4
    %v652 = vor.u32 %v651, %v647
    %v653 = vrot.slane %v652, 4
    %v655 = vshll.u32 %v370, 16
    %v657 = vrot.slane %v655, 5
    %v658 = vsel %vm442, %v653, %v657
    %v660 = vshrl.u32 %v371, 16
    %v662 = vrot.slane %v660, 4
    %v663 = vshll.u32 %v371, 16
    %v665 = vrot.slane %v663, 5
    %v666 = vor.u32 %v662, %v665
    %v667 = vrot.slane %v666, 4
    %v669 = vshll.u32 %v372, 16
    %v671 = vrot.slane %v669, 5
    %v672 = vsel %vm442, %v667, %v671
    %v673 = vshrl.u32 %v372, 16
    %v675 = vrot.slane %v673, 4
    %v676 = vor.u32 %v675, %v671
    %v677 = vrot.slane %v676, 4
    %v679 = vshll.u32 %v373, 16
    %v681 = vrot.slane %v679, 5
    %v682 = vsel %vm442, %v677, %v681
    %v684 = vshrl.u32 %v374, 16
    %v686 = vrot.slane %v684, 4
    %v687 = vshll.u32 %v374, 16
    %v689 = vrot.slane %v687, 5
    %v690 = vor.u32 %v686, %v689
    %v691 = vrot.slane %v690, 4
    %v693 = vshll.u32 %v375, 16
    %v695 = vrot.slane %v693, 5
    %v696 = vsel %vm442, %v691, %v695
    %v697 = vshrl.u32 %v375, 16
    %v699 = vrot.slane %v697, 4
    %v700 = vor.u32 %v699, %v695
    %v701 = vrot.slane %v700, 4
    %v703 = vshll.u32 %v376, 16
    %v705 = vrot.slane %v703, 5
    %v706 = vsel %vm442, %v701, %v705
    %v708 = vshrl.u32 %v377, 16
    %v710 = vrot.slane %v708, 4
    %v711 = vshll.u32 %v377, 16
    %v713 = vrot.slane %v711, 5
    %v714 = vor.u32 %v710, %v713
    %v715 = vrot.slane %v714, 4
    %v717 = vshll.u32 %v378, 16
    %v719 = vrot.slane %v717, 5
    %v720 = vsel %vm442, %v715, %v719
    %v721 = vshrl.u32 %v378, 16
    %v723 = vrot.slane %v721, 4
    %v724 = vor.u32 %v723, %v719
    %v725 = vrot.slane %v724, 4
    %v727 = vshll.u32 %v379, 16
    %v729 = vrot.slane %v727, 5
    %v730 = vsel %vm442, %v725, %v729
    %v732 = vshrl.u32 %v380, 16
    %v734 = vrot.slane %v732, 4
    %v735 = vshll.u32 %v380, 16
    %v737 = vrot.slane %v735, 5
    %v738 = vor.u32 %v734, %v737
    %v739 = vrot.slane %v738, 4
    %v741 = vshll.u32 %v381, 16
    %v743 = vrot.slane %v741, 5
    %v744 = vsel %vm442, %v739, %v743
    %v745 = vshrl.u32 %v381, 16
    %v747 = vrot.slane %v745, 4
    %v748 = vor.u32 %v747, %v743
    %v749 = vrot.slane %v748, 4
    %v751 = vshll.u32 %v382, 16
    %v753 = vrot.slane %v751, 5
    %v754 = vsel %vm442, %v749, %v753
    %v756 = vshrl.u32 %v383, 16
    %v758 = vrot.slane %v756, 4
    %v759 = vshll.u32 %v383, 16
    %v761 = vrot.slane %v759, 5
    %v762 = vor.u32 %v758, %v761
    %v763 = vrot.slane %v762, 4
    %v765 = vshll.u32 %v384, 16
    %v767 = vrot.slane %v765, 5
    %v768 = vsel %vm442, %v763, %v767
    %v769 = vshrl.u32 %v384, 16
    %v771 = vrot.slane %v769, 4
    %v772 = vor.u32 %v771, %v767
    %v773 = vrot.slane %v772, 4
    %v775 = vshll.u32 %v385, 16
    %v777 = vrot.slane %v775, 5
    %v778 = vsel %vm442, %v773, %v777
    %v780 = vshrl.u32 %v386, 16
    %v782 = vrot.slane %v780, 4
    %v783 = vshll.u32 %v386, 16
    %v785 = vrot.slane %v783, 5
    %v786 = vor.u32 %v782, %v785
    %v787 = vrot.slane %v786, 4
    %v789 = vshll.u32 %v387, 16
    %v791 = vrot.slane %v789, 5
    %v792 = vsel %vm442, %v787, %v791
    %v793 = vshrl.u32 %v387, 16
    %v795 = vrot.slane %v793, 4
    %v796 = vor.u32 %v795, %v791
    %v797 = vrot.slane %v796, 4
    %v799 = vshll.u32 %v388, 16
    %v801 = vrot.slane %v799, 5
    %v802 = vsel %vm442, %v797, %v801
    %v804 = vshrl.u32 %v389, 16
    %v806 = vrot.slane %v804, 4
    %v807 = vshll.u32 %v389, 16
    %v809 = vrot.slane %v807, 5
    %v810 = vor.u32 %v806, %v809
    %v811 = vrot.slane %v810, 4
    %v813 = vshll.u32 %v390, 16
    %v815 = vrot.slane %v813, 5
    %v816 = vsel %vm442, %v811, %v815
    %v817 = vshrl.u32 %v390, 16
    %v819 = vrot.slane %v817, 4
    %v820 = vor.u32 %v819, %v815
    %v821 = vrot.slane %v820, 4
    %v823 = vshll.u32 %v391, 16
    %v825 = vrot.slane %v823, 5
    %v826 = vsel %vm442, %v821, %v825
    %v828 = vshrl.u32 %v392, 16
    %v830 = vrot.slane %v828, 4
    %v831 = vshll.u32 %v392, 16
    %v833 = vrot.slane %v831, 5
    %v834 = vor.u32 %v830, %v833
    %v835 = vrot.slane %v834, 4
    %v837 = vshll.u32 %v393, 16
    %v839 = vrot.slane %v837, 5
    %v840 = vsel %vm442, %v835, %v839
    %v841 = vshrl.u32 %v393, 16
    %v843 = vrot.slane %v841, 4
    %v844 = vor.u32 %v843, %v839
    %v845 = vrot.slane %v844, 4
    %v847 = vshll.u32 %v394, 16
    %v849 = vrot.slane %v847, 5
    %v850 = vsel %vm442, %v845, %v849
    %v852 = vshrl.u32 %v395, 16
    %v854 = vrot.slane %v852, 4
    %v855 = vshll.u32 %v395, 16
    %v857 = vrot.slane %v855, 5
    %v858 = vor.u32 %v854, %v857
    %v859 = vrot.slane %v858, 4
    %v861 = vshll.u32 %v396, 16
    %v863 = vrot.slane %v861, 5
    %v864 = vsel %vm442, %v859, %v863
    %v865 = vshrl.u32 %v396, 16
    %v867 = vrot.slane %v865, 4
    %v868 = vor.u32 %v867, %v863
    %v869 = vrot.slane %v868, 4
    %v871 = vshll.u32 %v397, 16
    %v873 = vrot.slane %v871, 5
    %v874 = vsel %vm442, %v869, %v873
    %v876 = vshrl.u32 %v398, 16
    %v878 = vrot.slane %v876, 4
    %v879 = vshll.u32 %v398, 16
    %v881 = vrot.slane %v879, 5
    %v882 = vor.u32 %v878, %v881
    %v883 = vrot.slane %v882, 4
    %v885 = vshll.u32 %v399, 16
    %v887 = vrot.slane %v885, 5
    %v888 = vsel %vm442, %v883, %v887
    %v889 = vshrl.u32 %v399, 16
    %v891 = vrot.slane %v889, 4
    %v892 = vor.u32 %v891, %v887
    %v893 = vrot.slane %v892, 4
    %v895 = vshll.u32 %v400, 16
    %v897 = vrot.slane %v895, 5
    %v898 = vsel %vm442, %v893, %v897
    %v900 = vshrl.u32 %v401, 16
    %v902 = vrot.slane %v900, 4
    %v903 = vshll.u32 %v401, 16
    %v905 = vrot.slane %v903, 5
    %v906 = vor.u32 %v902, %v905
    %v907 = vrot.slane %v906, 4
    %v909 = vshll.u32 %v402, 16
    %v911 = vrot.slane %v909, 5
    %v912 = vsel %vm442, %v907, %v911
    %v913 = vshrl.u32 %v402, 16
    %v915 = vrot.slane %v913, 4
    %v916 = vor.u32 %v915, %v911
    %v917 = vrot.slane %v916, 4
    %v919 = vshll.u32 %v403, 16
    %v921 = vrot.slane %v919, 5
    %v922 = vsel %vm442, %v917, %v921
    %v924 = vshrl.u32 %v404, 16
    %v926 = vrot.slane %v924, 4
    %v927 = vshll.u32 %v404, 16
    %v929 = vrot.slane %v927, 5
    %v930 = vor.u32 %v926, %v929
    %v931 = vrot.slane %v930, 4
    %v933 = vshll.u32 %v405, 16
    %v935 = vrot.slane %v933, 5
    %v936 = vsel %vm442, %v931, %v935
    %v937 = vshrl.u32 %v405, 16
    %v939 = vrot.slane %v937, 4
    %v940 = vor.u32 %v939, %v935
    %v941 = vrot.slane %v940, 4
    %v943 = vshll.u32 %v406, 16
    %v945 = vrot.slane %v943, 5
    %v946 = vsel %vm442, %v941, %v945
    %v948 = vshrl.u32 %v407, 16
    %v950 = vrot.slane %v948, 4
    %v951 = vshll.u32 %v407, 16
    %v953 = vrot.slane %v951, 5
    %v954 = vor.u32 %v950, %v953
    %v955 = vrot.slane %v954, 4
    %v957 = vshll.u32 %v408, 16
    %v959 = vrot.slane %v957, 5
    %v960 = vsel %vm442, %v955, %v959
    %v961 = vshrl.u32 %v408, 16
    %v963 = vrot.slane %v961, 4
    %v964 = vor.u32 %v963, %v959
    %v965 = vrot.slane %v964, 4
    %v967 = vshll.u32 %v409, 16
    %v969 = vrot.slane %v967, 5
    %v970 = vsel %vm442, %v965, %v969
    %v972 = vshrl.u32 %v410, 16
    %v974 = vrot.slane %v972, 4
    %v975 = vshll.u32 %v410, 16
    %v977 = vrot.slane %v975, 5
    %v978 = vor.u32 %v974, %v977
    %v979 = vrot.slane %v978, 4
    %v981 = vshll.u32 %v411, 16
    %v983 = vrot.slane %v981, 5
    %v984 = vsel %vm442, %v979, %v983
    %v985 = vshrl.u32 %v411, 16
    %v987 = vrot.slane %v985, 4
    %v988 = vor.u32 %v987, %v983
    %v989 = vrot.slane %v988, 4
    %v991 = vshll.u32 %v412, 16
    %v993 = vrot.slane %v991, 5
    %v994 = vsel %vm442, %v989, %v993
    %v996 = vshrl.u32 %v413, 16
    %v998 = vrot.slane %v996, 4
    %v999 = vshll.u32 %v413, 16
    %v1001 = vrot.slane %v999, 5
    %v1002 = vor.u32 %v998, %v1001
    %v1003 = vrot.slane %v1002, 4
    %v1005 = vshll.u32 %v414, 16
    %v1007 = vrot.slane %v1005, 5
    %v1008 = vsel %vm442, %v1003, %v1007
    %v1009 = vshrl.u32 %v414, 16
    %v1011 = vrot.slane %v1009, 4
    %v1012 = vor.u32 %v1011, %v1007
    %v1013 = vrot.slane %v1012, 4
    %v1015 = vshll.u32 %v415, 16
    %v1017 = vrot.slane %v1015, 5
    %v1018 = vsel %vm442, %v1013, %v1017
    %v1020 = vshrl.u32 %v416, 16
    %v1022 = vrot.slane %v1020, 4
    %v1023 = vshll.u32 %v416, 16
    %v1025 = vrot.slane %v1023, 5
    %v1026 = vor.u32 %v1022, %v1025
    %v1027 = vrot.slane %v1026, 4
    %v1029 = vshll.u32 %v417, 16
    %v1031 = vrot.slane %v1029, 5
    %v1032 = vsel %vm442, %v1027, %v1031
    %v1033 = vshrl.u32 %v417, 16
    %v1035 = vrot.slane %v1033, 4
    %v1036 = vor.u32 %v1035, %v1031
    %v1037 = vrot.slane %v1036, 4
    %v1039 = vshll.u32 %v418, 16
    %v1041 = vrot.slane %v1039, 5
    %v1042 = vsel %vm442, %v1037, %v1041
    %v1044 = vshrl.u32 %v419, 16
    %v1046 = vrot.slane %v1044, 4
    %v1047 = vshll.u32 %v419, 16
    %v1049 = vrot.slane %v1047, 5
    %v1050 = vor.u32 %v1046, %v1049
    %v1051 = vrot.slane %v1050, 4
    %v1053 = vshll.u32 %v420, 16
    %v1055 = vrot.slane %v1053, 5
    %v1056 = vsel %vm442, %v1051, %v1055
    %v1057 = vshrl.u32 %v420, 16
    %v1059 = vrot.slane %v1057, 4
    %v1060 = vor.u32 %v1059, %v1055
    %v1061 = vrot.slane %v1060, 4
    %v1063 = vshll.u32 %v421, 16
    %v1065 = vrot.slane %v1063, 5
    %v1066 = vsel %vm442, %v1061, %v1065
    %v1068 = vshrl.u32 %v422, 16
    %v1070 = vrot.slane %v1068, 4
    %v1071 = vshll.u32 %v422, 16
    %v1073 = vrot.slane %v1071, 5
    %v1074 = vor.u32 %v1070, %v1073
    %v1075 = vrot.slane %v1074, 4
    %v1077 = vshll.u32 %v423, 16
    %v1079 = vrot.slane %v1077, 5
    %v1080 = vsel %vm442, %v1075, %v1079
    %v1081 = vshrl.u32 %v423, 16
    %v1083 = vrot.slane %v1081, 4
    %v1084 = vor.u32 %v1083, %v1079
    %v1085 = vrot.slane %v1084, 4
    %v1087 = vshll.u32 %v424, 16
    %v1089 = vrot.slane %v1087, 5
    %v1090 = vsel %vm442, %v1085, %v1089
    %v1092 = vshrl.u32 %v425, 16
    %v1094 = vrot.slane %v1092, 4
    %v1095 = vshll.u32 %v425, 16
    %v1097 = vrot.slane %v1095, 5
    %v1098 = vor.u32 %v1094, %v1097
    %v1099 = vrot.slane %v1098, 4
    %v1101 = vshll.u32 %v426, 16
    %v1103 = vrot.slane %v1101, 5
    %v1104 = vsel %vm442, %v1099, %v1103
    %v1105 = vshrl.u32 %v426, 16
    %v1107 = vrot.slane %v1105, 4
    %v1108 = vor.u32 %v1107, %v1103
    %v1109 = vrot.slane %v1108, 4
    %v1111 = vshll.u32 %v427, 16
    %v1113 = vrot.slane %v1111, 5
    %v1114 = vsel %vm442, %v1109, %v1113
    %v1116 = vshrl.u32 %v428, 16
    %v1118 = vrot.slane %v1116, 4
    %v1119 = vshll.u32 %v428, 16
    %v1121 = vrot.slane %v1119, 5
    %v1122 = vor.u32 %v1118, %v1121
    %v1123 = vrot.slane %v1122, 4
    %v1125 = vshll.u32 %v429, 16
    %v1127 = vrot.slane %v1125, 5
    %v1128 = vsel %vm442, %v1123, %v1127
    %v1129 = vshrl.u32 %v429, 16
    %v1131 = vrot.slane %v1129, 4
    %v1132 = vor.u32 %v1131, %v1127
    %v1133 = vrot.slane %v1132, 4
    %v1135 = vshll.u32 %v430, 16
    %v1137 = vrot.slane %v1135, 5
    %v1138 = vsel %vm442, %v1133, %v1137
    %v1140 = vshrl.u32 %v431, 16
    %v1142 = vrot.slane %v1140, 4
    %v1143 = vshll.u32 %v431, 16
    %v1145 = vrot.slane %v1143, 5
    %v1146 = vor.u32 %v1142, %v1145
    %v1147 = vrot.slane %v1146, 4
    %v1149 = vshll.u32 %v432, 16
    %v1151 = vrot.slane %v1149, 5
    %v1152 = vsel %vm442, %v1147, %v1151
    %v1153 = vshrl.u32 %v432, 16
    %v1155 = vrot.slane %v1153, 4
    %v1156 = vor.u32 %v1155, %v1151
    %v1157 = vrot.slane %v1156, 4
    %v1159 = vshll.u32 %v433, 16
    %v1161 = vrot.slane %v1159, 5
    %v1162 = vsel %vm442, %v1157, %v1161
    %v1164 = vshrl.u32 %v434, 16
    %v1166 = vrot.slane %v1164, 4
    %v1167 = vshll.u32 %v434, 16
    %v1169 = vrot.slane %v1167, 5
    %v1170 = vor.u32 %v1166, %v1169
    %v1171 = vrot.slane %v1170, 4
    %v1173 = vshll.u32 %v435, 16
    %v1175 = vrot.slane %v1173, 5
    %v1176 = vsel %vm442, %v1171, %v1175
    %v1177 = vshrl.u32 %v435, 16
    %v1179 = vrot.slane %v1177, 4
    %v1180 = vor.u32 %v1179, %v1175
    %v1181 = vrot.slane %v1180, 4
    %v1183 = vshll.u32 %v436, 16
    %v1185 = vrot.slane %v1183, 5
    %v1186 = vsel %vm442, %v1181, %v1185
    %v1188 = vshrl.u32 %v437, 16
    %v1190 = vrot.slane %v1188, 4
    %v1191 = vshll.u32 %v437, 16
    %v1193 = vrot.slane %v1191, 5
    %v1194 = vor.u32 %v1190, %v1193
    %v1195 = vrot.slane %v1194, 4
    %v1197 = vshll.u32 %v438, 16
    %v1199 = vrot.slane %v1197, 5
    %v1200 = vsel %vm442, %v1195, %v1199
    %v1201 = vshrl.u32 %v438, 16
    %v1203 = vrot.slane %v1201, 4
    %v1204 = vor.u32 %v1203, %v1199
    %v1205 = vrot.slane %v1204, 4
    %v1207 = vshll.u32 %v439, 16
    %v1209 = vrot.slane %v1207, 5
    %v1210 = vsel %vm442, %v1205, %v1209
    %v1211 = vunpack.c.l.b16 %v456
    %v1212 = vunpack.c.l.b16 %v466
    %v1213 = vunpack.c.l.b16 %v480
    %v1214 = vunpack.c.l.b16 %v490
    %v1215 = vunpack.c.l.b16 %v504
    %v1216 = vunpack.c.l.b16 %v514
    %v1217 = vunpack.c.l.b16 %v528
    %v1218 = vunpack.c.l.b16 %v538
    %v1219 = vunpack.c.l.b16 %v552
    %v1220 = vunpack.c.l.b16 %v562
    %v1221 = vunpack.c.l.b16 %v576
    %v1222 = vunpack.c.l.b16 %v586
    %v1223 = vunpack.c.l.b16 %v600
    %v1224 = vunpack.c.l.b16 %v610
    %v1225 = vunpack.c.l.b16 %v624
    %v1226 = vunpack.c.l.b16 %v634
    %v1227 = vunpack.c.l.b16 %v648
    %v1228 = vunpack.c.l.b16 %v658
    %v1229 = vunpack.c.l.b16 %v672
    %v1230 = vunpack.c.l.b16 %v682
    %v1231 = vunpack.c.l.b16 %v696
    %v1232 = vunpack.c.l.b16 %v706
    %v1233 = vunpack.c.l.b16 %v720
    %v1234 = vunpack.c.l.b16 %v730
    %v1235 = vunpack.c.l.b16 %v744
    %v1236 = vunpack.c.l.b16 %v754
    %v1237 = vunpack.c.l.b16 %v768
    %v1238 = vunpack.c.l.b16 %v778
    %v1239 = vunpack.c.l.b16 %v792
    %v1240 = vunpack.c.l.b16 %v802
    %v1241 = vunpack.c.l.b16 %v816
    %v1242 = vunpack.c.l.b16 %v826
    %v1243 = vunpack.c.l.b16 %v840
    %v1244 = vunpack.c.l.b16 %v850
    %v1245 = vunpack.c.l.b16 %v864
    %v1246 = vunpack.c.l.b16 %v874
    %v1247 = vunpack.c.l.b16 %v888
    %v1248 = vunpack.c.l.b16 %v898
    %v1249 = vunpack.c.l.b16 %v912
    %v1250 = vunpack.c.l.b16 %v922
    %v1251 = vunpack.c.l.b16 %v936
    %v1252 = vunpack.c.l.b16 %v946
    %v1253 = vunpack.c.l.b16 %v960
    %v1254 = vunpack.c.l.b16 %v970
    %v1255 = vunpack.c.l.b16 %v984
    %v1256 = vunpack.c.l.b16 %v994
    %v1257 = vunpack.c.l.b16 %v1008
    %v1258 = vunpack.c.l.b16 %v1018
    %v1259 = vunpack.c.l.b16 %v1032
    %v1260 = vunpack.c.l.b16 %v1042
    %v1261 = vunpack.c.l.b16 %v1056
    %v1262 = vunpack.c.l.b16 %v1066
    %v1263 = vunpack.c.l.b16 %v1080
    %v1264 = vunpack.c.l.b16 %v1090
    %v1265 = vunpack.c.l.b16 %v1104
    %v1266 = vunpack.c.l.b16 %v1114
    %v1267 = vunpack.c.l.b16 %v1128
    %v1268 = vunpack.c.l.b16 %v1138
    %v1269 = vunpack.c.l.b16 %v1152
    %v1270 = vunpack.c.l.b16 %v1162
    %v1271 = vunpack.c.l.b16 %v1176
    %v1272 = vunpack.c.l.b16 %v1186
    %v1273 = vunpack.c.l.b16 %v1200
    %v1274 = vunpack.c.l.b16 %v1210
    %v1275 = vpack.c.b16 %v1212, %v1211
    %v1276 = vpack.c.b16 %v1214, %v1213
    %v1277 = vpack.c.b16 %v1216, %v1215
    %v1278 = vpack.c.b16 %v1218, %v1217
    %v1279 = vpack.c.b16 %v1220, %v1219
    %v1280 = vpack.c.b16 %v1222, %v1221
    %v1281 = vpack.c.b16 %v1224, %v1223
    %v1282 = vpack.c.b16 %v1226, %v1225
    %v1283 = vpack.c.b16 %v1228, %v1227
    %v1284 = vpack.c.b16 %v1230, %v1229
    %v1285 = vpack.c.b16 %v1232, %v1231
    %v1286 = vpack.c.b16 %v1234, %v1233
    %v1287 = vpack.c.b16 %v1236, %v1235
    %v1288 = vpack.c.b16 %v1238, %v1237
    %v1289 = vpack.c.b16 %v1240, %v1239
    %v1290 = vpack.c.b16 %v1242, %v1241
    %v1291 = vpack.c.b16 %v1244, %v1243
    %v1292 = vpack.c.b16 %v1246, %v1245
    %v1293 = vpack.c.b16 %v1248, %v1247
    %v1294 = vpack.c.b16 %v1250, %v1249
    %v1295 = vpack.c.b16 %v1252, %v1251
    %v1296 = vpack.c.b16 %v1254, %v1253
    %v1297 = vpack.c.b16 %v1256, %v1255
    %v1298 = vpack.c.b16 %v1258, %v1257
    %v1299 = vpack.c.b16 %v1260, %v1259
    %v1300 = vpack.c.b16 %v1262, %v1261
    %v1301 = vpack.c.b16 %v1264, %v1263
    %v1302 = vpack.c.b16 %v1266, %v1265
    %v1303 = vpack.c.b16 %v1268, %v1267
    %v1304 = vpack.c.b16 %v1270, %v1269
    %v1305 = vpack.c.b16 %v1272, %v1271
    %v1306 = vpack.c.b16 %v1274, %v1273
    %1307 = vrot.lane.b32.xlu0 %v1275, 4
    %v1308 = vpop.permute.xlu0 %1307
    %1309 = vrot.lane.b32.xlu0 %v1276, 4
    %v1310 = vpop.permute.xlu0 %1309
    %1311 = vrot.lane.b32.xlu0 %v1277, 4
    %v1312 = vpop.permute.xlu0 %1311
    %1313 = vrot.lane.b32.xlu0 %v1278, 4
    %v1314 = vpop.permute.xlu0 %1313
    %1315 = vrot.lane.b32.xlu0 %v1279, 4
    %v1316 = vpop.permute.xlu0 %1315
    %1317 = vrot.lane.b32.xlu0 %v1280, 4
    %v1318 = vpop.permute.xlu0 %1317
    %1319 = vrot.lane.b32.xlu0 %v1281, 4
    %v1320 = vpop.permute.xlu0 %1319
    %1321 = vrot.lane.b32.xlu0 %v1282, 4
    %v1322 = vpop.permute.xlu0 %1321
    %1323 = vrot.lane.b32.xlu0 %v1283, 4
    %v1324 = vpop.permute.xlu0 %1323
    %1325 = vrot.lane.b32.xlu0 %v1284, 4
    %v1326 = vpop.permute.xlu0 %1325
    %1327 = vrot.lane.b32.xlu0 %v1285, 4
    %v1328 = vpop.permute.xlu0 %1327
    %1329 = vrot.lane.b32.xlu0 %v1286, 4
    %v1330 = vpop.permute.xlu0 %1329
    %1331 = vrot.lane.b32.xlu0 %v1287, 4
    %v1332 = vpop.permute.xlu0 %1331
    %1333 = vrot.lane.b32.xlu0 %v1288, 4
    %v1334 = vpop.permute.xlu0 %1333
    %1335 = vrot.lane.b32.xlu0 %v1289, 4
    %v1336 = vpop.permute.xlu0 %1335
    %1337 = vrot.lane.b32.xlu0 %v1290, 4
    %v1338 = vpop.permute.xlu0 %1337
    %1339 = vrot.lane.b32.xlu0 %v1291, 4
    %v1340 = vpop.permute.xlu0 %1339
    %1341 = vrot.lane.b32.xlu0 %v1292, 4
    %v1342 = vpop.permute.xlu0 %1341
    %1343 = vrot.lane.b32.xlu0 %v1293, 4
    %v1344 = vpop.permute.xlu0 %1343
    %1345 = vrot.lane.b32.xlu0 %v1294, 4
    %v1346 = vpop.permute.xlu0 %1345
    %1347 = vrot.lane.b32.xlu0 %v1295, 4
    %v1348 = vpop.permute.xlu0 %1347
    %1349 = vrot.lane.b32.xlu0 %v1296, 4
    %v1350 = vpop.permute.xlu0 %1349
    %1351 = vrot.lane.b32.xlu0 %v1297, 4
    %v1352 = vpop.permute.xlu0 %1351
    %1353 = vrot.lane.b32.xlu0 %v1298, 4
    %v1354 = vpop.permute.xlu0 %1353
    %1355 = vrot.lane.b32.xlu0 %v1299, 4
    %v1356 = vpop.permute.xlu0 %1355
    %1357 = vrot.lane.b32.xlu0 %v1300, 4
    %v1358 = vpop.permute.xlu0 %1357
    %1359 = vrot.lane.b32.xlu0 %v1301, 4
    %v1360 = vpop.permute.xlu0 %1359
    %1361 = vrot.lane.b32.xlu0 %v1302, 4
    %v1362 = vpop.permute.xlu0 %1361
    %1363 = vrot.lane.b32.xlu0 %v1303, 4
    %v1364 = vpop.permute.xlu0 %1363
    %1365 = vrot.lane.b32.xlu0 %v1304, 4
    %v1366 = vpop.permute.xlu0 %1365
    %1367 = vrot.lane.b32.xlu0 %v1305, 4
    %v1368 = vpop.permute.xlu0 %1367
    %1369 = vrot.lane.b32.xlu0 %v1306, 4
    %v1370 = vpop.permute.xlu0 %1369
    %vm1403 = vcmask 64544
    %1404 = vst.msk [vmem:[#allocation2] sm:$0xff] %vm1403, %v1308
    %1405 = vst.msk [vmem:[#allocation2 + $0x8] sm:$0xff] %vm1403, %v1310
    %1406 = vst.msk [vmem:[#allocation2 + $0x10] sm:$0xff] %vm1403, %v1312
    %1407 = vst.msk [vmem:[#allocation2 + $0x18] sm:$0xff] %vm1403, %v1314
    %1408 = vst.msk [vmem:[#allocation2 + $0x20] sm:$0xff] %vm1403, %v1316
    %1409 = vst.msk [vmem:[#allocation2 + $0x28] sm:$0xff] %vm1403, %v1318
    %1410 = vst.msk [vmem:[#allocation2 + $0x30] sm:$0xff] %vm1403, %v1320
    %1411 = vst.msk [vmem:[#allocation2 + $0x38] sm:$0xff] %vm1403, %v1322
    %1412 = vst.msk [vmem:[#allocation2 + $0x40] sm:$0xff] %vm1403, %v1324
    %1413 = vst.msk [vmem:[#allocation2 + $0x48] sm:$0xff] %vm1403, %v1326
    %1414 = vst.msk [vmem:[#allocation2 + $0x50] sm:$0xff] %vm1403, %v1328
    %1415 = vst.msk [vmem:[#allocation2 + $0x58] sm:$0xff] %vm1403, %v1330
    %1416 = vst.msk [vmem:[#allocation2 + $0x60] sm:$0xff] %vm1403, %v1332
    %1417 = vst.msk [vmem:[#allocation2 + $0x68] sm:$0xff] %vm1403, %v1334
    %1418 = vst.msk [vmem:[#allocation2 + $0x70] sm:$0xff] %vm1403, %v1336
    %1419 = vst.msk [vmem:[#allocation2 + $0x78] sm:$0xff] %vm1403, %v1338
    %1420 = vst.msk [vmem:[#allocation2 + $0x80] sm:$0xff] %vm1403, %v1340
    %1421 = vst.msk [vmem:[#allocation2 + $0x88] sm:$0xff] %vm1403, %v1342
    %1422 = vst.msk [vmem:[#allocation2 + $0x90] sm:$0xff] %vm1403, %v1344
    %1423 = vst.msk [vmem:[#allocation2 + $0x98] sm:$0xff] %vm1403, %v1346
    %1424 = vst.msk [vmem:[#allocation2 + $0xa0] sm:$0xff] %vm1403, %v1348
    %1425 = vst.msk [vmem:[#allocation2 + $0xa8] sm:$0xff] %vm1403, %v1350
    %1426 = vst.msk [vmem:[#allocation2 + $0xb0] sm:$0xff] %vm1403, %v1352
    %1427 = vst.msk [vmem:[#allocation2 + $0xb8] sm:$0xff] %vm1403, %v1354
    %1428 = vst.msk [vmem:[#allocation2 + $0xc0] sm:$0xff] %vm1403, %v1356
    %1429 = vst.msk [vmem:[#allocation2 + $0xc8] sm:$0xff] %vm1403, %v1358
    %1430 = vst.msk [vmem:[#allocation2 + $0xd0] sm:$0xff] %vm1403, %v1360
    %1431 = vst.msk [vmem:[#allocation2 + $0xd8] sm:$0xff] %vm1403, %v1362
    %1432 = vst.msk [vmem:[#allocation2 + $0xe0] sm:$0xff] %vm1403, %v1364
    %1433 = vst.msk [vmem:[#allocation2 + $0xe8] sm:$0xff] %vm1403, %v1366
    %1434 = vst.msk [vmem:[#allocation2 + $0xf0] sm:$0xff] %vm1403, %v1368
    %1435 = vst.msk [vmem:[#allocation2 + $0xf8] sm:$0xff] %vm1403, %v1370
    %v1436 = vld [vmem:[%s0] sm:$0xe]
    %v1437 = vld [vmem:[%s0 + $0x4] sm:$0xf]
    %v1438 = vld [vmem:[%s0 + $0x8] sm:$0x1]
    %v1439 = vld [vmem:[%s0 + $0xc] sm:$0xe]
    %v1440 = vld [vmem:[%s0 + $0x10] sm:$0xf]
    %v1441 = vld [vmem:[%s0 + $0x14] sm:$0x1]
    %v1442 = vld [vmem:[%s0 + $0x18] sm:$0xe]
    %v1443 = vld [vmem:[%s0 + $0x1c] sm:$0xf]
    %v1444 = vld [vmem:[%s0 + $0x20] sm:$0x1]
    %v1445 = vld [vmem:[%s0 + $0x24] sm:$0xe]
    %v1446 = vld [vmem:[%s0 + $0x28] sm:$0xf]
    %v1447 = vld [vmem:[%s0 + $0x2c] sm:$0x1]
    %v1448 = vld [vmem:[%s0 + $0x30] sm:$0xe]
    %v1449 = vld [vmem:[%s0 + $0x34] sm:$0xf]
    %v1450 = vld [vmem:[%s0 + $0x38] sm:$0x1]
    %v1451 = vld [vmem:[%s0 + $0x3c] sm:$0xe]
    %v1452 = vld [vmem:[%s0 + $0x40] sm:$0xf]
    %v1453 = vld [vmem:[%s0 + $0x44] sm:$0x1]
    %v1454 = vld [vmem:[%s0 + $0x48] sm:$0xe]
    %v1455 = vld [vmem:[%s0 + $0x4c] sm:$0xf]
    %v1456 = vld [vmem:[%s0 + $0x50] sm:$0x1]
    %v1457 = vld [vmem:[%s0 + $0x54] sm:$0xe]
    %v1458 = vld [vmem:[%s0 + $0x58] sm:$0xf]
    %v1459 = vld [vmem:[%s0 + $0x5c] sm:$0x1]
    %v1460 = vld [vmem:[%s0 + $0x60] sm:$0xe]
    %v1461 = vld [vmem:[%s0 + $0x64] sm:$0xf]
    %v1462 = vld [vmem:[%s0 + $0x68] sm:$0x1]
    %v1463 = vld [vmem:[%s0 + $0x6c] sm:$0xe]
    %v1464 = vld [vmem:[%s0 + $0x70] sm:$0xf]
    %v1465 = vld [vmem:[%s0 + $0x74] sm:$0x1]
    %v1466 = vld [vmem:[%s0 + $0x78] sm:$0xe]
    %v1467 = vld [vmem:[%s0 + $0x7c] sm:$0xf]
    %v1468 = vld [vmem:[%s0 + $0x80] sm:$0x1]
    %v1469 = vld [vmem:[%s0 + $0x84] sm:$0xe]
    %v1470 = vld [vmem:[%s0 + $0x88] sm:$0xf]
    %v1471 = vld [vmem:[%s0 + $0x8c] sm:$0x1]
    %v1472 = vld [vmem:[%s0 + $0x90] sm:$0xe]
    %v1473 = vld [vmem:[%s0 + $0x94] sm:$0xf]
    %v1474 = vld [vmem:[%s0 + $0x98] sm:$0x1]
    %v1475 = vld [vmem:[%s0 + $0x9c] sm:$0xe]
    %v1476 = vld [vmem:[%s0 + $0xa0] sm:$0xf]
    %v1477 = vld [vmem:[%s0 + $0xa4] sm:$0x1]
    %v1478 = vld [vmem:[%s0 + $0xa8] sm:$0xe]
    %v1479 = vld [vmem:[%s0 + $0xac] sm:$0xf]
    %v1480 = vld [vmem:[%s0 + $0xb0] sm:$0x1]
    %v1481 = vld [vmem:[%s0 + $0xb4] sm:$0xe]
    %v1482 = vld [vmem:[%s0 + $0xb8] sm:$0xf]
    %v1483 = vld [vmem:[%s0 + $0xbc] sm:$0x1]
    %v1484 = vld [vmem:[%s0 + $0xd8] sm:$0xe]
    %v1485 = vld [vmem:[%s0 + $0xdc] sm:$0xf]
    %v1486 = vld [vmem:[%s0 + $0xe0] sm:$0x1]
    %v1487 = vld [vmem:[%s0 + $0xe4] sm:$0xe]
    %v1488 = vld [vmem:[%s0 + $0xe8] sm:$0xf]
    %v1489 = vld [vmem:[%s0 + $0xec] sm:$0x1]
    %v1490 = vld [vmem:[%s0 + $0xf0] sm:$0xe]
    %v1491 = vld [vmem:[%s0 + $0xf4] sm:$0xf]
    %v1492 = vld [vmem:[%s0 + $0xf8] sm:$0x1]
    %v1493 = vld [vmem:[%s0 + $0xfc] sm:$0xe]
    %v1494 = vld [vmem:[%s0 + $0x100] sm:$0xf]
    %v1495 = vld [vmem:[%s0 + $0x104] sm:$0x1]
    %v1496 = vld [vmem:[%s0 + $0x108] sm:$0xe]
    %v1497 = vld [vmem:[%s0 + $0x10c] sm:$0xf]
    %v1498 = vld [vmem:[%s0 + $0x110] sm:$0x1]
    %v1499 = vld [vmem:[%s0 + $0x114] sm:$0xe]
    %v1500 = vld [vmem:[%s0 + $0x118] sm:$0xf]
    %v1501 = vld [vmem:[%s0 + $0x11c] sm:$0x1]
    %v1502 = vld [vmem:[%s0 + $0x120] sm:$0xe]
    %v1503 = vld [vmem:[%s0 + $0x124] sm:$0xf]
    %v1504 = vld [vmem:[%s0 + $0x128] sm:$0x1]
    %v1505 = vld [vmem:[%s0 + $0x12c] sm:$0xe]
    %v1506 = vld [vmem:[%s0 + $0x130] sm:$0xf]
    %v1507 = vld [vmem:[%s0 + $0x134] sm:$0x1]
    %v1508 = vld [vmem:[%s0 + $0x138] sm:$0xe]
    %v1509 = vld [vmem:[%s0 + $0x13c] sm:$0xf]
    %v1510 = vld [vmem:[%s0 + $0x140] sm:$0x1]
    %v1511 = vld [vmem:[%s0 + $0x144] sm:$0xe]
    %v1512 = vld [vmem:[%s0 + $0x148] sm:$0xf]
    %v1513 = vld [vmem:[%s0 + $0x14c] sm:$0x1]
    %v1514 = vld [vmem:[%s0 + $0x150] sm:$0xe]
    %v1515 = vld [vmem:[%s0 + $0x154] sm:$0xf]
    %v1516 = vld [vmem:[%s0 + $0x158] sm:$0x1]
    %v1517 = vld [vmem:[%s0 + $0x15c] sm:$0xe]
    %v1518 = vld [vmem:[%s0 + $0x160] sm:$0xf]
    %v1519 = vld [vmem:[%s0 + $0x164] sm:$0x1]
    %v1520 = vld [vmem:[%s0 + $0x168] sm:$0xe]
    %v1521 = vld [vmem:[%s0 + $0x16c] sm:$0xf]
    %v1522 = vld [vmem:[%s0 + $0x170] sm:$0x1]
    %v1523 = vld [vmem:[%s0 + $0x174] sm:$0xe]
    %v1524 = vld [vmem:[%s0 + $0x178] sm:$0xf]
    %v1525 = vld [vmem:[%s0 + $0x17c] sm:$0x1]
    %v1526 = vld [vmem:[%s0 + $0x180] sm:$0xe]
    %v1527 = vld [vmem:[%s0 + $0x184] sm:$0xf]
    %v1528 = vld [vmem:[%s0 + $0x188] sm:$0x1]
    %v1529 = vld [vmem:[%s0 + $0x18c] sm:$0xe]
    %v1530 = vld [vmem:[%s0 + $0x190] sm:$0xf]
    %v1531 = vld [vmem:[%s0 + $0x194] sm:$0x1]
    %vm1628 = vcmask 1042432
    %vm1629 = vcmask 1046532
    %vm1630 = vmor %vm1628, %vm1629
    %v1631 = vrot.slane %v1436, 5
    %v1632 = vrot.slane %v1631, 4
    %v1633 = vrot.slane %v1437, 5
    %v1634 = vsel %vm1630, %v1632, %v1633
    %v1635 = vrot.slane %v1633, 4
    %v1636 = vrot.slane %v1438, 5
    %v1637 = vsel %vm1630, %v1635, %v1636
    %v1638 = vrot.slane %v1439, 5
    %v1639 = vrot.slane %v1638, 4
    %v1640 = vrot.slane %v1440, 5
    %v1641 = vsel %vm1630, %v1639, %v1640
    %v1642 = vrot.slane %v1640, 4
    %v1643 = vrot.slane %v1441, 5
    %v1644 = vsel %vm1630, %v1642, %v1643
    %v1645 = vrot.slane %v1442, 5
    %v1646 = vrot.slane %v1645, 4
    %v1647 = vrot.slane %v1443, 5
    %v1648 = vsel %vm1630, %v1646, %v1647
    %v1649 = vrot.slane %v1647, 4
    %v1650 = vrot.slane %v1444, 5
    %v1651 = vsel %vm1630, %v1649, %v1650
    %v1652 = vrot.slane %v1445, 5
    %v1653 = vrot.slane %v1652, 4
    %v1654 = vrot.slane %v1446, 5
    %v1655 = vsel %vm1630, %v1653, %v1654
    %v1656 = vrot.slane %v1654, 4
    %v1657 = vrot.slane %v1447, 5
    %v1658 = vsel %vm1630, %v1656, %v1657
    %v1659 = vrot.slane %v1448, 5
    %v1660 = vrot.slane %v1659, 4
    %v1661 = vrot.slane %v1449, 5
    %v1662 = vsel %vm1630, %v1660, %v1661
    %v1663 = vrot.slane %v1661, 4
    %v1664 = vrot.slane %v1450, 5
    %v1665 = vsel %vm1630, %v1663, %v1664
    %v1666 = vrot.slane %v1451, 5
    %v1667 = vrot.slane %v1666, 4
    %v1668 = vrot.slane %v1452, 5
    %v1669 = vsel %vm1630, %v1667, %v1668
    %v1670 = vrot.slane %v1668, 4
    %v1671 = vrot.slane %v1453, 5
    %v1672 = vsel %vm1630, %v1670, %v1671
    %v1673 = vrot.slane %v1454, 5
    %v1674 = vrot.slane %v1673, 4
    %v1675 = vrot.slane %v1455, 5
    %v1676 = vsel %vm1630, %v1674, %v1675
    %v1677 = vrot.slane %v1675, 4
    %v1678 = vrot.slane %v1456, 5
    %v1679 = vsel %vm1630, %v1677, %v1678
    %v1680 = vrot.slane %v1457, 5
    %v1681 = vrot.slane %v1680, 4
    %v1682 = vrot.slane %v1458, 5
    %v1683 = vsel %vm1630, %v1681, %v1682
    %v1684 = vrot.slane %v1682, 4
    %v1685 = vrot.slane %v1459, 5
    %v1686 = vsel %vm1630, %v1684, %v1685
    %v1687 = vrot.slane %v1460, 5
    %v1688 = vrot.slane %v1687, 4
    %v1689 = vrot.slane %v1461, 5
    %v1690 = vsel %vm1630, %v1688, %v1689
    %v1691 = vrot.slane %v1689, 4
    %v1692 = vrot.slane %v1462, 5
    %v1693 = vsel %vm1630, %v1691, %v1692
    %v1694 = vrot.slane %v1463, 5
    %v1695 = vrot.slane %v1694, 4
    %v1696 = vrot.slane %v1464, 5
    %v1697 = vsel %vm1630, %v1695, %v1696
    %v1698 = vrot.slane %v1696, 4
    %v1699 = vrot.slane %v1465, 5
    %v1700 = vsel %vm1630, %v1698, %v1699
    %v1701 = vrot.slane %v1466, 5
    %v1702 = vrot.slane %v1701, 4
    %v1703 = vrot.slane %v1467, 5
    %v1704 = vsel %vm1630, %v1702, %v1703
    %v1705 = vrot.slane %v1703, 4
    %v1706 = vrot.slane %v1468, 5
    %v1707 = vsel %vm1630, %v1705, %v1706
    %v1708 = vrot.slane %v1469, 5
    %v1709 = vrot.slane %v1708, 4
    %v1710 = vrot.slane %v1470, 5
    %v1711 = vsel %vm1630, %v1709, %v1710
    %v1712 = vrot.slane %v1710, 4
    %v1713 = vrot.slane %v1471, 5
    %v1714 = vsel %vm1630, %v1712, %v1713
    %v1715 = vrot.slane %v1472, 5
    %v1716 = vrot.slane %v1715, 4
    %v1717 = vrot.slane %v1473, 5
    %v1718 = vsel %vm1630, %v1716, %v1717
    %v1719 = vrot.slane %v1717, 4
    %v1720 = vrot.slane %v1474, 5
    %v1721 = vsel %vm1630, %v1719, %v1720
    %v1722 = vrot.slane %v1475, 5
    %v1723 = vrot.slane %v1722, 4
    %v1724 = vrot.slane %v1476, 5
    %v1725 = vsel %vm1630, %v1723, %v1724
    %v1726 = vrot.slane %v1724, 4
    %v1727 = vrot.slane %v1477, 5
    %v1728 = vsel %vm1630, %v1726, %v1727
    %v1729 = vrot.slane %v1478, 5
    %v1730 = vrot.slane %v1729, 4
    %v1731 = vrot.slane %v1479, 5
    %v1732 = vsel %vm1630, %v1730, %v1731
    %v1733 = vrot.slane %v1731, 4
    %v1734 = vrot.slane %v1480, 5
    %v1735 = vsel %vm1630, %v1733, %v1734
    %v1736 = vrot.slane %v1481, 5
    %v1737 = vrot.slane %v1736, 4
    %v1738 = vrot.slane %v1482, 5
    %v1739 = vsel %vm1630, %v1737, %v1738
    %v1740 = vrot.slane %v1738, 4
    %v1741 = vrot.slane %v1483, 5
    %v1742 = vsel %vm1630, %v1740, %v1741
    %v1743 = vrot.slane %v1484, 5
    %v1744 = vrot.slane %v1743, 4
    %v1745 = vrot.slane %v1485, 5
    %v1746 = vsel %vm1630, %v1744, %v1745
    %v1747 = vrot.slane %v1745, 4
    %v1748 = vrot.slane %v1486, 5
    %v1749 = vsel %vm1630, %v1747, %v1748
    %v1750 = vrot.slane %v1487, 5
    %v1751 = vrot.slane %v1750, 4
    %v1752 = vrot.slane %v1488, 5
    %v1753 = vsel %vm1630, %v1751, %v1752
    %v1754 = vrot.slane %v1752, 4
    %v1755 = vrot.slane %v1489, 5
    %v1756 = vsel %vm1630, %v1754, %v1755
    %v1757 = vrot.slane %v1490, 5
    %v1758 = vrot.slane %v1757, 4
    %v1759 = vrot.slane %v1491, 5
    %v1760 = vsel %vm1630, %v1758, %v1759
    %v1761 = vrot.slane %v1759, 4
    %v1762 = vrot.slane %v1492, 5
    %v1763 = vsel %vm1630, %v1761, %v1762
    %v1764 = vrot.slane %v1493, 5
    %v1765 = vrot.slane %v1764, 4
    %v1766 = vrot.slane %v1494, 5
    %v1767 = vsel %vm1630, %v1765, %v1766
    %v1768 = vrot.slane %v1766, 4
    %v1769 = vrot.slane %v1495, 5
    %v1770 = vsel %vm1630, %v1768, %v1769
    %v1771 = vrot.slane %v1496, 5
    %v1772 = vrot.slane %v1771, 4
    %v1773 = vrot.slane %v1497, 5
    %v1774 = vsel %vm1630, %v1772, %v1773
    %v1775 = vrot.slane %v1773, 4
    %v1776 = vrot.slane %v1498, 5
    %v1777 = vsel %vm1630, %v1775, %v1776
    %v1778 = vrot.slane %v1499, 5
    %v1779 = vrot.slane %v1778, 4
    %v1780 = vrot.slane %v1500, 5
    %v1781 = vsel %vm1630, %v1779, %v1780
    %v1782 = vrot.slane %v1780, 4
    %v1783 = vrot.slane %v1501, 5
    %v1784 = vsel %vm1630, %v1782, %v1783
    %v1785 = vrot.slane %v1502, 5
    %v1786 = vrot.slane %v1785, 4
    %v1787 = vrot.slane %v1503, 5
    %v1788 = vsel %vm1630, %v1786, %v1787
    %v1789 = vrot.slane %v1787, 4
    %v1790 = vrot.slane %v1504, 5
    %v1791 = vsel %vm1630, %v1789, %v1790
    %v1792 = vrot.slane %v1505, 5
    %v1793 = vrot.slane %v1792, 4
    %v1794 = vrot.slane %v1506, 5
    %v1795 = vsel %vm1630, %v1793, %v1794
    %v1796 = vrot.slane %v1794, 4
    %v1797 = vrot.slane %v1507, 5
    %v1798 = vsel %vm1630, %v1796, %v1797
    %v1799 = vrot.slane %v1508, 5
    %v1800 = vrot.slane %v1799, 4
    %v1801 = vrot.slane %v1509, 5
    %v1802 = vsel %vm1630, %v1800, %v1801
    %v1803 = vrot.slane %v1801, 4
    %v1804 = vrot.slane %v1510, 5
    %v1805 = vsel %vm1630, %v1803, %v1804
    %v1806 = vrot.slane %v1511, 5
    %v1807 = vrot.slane %v1806, 4
    %v1808 = vrot.slane %v1512, 5
    %v1809 = vsel %vm1630, %v1807, %v1808
    %v1810 = vrot.slane %v1808, 4
    %v1811 = vrot.slane %v1513, 5
    %v1812 = vsel %vm1630, %v1810, %v1811
    %v1813 = vrot.slane %v1514, 5
    %v1814 = vrot.slane %v1813, 4
    %v1815 = vrot.slane %v1515, 5
    %v1816 = vsel %vm1630, %v1814, %v1815
    %v1817 = vrot.slane %v1815, 4
    %v1818 = vrot.slane %v1516, 5
    %v1819 = vsel %vm1630, %v1817, %v1818
    %v1820 = vrot.slane %v1517, 5
    %v1821 = vrot.slane %v1820, 4
    %v1822 = vrot.slane %v1518, 5
    %v1823 = vsel %vm1630, %v1821, %v1822
    %v1824 = vrot.slane %v1822, 4
    %v1825 = vrot.slane %v1519, 5
    %v1826 = vsel %vm1630, %v1824, %v1825
    %v1827 = vrot.slane %v1520, 5
    %v1828 = vrot.slane %v1827, 4
    %v1829 = vrot.slane %v1521, 5
    %v1830 = vsel %vm1630, %v1828, %v1829
    %v1831 = vrot.slane %v1829, 4
    %v1832 = vrot.slane %v1522, 5
    %v1833 = vsel %vm1630, %v1831, %v1832
    %v1834 = vrot.slane %v1523, 5
    %v1835 = vrot.slane %v1834, 4
    %v1836 = vrot.slane %v1524, 5
    %v1837 = vsel %vm1630, %v1835, %v1836
    %v1838 = vrot.slane %v1836, 4
    %v1839 = vrot.slane %v1525, 5
    %v1840 = vsel %vm1630, %v1838, %v1839
    %v1841 = vrot.slane %v1526, 5
    %v1842 = vrot.slane %v1841, 4
    %v1843 = vrot.slane %v1527, 5
    %v1844 = vsel %vm1630, %v1842, %v1843
    %v1845 = vrot.slane %v1843, 4
    %v1846 = vrot.slane %v1528, 5
    %v1847 = vsel %vm1630, %v1845, %v1846
    %v1848 = vrot.slane %v1529, 5
    %v1849 = vrot.slane %v1848, 4
    %v1850 = vrot.slane %v1530, 5
    %v1851 = vsel %vm1630, %v1849, %v1850
    %v1852 = vrot.slane %v1850, 4
    %v1853 = vrot.slane %v1531, 5
    %v1854 = vsel %vm1630, %v1852, %v1853
    %v1855 = vunpack.c.l.b16 %v1634
    %v1856 = vunpack.c.l.b16 %v1637
    %v1857 = vunpack.c.l.b16 %v1641
    %v1858 = vunpack.c.l.b16 %v1644
    %v1859 = vunpack.c.l.b16 %v1648
    %v1860 = vunpack.c.l.b16 %v1651
    %v1861 = vunpack.c.l.b16 %v1655
    %v1862 = vunpack.c.l.b16 %v1658
    %v1863 = vunpack.c.l.b16 %v1662
    %v1864 = vunpack.c.l.b16 %v1665
    %v1865 = vunpack.c.l.b16 %v1669
    %v1866 = vunpack.c.l.b16 %v1672
    %v1867 = vunpack.c.l.b16 %v1676
    %v1868 = vunpack.c.l.b16 %v1679
    %v1869 = vunpack.c.l.b16 %v1683
    %v1870 = vunpack.c.l.b16 %v1686
    %v1871 = vunpack.c.l.b16 %v1690
    %v1872 = vunpack.c.l.b16 %v1693
    %v1873 = vunpack.c.l.b16 %v1697
    %v1874 = vunpack.c.l.b16 %v1700
    %v1875 = vunpack.c.l.b16 %v1704
    %v1876 = vunpack.c.l.b16 %v1707
    %v1877 = vunpack.c.l.b16 %v1711
    %v1878 = vunpack.c.l.b16 %v1714
    %v1879 = vunpack.c.l.b16 %v1718
    %v1880 = vunpack.c.l.b16 %v1721
    %v1881 = vunpack.c.l.b16 %v1725
    %v1882 = vunpack.c.l.b16 %v1728
    %v1883 = vunpack.c.l.b16 %v1732
    %v1884 = vunpack.c.l.b16 %v1735
    %v1885 = vunpack.c.l.b16 %v1739
    %v1886 = vunpack.c.l.b16 %v1742
    %v1887 = vunpack.c.l.b16 %v1746
    %v1888 = vunpack.c.l.b16 %v1749
    %v1889 = vunpack.c.l.b16 %v1753
    %v1890 = vunpack.c.l.b16 %v1756
    %v1891 = vunpack.c.l.b16 %v1760
    %v1892 = vunpack.c.l.b16 %v1763
    %v1893 = vunpack.c.l.b16 %v1767
    %v1894 = vunpack.c.l.b16 %v1770
    %v1895 = vunpack.c.l.b16 %v1774
    %v1896 = vunpack.c.l.b16 %v1777
    %v1897 = vunpack.c.l.b16 %v1781
    %v1898 = vunpack.c.l.b16 %v1784
    %v1899 = vunpack.c.l.b16 %v1788
    %v1900 = vunpack.c.l.b16 %v1791
    %v1901 = vunpack.c.l.b16 %v1795
    %v1902 = vunpack.c.l.b16 %v1798
    %v1903 = vunpack.c.l.b16 %v1802
    %v1904 = vunpack.c.l.b16 %v1805
    %v1905 = vunpack.c.l.b16 %v1809
    %v1906 = vunpack.c.l.b16 %v1812
    %v1907 = vunpack.c.l.b16 %v1816
    %v1908 = vunpack.c.l.b16 %v1819
    %v1909 = vunpack.c.l.b16 %v1823
    %v1910 = vunpack.c.l.b16 %v1826
    %v1911 = vunpack.c.l.b16 %v1830
    %v1912 = vunpack.c.l.b16 %v1833
    %v1913 = vunpack.c.l.b16 %v1837
    %v1914 = vunpack.c.l.b16 %v1840
    %v1915 = vunpack.c.l.b16 %v1844
    %v1916 = vunpack.c.l.b16 %v1847
    %v1917 = vunpack.c.l.b16 %v1851
    %v1918 = vunpack.c.l.b16 %v1854
    %v1919 = vpack.c.b16 %v1856, %v1855
    %v1920 = vpack.c.b16 %v1858, %v1857
    %v1921 = vpack.c.b16 %v1860, %v1859
    %v1922 = vpack.c.b16 %v1862, %v1861
    %v1923 = vpack.c.b16 %v1864, %v1863
    %v1924 = vpack.c.b16 %v1866, %v1865
    %v1925 = vpack.c.b16 %v1868, %v1867
    %v1926 = vpack.c.b16 %v1870, %v1869
    %v1927 = vpack.c.b16 %v1872, %v1871
    %v1928 = vpack.c.b16 %v1874, %v1873
    %v1929 = vpack.c.b16 %v1876, %v1875
    %v1930 = vpack.c.b16 %v1878, %v1877
    %v1931 = vpack.c.b16 %v1880, %v1879
    %v1932 = vpack.c.b16 %v1882, %v1881
    %v1933 = vpack.c.b16 %v1884, %v1883
    %v1934 = vpack.c.b16 %v1886, %v1885
    %v1935 = vpack.c.b16 %v1888, %v1887
    %v1936 = vpack.c.b16 %v1890, %v1889
    %v1937 = vpack.c.b16 %v1892, %v1891
    %v1938 = vpack.c.b16 %v1894, %v1893
    %v1939 = vpack.c.b16 %v1896, %v1895
    %v1940 = vpack.c.b16 %v1898, %v1897
    %v1941 = vpack.c.b16 %v1900, %v1899
    %v1942 = vpack.c.b16 %v1902, %v1901
    %v1943 = vpack.c.b16 %v1904, %v1903
    %v1944 = vpack.c.b16 %v1906, %v1905
    %v1945 = vpack.c.b16 %v1908, %v1907
    %v1946 = vpack.c.b16 %v1910, %v1909
    %v1947 = vpack.c.b16 %v1912, %v1911
    %v1948 = vpack.c.b16 %v1914, %v1913
    %v1949 = vpack.c.b16 %v1916, %v1915
    %v1950 = vpack.c.b16 %v1918, %v1917
    %1951 = vrot.lane.b32.xlu0 %v1919, 8
    %v1952 = vpop.permute.xlu0 %1951
    %1953 = vrot.lane.b32.xlu0 %v1920, 8
    %v1954 = vpop.permute.xlu0 %1953
    %1955 = vrot.lane.b32.xlu0 %v1921, 8
    %v1956 = vpop.permute.xlu0 %1955
    %1957 = vrot.lane.b32.xlu0 %v1922, 8
    %v1958 = vpop.permute.xlu0 %1957
    %1959 = vrot.lane.b32.xlu0 %v1923, 8
    %v1960 = vpop.permute.xlu0 %1959
    %1961 = vrot.lane.b32.xlu0 %v1924, 8
    %v1962 = vpop.permute.xlu0 %1961
    %1963 = vrot.lane.b32.xlu0 %v1925, 8
    %v1964 = vpop.permute.xlu0 %1963
    %1965 = vrot.lane.b32.xlu0 %v1926, 8
    %v1966 = vpop.permute.xlu0 %1965
    %1967 = vrot.lane.b32.xlu0 %v1927, 8
    %v1968 = vpop.permute.xlu0 %1967
    %1969 = vrot.lane.b32.xlu0 %v1928, 8
    %v1970 = vpop.permute.xlu0 %1969
    %1971 = vrot.lane.b32.xlu0 %v1929, 8
    %v1972 = vpop.permute.xlu0 %1971
    %1973 = vrot.lane.b32.xlu0 %v1930, 8
    %v1974 = vpop.permute.xlu0 %1973
    %1975 = vrot.lane.b32.xlu0 %v1931, 8
    %v1976 = vpop.permute.xlu0 %1975
    %1977 = vrot.lane.b32.xlu0 %v1932, 8
    %v1978 = vpop.permute.xlu0 %1977
    %1979 = vrot.lane.b32.xlu0 %v1933, 8
    %v1980 = vpop.permute.xlu0 %1979
    %1981 = vrot.lane.b32.xlu0 %v1934, 8
    %v1982 = vpop.permute.xlu0 %1981
    %1983 = vrot.lane.b32.xlu0 %v1935, 8
    %v1984 = vpop.permute.xlu0 %1983
    %1985 = vrot.lane.b32.xlu0 %v1936, 8
    %v1986 = vpop.permute.xlu0 %1985
    %1987 = vrot.lane.b32.xlu0 %v1937, 8
    %v1988 = vpop.permute.xlu0 %1987
    %1989 = vrot.lane.b32.xlu0 %v1938, 8
    %v1990 = vpop.permute.xlu0 %1989
    %1991 = vrot.lane.b32.xlu0 %v1939, 8
    %v1992 = vpop.permute.xlu0 %1991
    %1993 = vrot.lane.b32.xlu0 %v1940, 8
    %v1994 = vpop.permute.xlu0 %1993
    %1995 = vrot.lane.b32.xlu0 %v1941, 8
    %v1996 = vpop.permute.xlu0 %1995
    %1997 = vrot.lane.b32.xlu0 %v1942, 8
    %v1998 = vpop.permute.xlu0 %1997
    %1999 = vrot.lane.b32.xlu0 %v1943, 8
    %v2000 = vpop.permute.xlu0 %1999
    %2001 = vrot.lane.b32.xlu0 %v1944, 8
    %v2002 = vpop.permute.xlu0 %2001
    %2003 = vrot.lane.b32.xlu0 %v1945, 8
    %v2004 = vpop.permute.xlu0 %2003
    %2005 = vrot.lane.b32.xlu0 %v1946, 8
    %v2006 = vpop.permute.xlu0 %2005
    %2007 = vrot.lane.b32.xlu0 %v1947, 8
    %v2008 = vpop.permute.xlu0 %2007
    %2009 = vrot.lane.b32.xlu0 %v1948, 8
    %v2010 = vpop.permute.xlu0 %2009
    %2011 = vrot.lane.b32.xlu0 %v1949, 8
    %v2012 = vpop.permute.xlu0 %2011
    %2013 = vrot.lane.b32.xlu0 %v1950, 8
    %v2014 = vpop.permute.xlu0 %2013
    %vm2047 = vcmask 97344
    %2048 = vst.msk [vmem:[#allocation2] sm:$0xff] %vm2047, %v1952
    %2049 = vst.msk [vmem:[#allocation2 + $0x8] sm:$0xff] %vm2047, %v1954
    %2050 = vst.msk [vmem:[#allocation2 + $0x10] sm:$0xff] %vm2047, %v1956
    %2051 = vst.msk [vmem:[#allocation2 + $0x18] sm:$0xff] %vm2047, %v1958
    %2052 = vst.msk [vmem:[#allocation2 + $0x20] sm:$0xff] %vm2047, %v1960
    %2053 = vst.msk [vmem:[#allocation2 + $0x28] sm:$0xff] %vm2047, %v1962
    %2054 = vst.msk [vmem:[#allocation2 + $0x30] sm:$0xff] %vm2047, %v1964
    %2055 = vst.msk [vmem:[#allocation2 + $0x38] sm:$0xff] %vm2047, %v1966
    %2056 = vst.msk [vmem:[#allocation2 + $0x40] sm:$0xff] %vm2047, %v1968
    %2057 = vst.msk [vmem:[#allocation2 + $0x48] sm:$0xff] %vm2047, %v1970
    %2058 = vst.msk [vmem:[#allocation2 + $0x50] sm:$0xff] %vm2047, %v1972
    %2059 = vst.msk [vmem:[#allocation2 + $0x58] sm:$0xff] %vm2047, %v1974
    %2060 = vst.msk [vmem:[#allocation2 + $0x60] sm:$0xff] %vm2047, %v1976
    %2061 = vst.msk [vmem:[#allocation2 + $0x68] sm:$0xff] %vm2047, %v1978
    %2062 = vst.msk [vmem:[#allocation2 + $0x70] sm:$0xff] %vm2047, %v1980
    %2063 = vst.msk [vmem:[#allocation2 + $0x78] sm:$0xff] %vm2047, %v1982
    %2064 = vst.msk [vmem:[#allocation2 + $0x80] sm:$0xff] %vm2047, %v1984
    %2065 = vst.msk [vmem:[#allocation2 + $0x88] sm:$0xff] %vm2047, %v1986
    %2066 = vst.msk [vmem:[#allocation2 + $0x90] sm:$0xff] %vm2047, %v1988
    %2067 = vst.msk [vmem:[#allocation2 + $0x98] sm:$0xff] %vm2047, %v1990
    %2068 = vst.msk [vmem:[#allocation2 + $0xa0] sm:$0xff] %vm2047, %v1992
    %2069 = vst.msk [vmem:[#allocation2 + $0xa8] sm:$0xff] %vm2047, %v1994
    %2070 = vst.msk [vmem:[#allocation2 + $0xb0] sm:$0xff] %vm2047, %v1996
    %2071 = vst.msk [vmem:[#allocation2 + $0xb8] sm:$0xff] %vm2047, %v1998
    %2072 = vst.msk [vmem:[#allocation2 + $0xc0] sm:$0xff] %vm2047, %v2000
    %2073 = vst.msk [vmem:[#allocation2 + $0xc8] sm:$0xff] %vm2047, %v2002
    %2074 = vst.msk [vmem:[#allocation2 + $0xd0] sm:$0xff] %vm2047, %v2004
    %2075 = vst.msk [vmem:[#allocation2 + $0xd8] sm:$0xff] %vm2047, %v2006
    %2076 = vst.msk [vmem:[#allocation2 + $0xe0] sm:$0xff] %vm2047, %v2008
    %2077 = vst.msk [vmem:[#allocation2 + $0xe8] sm:$0xff] %vm2047, %v2010
    %2078 = vst.msk [vmem:[#allocation2 + $0xf0] sm:$0xff] %vm2047, %v2012
    %2079 = vst.msk [vmem:[#allocation2 + $0xf8] sm:$0xff] %vm2047, %v2014
    %s2080 = scalar_lea.vmem %s0, 12
    %v2081 = vld [vmem:[%s2080] sm:$0xf]
    %v2082 = vld [vmem:[%s2080 + $0x4] sm:$0xf]
    %v2083 = vld [vmem:[%s2080 + $0xc] sm:$0xf]
    %v2084 = vld [vmem:[%s2080 + $0x10] sm:$0xf]
    %v2085 = vld [vmem:[%s2080 + $0x18] sm:$0xf]
    %v2086 = vld [vmem:[%s2080 + $0x1c] sm:$0xf]
    %v2087 = vld [vmem:[%s2080 + $0x24] sm:$0xf]
    %v2088 = vld [vmem:[%s2080 + $0x28] sm:$0xf]
    %v2089 = vld [vmem:[%s2080 + $0x30] sm:$0xf]
    %v2090 = vld [vmem:[%s2080 + $0x34] sm:$0xf]
    %v2091 = vld [vmem:[%s2080 + $0x3c] sm:$0xf]
    %v2092 = vld [vmem:[%s2080 + $0x40] sm:$0xf]
    %v2093 = vld [vmem:[%s2080 + $0x48] sm:$0xf]
    %v2094 = vld [vmem:[%s2080 + $0x4c] sm:$0xf]
    %v2095 = vld [vmem:[%s2080 + $0x54] sm:$0xf]
    %v2096 = vld [vmem:[%s2080 + $0x58] sm:$0xf]
    %v2097 = vld [vmem:[%s2080 + $0x60] sm:$0xf]
    %v2098 = vld [vmem:[%s2080 + $0x64] sm:$0xf]
    %v2099 = vld [vmem:[%s2080 + $0x6c] sm:$0xf]
    %v2100 = vld [vmem:[%s2080 + $0x70] sm:$0xf]
    %v2101 = vld [vmem:[%s2080 + $0x78] sm:$0xf]
    %v2102 = vld [vmem:[%s2080 + $0x7c] sm:$0xf]
    %v2103 = vld [vmem:[%s2080 + $0x84] sm:$0xf]
    %v2104 = vld [vmem:[%s2080 + $0x88] sm:$0xf]
    %v2105 = vld [vmem:[%s2080 + $0x90] sm:$0xf]
    %v2106 = vld [vmem:[%s2080 + $0x94] sm:$0xf]
    %v2107 = vld [vmem:[%s2080 + $0x9c] sm:$0xf]
    %v2108 = vld [vmem:[%s2080 + $0xa0] sm:$0xf]
    %v2109 = vld [vmem:[%s2080 + $0xa8] sm:$0xf]
    %v2110 = vld [vmem:[%s2080 + $0xac] sm:$0xf]
    %v2111 = vld [vmem:[%s2080 + $0xb4] sm:$0xf]
    %v2112 = vld [vmem:[%s2080 + $0xb8] sm:$0xf]
    %v2113 = vld [vmem:[%s2080 + $0xd8] sm:$0xf]
    %v2114 = vld [vmem:[%s2080 + $0xdc] sm:$0xf]
    %v2115 = vld [vmem:[%s2080 + $0xe4] sm:$0xf]
    %v2116 = vld [vmem:[%s2080 + $0xe8] sm:$0xf]
    %v2117 = vld [vmem:[%s2080 + $0xf0] sm:$0xf]
    %v2118 = vld [vmem:[%s2080 + $0xf4] sm:$0xf]
    %v2119 = vld [vmem:[%s2080 + $0xfc] sm:$0xf]
    %v2120 = vld [vmem:[%s2080 + $0x100] sm:$0xf]
    %v2121 = vld [vmem:[%s2080 + $0x108] sm:$0xf]
    %v2122 = vld [vmem:[%s2080 + $0x10c] sm:$0xf]
    %v2123 = vld [vmem:[%s2080 + $0x114] sm:$0xf]
    %v2124 = vld [vmem:[%s2080 + $0x118] sm:$0xf]
    %v2125 = vld [vmem:[%s2080 + $0x120] sm:$0xf]
    %v2126 = vld [vmem:[%s2080 + $0x124] sm:$0xf]
    %v2127 = vld [vmem:[%s2080 + $0x12c] sm:$0xf]
    %v2128 = vld [vmem:[%s2080 + $0x130] sm:$0xf]
    %v2129 = vld [vmem:[%s2080 + $0x138] sm:$0xf]
    %v2130 = vld [vmem:[%s2080 + $0x13c] sm:$0xf]
    %v2131 = vld [vmem:[%s2080 + $0x144] sm:$0xf]
    %v2132 = vld [vmem:[%s2080 + $0x148] sm:$0xf]
    %v2133 = vld [vmem:[%s2080 + $0x150] sm:$0xf]
    %v2134 = vld [vmem:[%s2080 + $0x154] sm:$0xf]
    %v2135 = vld [vmem:[%s2080 + $0x15c] sm:$0xf]
    %v2136 = vld [vmem:[%s2080 + $0x160] sm:$0xf]
    %v2137 = vld [vmem:[%s2080 + $0x168] sm:$0xf]
    %v2138 = vld [vmem:[%s2080 + $0x16c] sm:$0xf]
    %v2139 = vld [vmem:[%s2080 + $0x174] sm:$0xf]
    %v2140 = vld [vmem:[%s2080 + $0x178] sm:$0xf]
    %v2141 = vld [vmem:[%s2080 + $0x180] sm:$0xf]
    %v2142 = vld [vmem:[%s2080 + $0x184] sm:$0xf]
    %v2143 = vld [vmem:[%s2080 + $0x18c] sm:$0xf]
    %v2144 = vld [vmem:[%s2080 + $0x190] sm:$0xf]
    %v2209 = vunpack.c.l.b16 %v2081
    %v2210 = vunpack.c.l.b16 %v2082
    %v2211 = vunpack.c.l.b16 %v2083
    %v2212 = vunpack.c.l.b16 %v2084
    %v2213 = vunpack.c.l.b16 %v2085
    %v2214 = vunpack.c.l.b16 %v2086
    %v2215 = vunpack.c.l.b16 %v2087
    %v2216 = vunpack.c.l.b16 %v2088
    %v2217 = vunpack.c.l.b16 %v2089
    %v2218 = vunpack.c.l.b16 %v2090
    %v2219 = vunpack.c.l.b16 %v2091
    %v2220 = vunpack.c.l.b16 %v2092
    %v2221 = vunpack.c.l.b16 %v2093
    %v2222 = vunpack.c.l.b16 %v2094
    %v2223 = vunpack.c.l.b16 %v2095
    %v2224 = vunpack.c.l.b16 %v2096
    %v2225 = vunpack.c.l.b16 %v2097
    %v2226 = vunpack.c.l.b16 %v2098
    %v2227 = vunpack.c.l.b16 %v2099
    %v2228 = vunpack.c.l.b16 %v2100
    %v2229 = vunpack.c.l.b16 %v2101
    %v2230 = vunpack.c.l.b16 %v2102
    %v2231 = vunpack.c.l.b16 %v2103
    %v2232 = vunpack.c.l.b16 %v2104
    %v2233 = vunpack.c.l.b16 %v2105
    %v2234 = vunpack.c.l.b16 %v2106
    %v2235 = vunpack.c.l.b16 %v2107
    %v2236 = vunpack.c.l.b16 %v2108
    %v2237 = vunpack.c.l.b16 %v2109
    %v2238 = vunpack.c.l.b16 %v2110
    %v2239 = vunpack.c.l.b16 %v2111
    %v2240 = vunpack.c.l.b16 %v2112
    %v2241 = vunpack.c.l.b16 %v2113
    %v2242 = vunpack.c.l.b16 %v2114
    %v2243 = vunpack.c.l.b16 %v2115
    %v2244 = vunpack.c.l.b16 %v2116
    %v2245 = vunpack.c.l.b16 %v2117
    %v2246 = vunpack.c.l.b16 %v2118
    %v2247 = vunpack.c.l.b16 %v2119
    %v2248 = vunpack.c.l.b16 %v2120
    %v2249 = vunpack.c.l.b16 %v2121
    %v2250 = vunpack.c.l.b16 %v2122
    %v2251 = vunpack.c.l.b16 %v2123
    %v2252 = vunpack.c.l.b16 %v2124
    %v2253 = vunpack.c.l.b16 %v2125
    %v2254 = vunpack.c.l.b16 %v2126
    %v2255 = vunpack.c.l.b16 %v2127
    %v2256 = vunpack.c.l.b16 %v2128
    %v2257 = vunpack.c.l.b16 %v2129
    %v2258 = vunpack.c.l.b16 %v2130
    %v2259 = vunpack.c.l.b16 %v2131
    %v2260 = vunpack.c.l.b16 %v2132
    %v2261 = vunpack.c.l.b16 %v2133
    %v2262 = vunpack.c.l.b16 %v2134
    %v2263 = vunpack.c.l.b16 %v2135
    %v2264 = vunpack.c.l.b16 %v2136
    %v2265 = vunpack.c.l.b16 %v2137
    %v2266 = vunpack.c.l.b16 %v2138
    %v2267 = vunpack.c.l.b16 %v2139
    %v2268 = vunpack.c.l.b16 %v2140
    %v2269 = vunpack.c.l.b16 %v2141
    %v2270 = vunpack.c.l.b16 %v2142
    %v2271 = vunpack.c.l.b16 %v2143
    %v2272 = vunpack.c.l.b16 %v2144
    %v2273 = vpack.c.b16 %v2210, %v2209
    %v2274 = vpack.c.b16 %v2212, %v2211
    %v2275 = vpack.c.b16 %v2214, %v2213
    %v2276 = vpack.c.b16 %v2216, %v2215
    %v2277 = vpack.c.b16 %v2218, %v2217
    %v2278 = vpack.c.b16 %v2220, %v2219
    %v2279 = vpack.c.b16 %v2222, %v2221
    %v2280 = vpack.c.b16 %v2224, %v2223
    %v2281 = vpack.c.b16 %v2226, %v2225
    %v2282 = vpack.c.b16 %v2228, %v2227
    %v2283 = vpack.c.b16 %v2230, %v2229
    %v2284 = vpack.c.b16 %v2232, %v2231
    %v2285 = vpack.c.b16 %v2234, %v2233
    %v2286 = vpack.c.b16 %v2236, %v2235
    %v2287 = vpack.c.b16 %v2238, %v2237
    %v2288 = vpack.c.b16 %v2240, %v2239
    %v2289 = vpack.c.b16 %v2242, %v2241
    %v2290 = vpack.c.b16 %v2244, %v2243
    %v2291 = vpack.c.b16 %v2246, %v2245
    %v2292 = vpack.c.b16 %v2248, %v2247
    %v2293 = vpack.c.b16 %v2250, %v2249
    %v2294 = vpack.c.b16 %v2252, %v2251
    %v2295 = vpack.c.b16 %v2254, %v2253
    %v2296 = vpack.c.b16 %v2256, %v2255
    %v2297 = vpack.c.b16 %v2258, %v2257
    %v2298 = vpack.c.b16 %v2260, %v2259
    %v2299 = vpack.c.b16 %v2262, %v2261
    %v2300 = vpack.c.b16 %v2264, %v2263
    %v2301 = vpack.c.b16 %v2266, %v2265
    %v2302 = vpack.c.b16 %v2268, %v2267
    %v2303 = vpack.c.b16 %v2270, %v2269
    %v2304 = vpack.c.b16 %v2272, %v2271
    %2305 = vrot.lane.b32.xlu0 %v2273, 12
    %v2306 = vpop.permute.xlu0 %2305
    %2307 = vrot.lane.b32.xlu0 %v2274, 12
    %v2308 = vpop.permute.xlu0 %2307
    %2309 = vrot.lane.b32.xlu0 %v2275, 12
    %v2310 = vpop.permute.xlu0 %2309
    %2311 = vrot.lane.b32.xlu0 %v2276, 12
    %v2312 = vpop.permute.xlu0 %2311
    %2313 = vrot.lane.b32.xlu0 %v2277, 12
    %v2314 = vpop.permute.xlu0 %2313
    %2315 = vrot.lane.b32.xlu0 %v2278, 12
    %v2316 = vpop.permute.xlu0 %2315
    %2317 = vrot.lane.b32.xlu0 %v2279, 12
    %v2318 = vpop.permute.xlu0 %2317
    %2319 = vrot.lane.b32.xlu0 %v2280, 12
    %v2320 = vpop.permute.xlu0 %2319
    %2321 = vrot.lane.b32.xlu0 %v2281, 12
    %v2322 = vpop.permute.xlu0 %2321
    %2323 = vrot.lane.b32.xlu0 %v2282, 12
    %v2324 = vpop.permute.xlu0 %2323
    %2325 = vrot.lane.b32.xlu0 %v2283, 12
    %v2326 = vpop.permute.xlu0 %2325
    %2327 = vrot.lane.b32.xlu0 %v2284, 12
    %v2328 = vpop.permute.xlu0 %2327
    %2329 = vrot.lane.b32.xlu0 %v2285, 12
    %v2330 = vpop.permute.xlu0 %2329
    %2331 = vrot.lane.b32.xlu0 %v2286, 12
    %v2332 = vpop.permute.xlu0 %2331
    %2333 = vrot.lane.b32.xlu0 %v2287, 12
    %v2334 = vpop.permute.xlu0 %2333
    %2335 = vrot.lane.b32.xlu0 %v2288, 12
    %v2336 = vpop.permute.xlu0 %2335
    %2337 = vrot.lane.b32.xlu0 %v2289, 12
    %v2338 = vpop.permute.xlu0 %2337
    %2339 = vrot.lane.b32.xlu0 %v2290, 12
    %v2340 = vpop.permute.xlu0 %2339
    %2341 = vrot.lane.b32.xlu0 %v2291, 12
    %v2342 = vpop.permute.xlu0 %2341
    %2343 = vrot.lane.b32.xlu0 %v2292, 12
    %v2344 = vpop.permute.xlu0 %2343
    %2345 = vrot.lane.b32.xlu0 %v2293, 12
    %v2346 = vpop.permute.xlu0 %2345
    %2347 = vrot.lane.b32.xlu0 %v2294, 12
    %v2348 = vpop.permute.xlu0 %2347
    %2349 = vrot.lane.b32.xlu0 %v2295, 12
    %v2350 = vpop.permute.xlu0 %2349
    %2351 = vrot.lane.b32.xlu0 %v2296, 12
    %v2352 = vpop.permute.xlu0 %2351
    %2353 = vrot.lane.b32.xlu0 %v2297, 12
    %v2354 = vpop.permute.xlu0 %2353
    %2355 = vrot.lane.b32.xlu0 %v2298, 12
    %v2356 = vpop.permute.xlu0 %2355
    %2357 = vrot.lane.b32.xlu0 %v2299, 12
    %v2358 = vpop.permute.xlu0 %2357
    %2359 = vrot.lane.b32.xlu0 %v2300, 12
    %v2360 = vpop.permute.xlu0 %2359
    %2361 = vrot.lane.b32.xlu0 %v2301, 12
    %v2362 = vpop.permute.xlu0 %2361
    %2363 = vrot.lane.b32.xlu0 %v2302, 12
    %v2364 = vpop.permute.xlu0 %2363
    %2365 = vrot.lane.b32.xlu0 %v2303, 12
    %v2366 = vpop.permute.xlu0 %2365
    %2367 = vrot.lane.b32.xlu0 %v2304, 12
    %v2368 = vpop.permute.xlu0 %2367
    %vm2401 = vcmask 130144
    %2402 = vst.msk [vmem:[#allocation2] sm:$0xff] %vm2401, %v2306
    %2403 = vst.msk [vmem:[#allocation2 + $0x8] sm:$0xff] %vm2401, %v2308
    %2404 = vst.msk [vmem:[#allocation2 + $0x10] sm:$0xff] %vm2401, %v2310
    %2405 = vst.msk [vmem:[#allocation2 + $0x18] sm:$0xff] %vm2401, %v2312
    %2406 = vst.msk [vmem:[#allocation2 + $0x20] sm:$0xff] %vm2401, %v2314
    %2407 = vst.msk [vmem:[#allocation2 + $0x28] sm:$0xff] %vm2401, %v2316
    %2408 = vst.msk [vmem:[#allocation2 + $0x30] sm:$0xff] %vm2401, %v2318
    %2409 = vst.msk [vmem:[#allocation2 + $0x38] sm:$0xff] %vm2401, %v2320
    %2410 = vst.msk [vmem:[#allocation2 + $0x40] sm:$0xff] %vm2401, %v2322
    %2411 = vst.msk [vmem:[#allocation2 + $0x48] sm:$0xff] %vm2401, %v2324
    %2412 = vst.msk [vmem:[#allocation2 + $0x50] sm:$0xff] %vm2401, %v2326
    %2413 = vst.msk [vmem:[#allocation2 + $0x58] sm:$0xff] %vm2401, %v2328
    %2414 = vst.msk [vmem:[#allocation2 + $0x60] sm:$0xff] %vm2401, %v2330
    %2415 = vst.msk [vmem:[#allocation2 + $0x68] sm:$0xff] %vm2401, %v2332
    %2416 = vst.msk [vmem:[#allocation2 + $0x70] sm:$0xff] %vm2401, %v2334
    %2417 = vst.msk [vmem:[#allocation2 + $0x78] sm:$0xff] %vm2401, %v2336
    %2418 = vst.msk [vmem:[#allocation2 + $0x80] sm:$0xff] %vm2401, %v2338
    %2419 = vst.msk [vmem:[#allocation2 + $0x88] sm:$0xff] %vm2401, %v2340
    %2420 = vst.msk [vmem:[#allocation2 + $0x90] sm:$0xff] %vm2401, %v2342
    %2421 = vst.msk [vmem:[#allocation2 + $0x98] sm:$0xff] %vm2401, %v2344
    %2422 = vst.msk [vmem:[#allocation2 + $0xa0] sm:$0xff] %vm2401, %v2346
    %2423 = vst.msk [vmem:[#allocation2 + $0xa8] sm:$0xff] %vm2401, %v2348
    %2424 = vst.msk [vmem:[#allocation2 + $0xb0] sm:$0xff] %vm2401, %v2350
    %2425 = vst.msk [vmem:[#allocation2 + $0xb8] sm:$0xff] %vm2401, %v2352
    %2426 = vst.msk [vmem:[#allocation2 + $0xc0] sm:$0xff] %vm2401, %v2354
    %2427 = vst.msk [vmem:[#allocation2 + $0xc8] sm:$0xff] %vm2401, %v2356
    %2428 = vst.msk [vmem:[#allocation2 + $0xd0] sm:$0xff] %vm2401, %v2358
    %2429 = vst.msk [vmem:[#allocation2 + $0xd8] sm:$0xff] %vm2401, %v2360
    %2430 = vst.msk [vmem:[#allocation2 + $0xe0] sm:$0xff] %vm2401, %v2362
    %2431 = vst.msk [vmem:[#allocation2 + $0xe8] sm:$0xff] %vm2401, %v2364
    %2432 = vst.msk [vmem:[#allocation2 + $0xf0] sm:$0xff] %vm2401, %v2366
    %2433 = vst.msk [vmem:[#allocation2 + $0xf8] sm:$0xff] %vm2401, %v2368
    %v2434 = vld [vmem:[%s2080] sm:$0xf]
    %v2435 = vld [vmem:[%s2080 + $0x4] sm:$0xf]
    %v2436 = vld [vmem:[%s2080 + $0x8] sm:$0x1]
    %v2437 = vld [vmem:[%s2080 + $0xc] sm:$0xf]
    %v2438 = vld [vmem:[%s2080 + $0x10] sm:$0xf]
    %v2439 = vld [vmem:[%s2080 + $0x14] sm:$0x1]
    %v2440 = vld [vmem:[%s2080 + $0x18] sm:$0xf]
    %v2441 = vld [vmem:[%s2080 + $0x1c] sm:$0xf]
    %v2442 = vld [vmem:[%s2080 + $0x20] sm:$0x1]
    %v2443 = vld [vmem:[%s2080 + $0x24] sm:$0xf]
    %v2444 = vld [vmem:[%s2080 + $0x28] sm:$0xf]
    %v2445 = vld [vmem:[%s2080 + $0x2c] sm:$0x1]
    %v2446 = vld [vmem:[%s2080 + $0x30] sm:$0xf]
    %v2447 = vld [vmem:[%s2080 + $0x34] sm:$0xf]
    %v2448 = vld [vmem:[%s2080 + $0x38] sm:$0x1]
    %v2449 = vld [vmem:[%s2080 + $0x3c] sm:$0xf]
    %v2450 = vld [vmem:[%s2080 + $0x40] sm:$0xf]
    %v2451 = vld [vmem:[%s2080 + $0x44] sm:$0x1]
    %v2452 = vld [vmem:[%s2080 + $0x48] sm:$0xf]
    %v2453 = vld [vmem:[%s2080 + $0x4c] sm:$0xf]
    %v2454 = vld [vmem:[%s2080 + $0x50] sm:$0x1]
    %v2455 = vld [vmem:[%s2080 + $0x54] sm:$0xf]
    %v2456 = vld [vmem:[%s2080 + $0x58] sm:$0xf]
    %v2457 = vld [vmem:[%s2080 + $0x5c] sm:$0x1]
    %v2458 = vld [vmem:[%s2080 + $0x60] sm:$0xf]
    %v2459 = vld [vmem:[%s2080 + $0x64] sm:$0xf]
    %v2460 = vld [vmem:[%s2080 + $0x68] sm:$0x1]
    %v2461 = vld [vmem:[%s2080 + $0x6c] sm:$0xf]
    %v2462 = vld [vmem:[%s2080 + $0x70] sm:$0xf]
    %v2463 = vld [vmem:[%s2080 + $0x74] sm:$0x1]
    %v2464 = vld [vmem:[%s2080 + $0x78] sm:$0xf]
    %v2465 = vld [vmem:[%s2080 + $0x7c] sm:$0xf]
    %v2466 = vld [vmem:[%s2080 + $0x80] sm:$0x1]
    %v2467 = vld [vmem:[%s2080 + $0x84] sm:$0xf]
    %v2468 = vld [vmem:[%s2080 + $0x88] sm:$0xf]
    %v2469 = vld [vmem:[%s2080 + $0x8c] sm:$0x1]
    %v2470 = vld [vmem:[%s2080 + $0x90] sm:$0xf]
    %v2471 = vld [vmem:[%s2080 + $0x94] sm:$0xf]
    %v2472 = vld [vmem:[%s2080 + $0x98] sm:$0x1]
    %v2473 = vld [vmem:[%s2080 + $0x9c] sm:$0xf]
    %v2474 = vld [vmem:[%s2080 + $0xa0] sm:$0xf]
    %v2475 = vld [vmem:[%s2080 + $0xa4] sm:$0x1]
    %v2476 = vld [vmem:[%s2080 + $0xa8] sm:$0xf]
    %v2477 = vld [vmem:[%s2080 + $0xac] sm:$0xf]
    %v2478 = vld [vmem:[%s2080 + $0xb0] sm:$0x1]
    %v2479 = vld [vmem:[%s2080 + $0xb4] sm:$0xf]
    %v2480 = vld [vmem:[%s2080 + $0xb8] sm:$0xf]
    %v2481 = vld [vmem:[%s2080 + $0xbc] sm:$0x1]
    %v2482 = vld [vmem:[%s2080 + $0xd8] sm:$0xf]
    %v2483 = vld [vmem:[%s2080 + $0xdc] sm:$0xf]
    %v2484 = vld [vmem:[%s2080 + $0xe0] sm:$0x1]
    %v2485 = vld [vmem:[%s2080 + $0xe4] sm:$0xf]
    %v2486 = vld [vmem:[%s2080 + $0xe8] sm:$0xf]
    %v2487 = vld [vmem:[%s2080 + $0xec] sm:$0x1]
    %v2488 = vld [vmem:[%s2080 + $0xf0] sm:$0xf]
    %v2489 = vld [vmem:[%s2080 + $0xf4] sm:$0xf]
    %v2490 = vld [vmem:[%s2080 + $0xf8] sm:$0x1]
    %v2491 = vld [vmem:[%s2080 + $0xfc] sm:$0xf]
    %v2492 = vld [vmem:[%s2080 + $0x100] sm:$0xf]
    %v2493 = vld [vmem:[%s2080 + $0x104] sm:$0x1]
    %v2494 = vld [vmem:[%s2080 + $0x108] sm:$0xf]
    %v2495 = vld [vmem:[%s2080 + $0x10c] sm:$0xf]
    %v2496 = vld [vmem:[%s2080 + $0x110] sm:$0x1]
    %v2497 = vld [vmem:[%s2080 + $0x114] sm:$0xf]
    %v2498 = vld [vmem:[%s2080 + $0x118] sm:$0xf]
    %v2499 = vld [vmem:[%s2080 + $0x11c] sm:$0x1]
    %v2500 = vld [vmem:[%s2080 + $0x120] sm:$0xf]
    %v2501 = vld [vmem:[%s2080 + $0x124] sm:$0xf]
    %v2502 = vld [vmem:[%s2080 + $0x128] sm:$0x1]
    %v2503 = vld [vmem:[%s2080 + $0x12c] sm:$0xf]
    %v2504 = vld [vmem:[%s2080 + $0x130] sm:$0xf]
    %v2505 = vld [vmem:[%s2080 + $0x134] sm:$0x1]
    %v2506 = vld [vmem:[%s2080 + $0x138] sm:$0xf]
    %v2507 = vld [vmem:[%s2080 + $0x13c] sm:$0xf]
    %v2508 = vld [vmem:[%s2080 + $0x140] sm:$0x1]
    %v2509 = vld [vmem:[%s2080 + $0x144] sm:$0xf]
    %v2510 = vld [vmem:[%s2080 + $0x148] sm:$0xf]
    %v2511 = vld [vmem:[%s2080 + $0x14c] sm:$0x1]
    %v2512 = vld [vmem:[%s2080 + $0x150] sm:$0xf]
    %v2513 = vld [vmem:[%s2080 + $0x154] sm:$0xf]
    %v2514 = vld [vmem:[%s2080 + $0x158] sm:$0x1]
    %v2515 = vld [vmem:[%s2080 + $0x15c] sm:$0xf]
    %v2516 = vld [vmem:[%s2080 + $0x160] sm:$0xf]
    %v2517 = vld [vmem:[%s2080 + $0x164] sm:$0x1]
    %v2518 = vld [vmem:[%s2080 + $0x168] sm:$0xf]
    %v2519 = vld [vmem:[%s2080 + $0x16c] sm:$0xf]
    %v2520 = vld [vmem:[%s2080 + $0x170] sm:$0x1]
    %v2521 = vld [vmem:[%s2080 + $0x174] sm:$0xf]
    %v2522 = vld [vmem:[%s2080 + $0x178] sm:$0xf]
    %v2523 = vld [vmem:[%s2080 + $0x17c] sm:$0x1]
    %v2524 = vld [vmem:[%s2080 + $0x180] sm:$0xf]
    %v2525 = vld [vmem:[%s2080 + $0x184] sm:$0xf]
    %v2526 = vld [vmem:[%s2080 + $0x188] sm:$0x1]
    %v2527 = vld [vmem:[%s2080 + $0x18c] sm:$0xf]
    %v2528 = vld [vmem:[%s2080 + $0x190] sm:$0xf]
    %v2529 = vld [vmem:[%s2080 + $0x194] sm:$0x1]
    %v2531 = vshrl.u32 %v2434, 16
    %v2533 = vrot.slane %v2531, 4
    %v2534 = vshll.u32 %v2434, 16
    %v2536 = vrot.slane %v2534, 5
    %v2537 = vor.u32 %v2533, %v2536
    %v2538 = vrot.slane %v2537, 4
    %v2540 = vshll.u32 %v2435, 16
    %v2542 = vrot.slane %v2540, 5
    %v2543 = vsel %vm442, %v2538, %v2542
    %v2544 = vshrl.u32 %v2435, 16
    %v2546 = vrot.slane %v2544, 4
    %v2547 = vor.u32 %v2546, %v2542
    %v2548 = vrot.slane %v2547, 4
    %v2550 = vshll.u32 %v2436, 16
    %v2552 = vrot.slane %v2550, 5
    %v2553 = vsel %vm442, %v2548, %v2552
    %v2555 = vshrl.u32 %v2437, 16
    %v2557 = vrot.slane %v2555, 4
    %v2558 = vshll.u32 %v2437, 16
    %v2560 = vrot.slane %v2558, 5
    %v2561 = vor.u32 %v2557, %v2560
    %v2562 = vrot.slane %v2561, 4
    %v2564 = vshll.u32 %v2438, 16
    %v2566 = vrot.slane %v2564, 5
    %v2567 = vsel %vm442, %v2562, %v2566
    %v2568 = vshrl.u32 %v2438, 16
    %v2570 = vrot.slane %v2568, 4
    %v2571 = vor.u32 %v2570, %v2566
    %v2572 = vrot.slane %v2571, 4
    %v2574 = vshll.u32 %v2439, 16
    %v2576 = vrot.slane %v2574, 5
    %v2577 = vsel %vm442, %v2572, %v2576
    %v2579 = vshrl.u32 %v2440, 16
    %v2581 = vrot.slane %v2579, 4
    %v2582 = vshll.u32 %v2440, 16
    %v2584 = vrot.slane %v2582, 5
    %v2585 = vor.u32 %v2581, %v2584
    %v2586 = vrot.slane %v2585, 4
    %v2588 = vshll.u32 %v2441, 16
    %v2590 = vrot.slane %v2588, 5
    %v2591 = vsel %vm442, %v2586, %v2590
    %v2592 = vshrl.u32 %v2441, 16
    %v2594 = vrot.slane %v2592, 4
    %v2595 = vor.u32 %v2594, %v2590
    %v2596 = vrot.slane %v2595, 4
    %v2598 = vshll.u32 %v2442, 16
    %v2600 = vrot.slane %v2598, 5
    %v2601 = vsel %vm442, %v2596, %v2600
    %v2603 = vshrl.u32 %v2443, 16
    %v2605 = vrot.slane %v2603, 4
    %v2606 = vshll.u32 %v2443, 16
    %v2608 = vrot.slane %v2606, 5
    %v2609 = vor.u32 %v2605, %v2608
    %v2610 = vrot.slane %v2609, 4
    %v2612 = vshll.u32 %v2444, 16
    %v2614 = vrot.slane %v2612, 5
    %v2615 = vsel %vm442, %v2610, %v2614
    %v2616 = vshrl.u32 %v2444, 16
    %v2618 = vrot.slane %v2616, 4
    %v2619 = vor.u32 %v2618, %v2614
    %v2620 = vrot.slane %v2619, 4
    %v2622 = vshll.u32 %v2445, 16
    %v2624 = vrot.slane %v2622, 5
    %v2625 = vsel %vm442, %v2620, %v2624
    %v2627 = vshrl.u32 %v2446, 16
    %v2629 = vrot.slane %v2627, 4
    %v2630 = vshll.u32 %v2446, 16
    %v2632 = vrot.slane %v2630, 5
    %v2633 = vor.u32 %v2629, %v2632
    %v2634 = vrot.slane %v2633, 4
    %v2636 = vshll.u32 %v2447, 16
    %v2638 = vrot.slane %v2636, 5
    %v2639 = vsel %vm442, %v2634, %v2638
    %v2640 = vshrl.u32 %v2447, 16
    %v2642 = vrot.slane %v2640, 4
    %v2643 = vor.u32 %v2642, %v2638
    %v2644 = vrot.slane %v2643, 4
    %v2646 = vshll.u32 %v2448, 16
    %v2648 = vrot.slane %v2646, 5
    %v2649 = vsel %vm442, %v2644, %v2648
    %v2651 = vshrl.u32 %v2449, 16
    %v2653 = vrot.slane %v2651, 4
    %v2654 = vshll.u32 %v2449, 16
    %v2656 = vrot.slane %v2654, 5
    %v2657 = vor.u32 %v2653, %v2656
    %v2658 = vrot.slane %v2657, 4
    %v2660 = vshll.u32 %v2450, 16
    %v2662 = vrot.slane %v2660, 5
    %v2663 = vsel %vm442, %v2658, %v2662
    %v2664 = vshrl.u32 %v2450, 16
    %v2666 = vrot.slane %v2664, 4
    %v2667 = vor.u32 %v2666, %v2662
    %v2668 = vrot.slane %v2667, 4
    %v2670 = vshll.u32 %v2451, 16
    %v2672 = vrot.slane %v2670, 5
    %v2673 = vsel %vm442, %v2668, %v2672
    %v2675 = vshrl.u32 %v2452, 16
    %v2677 = vrot.slane %v2675, 4
    %v2678 = vshll.u32 %v2452, 16
    %v2680 = vrot.slane %v2678, 5
    %v2681 = vor.u32 %v2677, %v2680
    %v2682 = vrot.slane %v2681, 4
    %v2684 = vshll.u32 %v2453, 16
    %v2686 = vrot.slane %v2684, 5
    %v2687 = vsel %vm442, %v2682, %v2686
    %v2688 = vshrl.u32 %v2453, 16
    %v2690 = vrot.slane %v2688, 4
    %v2691 = vor.u32 %v2690, %v2686
    %v2692 = vrot.slane %v2691, 4
    %v2694 = vshll.u32 %v2454, 16
    %v2696 = vrot.slane %v2694, 5
    %v2697 = vsel %vm442, %v2692, %v2696
    %v2699 = vshrl.u32 %v2455, 16
    %v2701 = vrot.slane %v2699, 4
    %v2702 = vshll.u32 %v2455, 16
    %v2704 = vrot.slane %v2702, 5
    %v2705 = vor.u32 %v2701, %v2704
    %v2706 = vrot.slane %v2705, 4
    %v2708 = vshll.u32 %v2456, 16
    %v2710 = vrot.slane %v2708, 5
    %v2711 = vsel %vm442, %v2706, %v2710
    %v2712 = vshrl.u32 %v2456, 16
    %v2714 = vrot.slane %v2712, 4
    %v2715 = vor.u32 %v2714, %v2710
    %v2716 = vrot.slane %v2715, 4
    %v2718 = vshll.u32 %v2457, 16
    %v2720 = vrot.slane %v2718, 5
    %v2721 = vsel %vm442, %v2716, %v2720
    %v2723 = vshrl.u32 %v2458, 16
    %v2725 = vrot.slane %v2723, 4
    %v2726 = vshll.u32 %v2458, 16
    %v2728 = vrot.slane %v2726, 5
    %v2729 = vor.u32 %v2725, %v2728
    %v2730 = vrot.slane %v2729, 4
    %v2732 = vshll.u32 %v2459, 16
    %v2734 = vrot.slane %v2732, 5
    %v2735 = vsel %vm442, %v2730, %v2734
    %v2736 = vshrl.u32 %v2459, 16
    %v2738 = vrot.slane %v2736, 4
    %v2739 = vor.u32 %v2738, %v2734
    %v2740 = vrot.slane %v2739, 4
    %v2742 = vshll.u32 %v2460, 16
    %v2744 = vrot.slane %v2742, 5
    %v2745 = vsel %vm442, %v2740, %v2744
    %v2747 = vshrl.u32 %v2461, 16
    %v2749 = vrot.slane %v2747, 4
    %v2750 = vshll.u32 %v2461, 16
    %v2752 = vrot.slane %v2750, 5
    %v2753 = vor.u32 %v2749, %v2752
    %v2754 = vrot.slane %v2753, 4
    %v2756 = vshll.u32 %v2462, 16
    %v2758 = vrot.slane %v2756, 5
    %v2759 = vsel %vm442, %v2754, %v2758
    %v2760 = vshrl.u32 %v2462, 16
    %v2762 = vrot.slane %v2760, 4
    %v2763 = vor.u32 %v2762, %v2758
    %v2764 = vrot.slane %v2763, 4
    %v2766 = vshll.u32 %v2463, 16
    %v2768 = vrot.slane %v2766, 5
    %v2769 = vsel %vm442, %v2764, %v2768
    %v2771 = vshrl.u32 %v2464, 16
    %v2773 = vrot.slane %v2771, 4
    %v2774 = vshll.u32 %v2464, 16
    %v2776 = vrot.slane %v2774, 5
    %v2777 = vor.u32 %v2773, %v2776
    %v2778 = vrot.slane %v2777, 4
    %v2780 = vshll.u32 %v2465, 16
    %v2782 = vrot.slane %v2780, 5
    %v2783 = vsel %vm442, %v2778, %v2782
    %v2784 = vshrl.u32 %v2465, 16
    %v2786 = vrot.slane %v2784, 4
    %v2787 = vor.u32 %v2786, %v2782
    %v2788 = vrot.slane %v2787, 4
    %v2790 = vshll.u32 %v2466, 16
    %v2792 = vrot.slane %v2790, 5
    %v2793 = vsel %vm442, %v2788, %v2792
    %v2795 = vshrl.u32 %v2467, 16
    %v2797 = vrot.slane %v2795, 4
    %v2798 = vshll.u32 %v2467, 16
    %v2800 = vrot.slane %v2798, 5
    %v2801 = vor.u32 %v2797, %v2800
    %v2802 = vrot.slane %v2801, 4
    %v2804 = vshll.u32 %v2468, 16
    %v2806 = vrot.slane %v2804, 5
    %v2807 = vsel %vm442, %v2802, %v2806
    %v2808 = vshrl.u32 %v2468, 16
    %v2810 = vrot.slane %v2808, 4
    %v2811 = vor.u32 %v2810, %v2806
    %v2812 = vrot.slane %v2811, 4
    %v2814 = vshll.u32 %v2469, 16
    %v2816 = vrot.slane %v2814, 5
    %v2817 = vsel %vm442, %v2812, %v2816
    %v2819 = vshrl.u32 %v2470, 16
    %v2821 = vrot.slane %v2819, 4
    %v2822 = vshll.u32 %v2470, 16
    %v2824 = vrot.slane %v2822, 5
    %v2825 = vor.u32 %v2821, %v2824
    %v2826 = vrot.slane %v2825, 4
    %v2828 = vshll.u32 %v2471, 16
    %v2830 = vrot.slane %v2828, 5
    %v2831 = vsel %vm442, %v2826, %v2830
    %v2832 = vshrl.u32 %v2471, 16
    %v2834 = vrot.slane %v2832, 4
    %v2835 = vor.u32 %v2834, %v2830
    %v2836 = vrot.slane %v2835, 4
    %v2838 = vshll.u32 %v2472, 16
    %v2840 = vrot.slane %v2838, 5
    %v2841 = vsel %vm442, %v2836, %v2840
    %v2843 = vshrl.u32 %v2473, 16
    %v2845 = vrot.slane %v2843, 4
    %v2846 = vshll.u32 %v2473, 16
    %v2848 = vrot.slane %v2846, 5
    %v2849 = vor.u32 %v2845, %v2848
    %v2850 = vrot.slane %v2849, 4
    %v2852 = vshll.u32 %v2474, 16
    %v2854 = vrot.slane %v2852, 5
    %v2855 = vsel %vm442, %v2850, %v2854
    %v2856 = vshrl.u32 %v2474, 16
    %v2858 = vrot.slane %v2856, 4
    %v2859 = vor.u32 %v2858, %v2854
    %v2860 = vrot.slane %v2859, 4
    %v2862 = vshll.u32 %v2475, 16
    %v2864 = vrot.slane %v2862, 5
    %v2865 = vsel %vm442, %v2860, %v2864
    %v2867 = vshrl.u32 %v2476, 16
    %v2869 = vrot.slane %v2867, 4
    %v2870 = vshll.u32 %v2476, 16
    %v2872 = vrot.slane %v2870, 5
    %v2873 = vor.u32 %v2869, %v2872
    %v2874 = vrot.slane %v2873, 4
    %v2876 = vshll.u32 %v2477, 16
    %v2878 = vrot.slane %v2876, 5
    %v2879 = vsel %vm442, %v2874, %v2878
    %v2880 = vshrl.u32 %v2477, 16
    %v2882 = vrot.slane %v2880, 4
    %v2883 = vor.u32 %v2882, %v2878
    %v2884 = vrot.slane %v2883, 4
    %v2886 = vshll.u32 %v2478, 16
    %v2888 = vrot.slane %v2886, 5
    %v2889 = vsel %vm442, %v2884, %v2888
    %v2891 = vshrl.u32 %v2479, 16
    %v2893 = vrot.slane %v2891, 4
    %v2894 = vshll.u32 %v2479, 16
    %v2896 = vrot.slane %v2894, 5
    %v2897 = vor.u32 %v2893, %v2896
    %v2898 = vrot.slane %v2897, 4
    %v2900 = vshll.u32 %v2480, 16
    %v2902 = vrot.slane %v2900, 5
    %v2903 = vsel %vm442, %v2898, %v2902
    %v2904 = vshrl.u32 %v2480, 16
    %v2906 = vrot.slane %v2904, 4
    %v2907 = vor.u32 %v2906, %v2902
    %v2908 = vrot.slane %v2907, 4
    %v2910 = vshll.u32 %v2481, 16
    %v2912 = vrot.slane %v2910, 5
    %v2913 = vsel %vm442, %v2908, %v2912
    %v2915 = vshrl.u32 %v2482, 16
    %v2917 = vrot.slane %v2915, 4
    %v2918 = vshll.u32 %v2482, 16
    %v2920 = vrot.slane %v2918, 5
    %v2921 = vor.u32 %v2917, %v2920
    %v2922 = vrot.slane %v2921, 4
    %v2924 = vshll.u32 %v2483, 16
    %v2926 = vrot.slane %v2924, 5
    %v2927 = vsel %vm442, %v2922, %v2926
    %v2928 = vshrl.u32 %v2483, 16
    %v2930 = vrot.slane %v2928, 4
    %v2931 = vor.u32 %v2930, %v2926
    %v2932 = vrot.slane %v2931, 4
    %v2934 = vshll.u32 %v2484, 16
    %v2936 = vrot.slane %v2934, 5
    %v2937 = vsel %vm442, %v2932, %v2936
    %v2939 = vshrl.u32 %v2485, 16
    %v2941 = vrot.slane %v2939, 4
    %v2942 = vshll.u32 %v2485, 16
    %v2944 = vrot.slane %v2942, 5
    %v2945 = vor.u32 %v2941, %v2944
    %v2946 = vrot.slane %v2945, 4
    %v2948 = vshll.u32 %v2486, 16
    %v2950 = vrot.slane %v2948, 5
    %v2951 = vsel %vm442, %v2946, %v2950
    %v2952 = vshrl.u32 %v2486, 16
    %v2954 = vrot.slane %v2952, 4
    %v2955 = vor.u32 %v2954, %v2950
    %v2956 = vrot.slane %v2955, 4
    %v2958 = vshll.u32 %v2487, 16
    %v2960 = vrot.slane %v2958, 5
    %v2961 = vsel %vm442, %v2956, %v2960
    %v2963 = vshrl.u32 %v2488, 16
    %v2965 = vrot.slane %v2963, 4
    %v2966 = vshll.u32 %v2488, 16
    %v2968 = vrot.slane %v2966, 5
    %v2969 = vor.u32 %v2965, %v2968
    %v2970 = vrot.slane %v2969, 4
    %v2972 = vshll.u32 %v2489, 16
    %v2974 = vrot.slane %v2972, 5
    %v2975 = vsel %vm442, %v2970, %v2974
    %v2976 = vshrl.u32 %v2489, 16
    %v2978 = vrot.slane %v2976, 4
    %v2979 = vor.u32 %v2978, %v2974
    %v2980 = vrot.slane %v2979, 4
    %v2982 = vshll.u32 %v2490, 16
    %v2984 = vrot.slane %v2982, 5
    %v2985 = vsel %vm442, %v2980, %v2984
    %v2987 = vshrl.u32 %v2491, 16
    %v2989 = vrot.slane %v2987, 4
    %v2990 = vshll.u32 %v2491, 16
    %v2992 = vrot.slane %v2990, 5
    %v2993 = vor.u32 %v2989, %v2992
    %v2994 = vrot.slane %v2993, 4
    %v2996 = vshll.u32 %v2492, 16
    %v2998 = vrot.slane %v2996, 5
    %v2999 = vsel %vm442, %v2994, %v2998
    %v3000 = vshrl.u32 %v2492, 16
    %v3002 = vrot.slane %v3000, 4
    %v3003 = vor.u32 %v3002, %v2998
    %v3004 = vrot.slane %v3003, 4
    %v3006 = vshll.u32 %v2493, 16
    %v3008 = vrot.slane %v3006, 5
    %v3009 = vsel %vm442, %v3004, %v3008
    %v3011 = vshrl.u32 %v2494, 16
    %v3013 = vrot.slane %v3011, 4
    %v3014 = vshll.u32 %v2494, 16
    %v3016 = vrot.slane %v3014, 5
    %v3017 = vor.u32 %v3013, %v3016
    %v3018 = vrot.slane %v3017, 4
    %v3020 = vshll.u32 %v2495, 16
    %v3022 = vrot.slane %v3020, 5
    %v3023 = vsel %vm442, %v3018, %v3022
    %v3024 = vshrl.u32 %v2495, 16
    %v3026 = vrot.slane %v3024, 4
    %v3027 = vor.u32 %v3026, %v3022
    %v3028 = vrot.slane %v3027, 4
    %v3030 = vshll.u32 %v2496, 16
    %v3032 = vrot.slane %v3030, 5
    %v3033 = vsel %vm442, %v3028, %v3032
    %v3035 = vshrl.u32 %v2497, 16
    %v3037 = vrot.slane %v3035, 4
    %v3038 = vshll.u32 %v2497, 16
    %v3040 = vrot.slane %v3038, 5
    %v3041 = vor.u32 %v3037, %v3040
    %v3042 = vrot.slane %v3041, 4
    %v3044 = vshll.u32 %v2498, 16
    %v3046 = vrot.slane %v3044, 5
    %v3047 = vsel %vm442, %v3042, %v3046
    %v3048 = vshrl.u32 %v2498, 16
    %v3050 = vrot.slane %v3048, 4
    %v3051 = vor.u32 %v3050, %v3046
    %v3052 = vrot.slane %v3051, 4
    %v3054 = vshll.u32 %v2499, 16
    %v3056 = vrot.slane %v3054, 5
    %v3057 = vsel %vm442, %v3052, %v3056
    %v3059 = vshrl.u32 %v2500, 16
    %v3061 = vrot.slane %v3059, 4
    %v3062 = vshll.u32 %v2500, 16
    %v3064 = vrot.slane %v3062, 5
    %v3065 = vor.u32 %v3061, %v3064
    %v3066 = vrot.slane %v3065, 4
    %v3068 = vshll.u32 %v2501, 16
    %v3070 = vrot.slane %v3068, 5
    %v3071 = vsel %vm442, %v3066, %v3070
    %v3072 = vshrl.u32 %v2501, 16
    %v3074 = vrot.slane %v3072, 4
    %v3075 = vor.u32 %v3074, %v3070
    %v3076 = vrot.slane %v3075, 4
    %v3078 = vshll.u32 %v2502, 16
    %v3080 = vrot.slane %v3078, 5
    %v3081 = vsel %vm442, %v3076, %v3080
    %v3083 = vshrl.u32 %v2503, 16
    %v3085 = vrot.slane %v3083, 4
    %v3086 = vshll.u32 %v2503, 16
    %v3088 = vrot.slane %v3086, 5
    %v3089 = vor.u32 %v3085, %v3088
    %v3090 = vrot.slane %v3089, 4
    %v3092 = vshll.u32 %v2504, 16
    %v3094 = vrot.slane %v3092, 5
    %v3095 = vsel %vm442, %v3090, %v3094
    %v3096 = vshrl.u32 %v2504, 16
    %v3098 = vrot.slane %v3096, 4
    %v3099 = vor.u32 %v3098, %v3094
    %v3100 = vrot.slane %v3099, 4
    %v3102 = vshll.u32 %v2505, 16
    %v3104 = vrot.slane %v3102, 5
    %v3105 = vsel %vm442, %v3100, %v3104
    %v3107 = vshrl.u32 %v2506, 16
    %v3109 = vrot.slane %v3107, 4
    %v3110 = vshll.u32 %v2506, 16
    %v3112 = vrot.slane %v3110, 5
    %v3113 = vor.u32 %v3109, %v3112
    %v3114 = vrot.slane %v3113, 4
    %v3116 = vshll.u32 %v2507, 16
    %v3118 = vrot.slane %v3116, 5
    %v3119 = vsel %vm442, %v3114, %v3118
    %v3120 = vshrl.u32 %v2507, 16
    %v3122 = vrot.slane %v3120, 4
    %v3123 = vor.u32 %v3122, %v3118
    %v3124 = vrot.slane %v3123, 4
    %v3126 = vshll.u32 %v2508, 16
    %v3128 = vrot.slane %v3126, 5
    %v3129 = vsel %vm442, %v3124, %v3128
    %v3131 = vshrl.u32 %v2509, 16
    %v3133 = vrot.slane %v3131, 4
    %v3134 = vshll.u32 %v2509, 16
    %v3136 = vrot.slane %v3134, 5
    %v3137 = vor.u32 %v3133, %v3136
    %v3138 = vrot.slane %v3137, 4
    %v3140 = vshll.u32 %v2510, 16
    %v3142 = vrot.slane %v3140, 5
    %v3143 = vsel %vm442, %v3138, %v3142
    %v3144 = vshrl.u32 %v2510, 16
    %v3146 = vrot.slane %v3144, 4
    %v3147 = vor.u32 %v3146, %v3142
    %v3148 = vrot.slane %v3147, 4
    %v3150 = vshll.u32 %v2511, 16
    %v3152 = vrot.slane %v3150, 5
    %v3153 = vsel %vm442, %v3148, %v3152
    %v3155 = vshrl.u32 %v2512, 16
    %v3157 = vrot.slane %v3155, 4
    %v3158 = vshll.u32 %v2512, 16
    %v3160 = vrot.slane %v3158, 5
    %v3161 = vor.u32 %v3157, %v3160
    %v3162 = vrot.slane %v3161, 4
    %v3164 = vshll.u32 %v2513, 16
    %v3166 = vrot.slane %v3164, 5
    %v3167 = vsel %vm442, %v3162, %v3166
    %v3168 = vshrl.u32 %v2513, 16
    %v3170 = vrot.slane %v3168, 4
    %v3171 = vor.u32 %v3170, %v3166
    %v3172 = vrot.slane %v3171, 4
    %v3174 = vshll.u32 %v2514, 16
    %v3176 = vrot.slane %v3174, 5
    %v3177 = vsel %vm442, %v3172, %v3176
    %v3179 = vshrl.u32 %v2515, 16
    %v3181 = vrot.slane %v3179, 4
    %v3182 = vshll.u32 %v2515, 16
    %v3184 = vrot.slane %v3182, 5
    %v3185 = vor.u32 %v3181, %v3184
    %v3186 = vrot.slane %v3185, 4
    %v3188 = vshll.u32 %v2516, 16
    %v3190 = vrot.slane %v3188, 5
    %v3191 = vsel %vm442, %v3186, %v3190
    %v3192 = vshrl.u32 %v2516, 16
    %v3194 = vrot.slane %v3192, 4
    %v3195 = vor.u32 %v3194, %v3190
    %v3196 = vrot.slane %v3195, 4
    %v3198 = vshll.u32 %v2517, 16
    %v3200 = vrot.slane %v3198, 5
    %v3201 = vsel %vm442, %v3196, %v3200
    %v3203 = vshrl.u32 %v2518, 16
    %v3205 = vrot.slane %v3203, 4
    %v3206 = vshll.u32 %v2518, 16
    %v3208 = vrot.slane %v3206, 5
    %v3209 = vor.u32 %v3205, %v3208
    %v3210 = vrot.slane %v3209, 4
    %v3212 = vshll.u32 %v2519, 16
    %v3214 = vrot.slane %v3212, 5
    %v3215 = vsel %vm442, %v3210, %v3214
    %v3216 = vshrl.u32 %v2519, 16
    %v3218 = vrot.slane %v3216, 4
    %v3219 = vor.u32 %v3218, %v3214
    %v3220 = vrot.slane %v3219, 4
    %v3222 = vshll.u32 %v2520, 16
    %v3224 = vrot.slane %v3222, 5
    %v3225 = vsel %vm442, %v3220, %v3224
    %v3227 = vshrl.u32 %v2521, 16
    %v3229 = vrot.slane %v3227, 4
    %v3230 = vshll.u32 %v2521, 16
    %v3232 = vrot.slane %v3230, 5
    %v3233 = vor.u32 %v3229, %v3232
    %v3234 = vrot.slane %v3233, 4
    %v3236 = vshll.u32 %v2522, 16
    %v3238 = vrot.slane %v3236, 5
    %v3239 = vsel %vm442, %v3234, %v3238
    %v3240 = vshrl.u32 %v2522, 16
    %v3242 = vrot.slane %v3240, 4
    %v3243 = vor.u32 %v3242, %v3238
    %v3244 = vrot.slane %v3243, 4
    %v3246 = vshll.u32 %v2523, 16
    %v3248 = vrot.slane %v3246, 5
    %v3249 = vsel %vm442, %v3244, %v3248
    %v3251 = vshrl.u32 %v2524, 16
    %v3253 = vrot.slane %v3251, 4
    %v3254 = vshll.u32 %v2524, 16
    %v3256 = vrot.slane %v3254, 5
    %v3257 = vor.u32 %v3253, %v3256
    %v3258 = vrot.slane %v3257, 4
    %v3260 = vshll.u32 %v2525, 16
    %v3262 = vrot.slane %v3260, 5
    %v3263 = vsel %vm442, %v3258, %v3262
    %v3264 = vshrl.u32 %v2525, 16
    %v3266 = vrot.slane %v3264, 4
    %v3267 = vor.u32 %v3266, %v3262
    %v3268 = vrot.slane %v3267, 4
    %v3270 = vshll.u32 %v2526, 16
    %v3272 = vrot.slane %v3270, 5
    %v3273 = vsel %vm442, %v3268, %v3272
    %v3275 = vshrl.u32 %v2527, 16
    %v3277 = vrot.slane %v3275, 4
    %v3278 = vshll.u32 %v2527, 16
    %v3280 = vrot.slane %v3278, 5
    %v3281 = vor.u32 %v3277, %v3280
    %v3282 = vrot.slane %v3281, 4
    %v3284 = vshll.u32 %v2528, 16
    %v3286 = vrot.slane %v3284, 5
    %v3287 = vsel %vm442, %v3282, %v3286
    %v3288 = vshrl.u32 %v2528, 16
    %v3290 = vrot.slane %v3288, 4
    %v3291 = vor.u32 %v3290, %v3286
    %v3292 = vrot.slane %v3291, 4
    %v3294 = vshll.u32 %v2529, 16
    %v3296 = vrot.slane %v3294, 5
    %v3297 = vsel %vm442, %v3292, %v3296
    %v3298 = vunpack.c.l.b16 %v2543
    %v3299 = vunpack.c.l.b16 %v2553
    %v3300 = vunpack.c.l.b16 %v2567
    %v3301 = vunpack.c.l.b16 %v2577
    %v3302 = vunpack.c.l.b16 %v2591
    %v3303 = vunpack.c.l.b16 %v2601
    %v3304 = vunpack.c.l.b16 %v2615
    %v3305 = vunpack.c.l.b16 %v2625
    %v3306 = vunpack.c.l.b16 %v2639
    %v3307 = vunpack.c.l.b16 %v2649
    %v3308 = vunpack.c.l.b16 %v2663
    %v3309 = vunpack.c.l.b16 %v2673
    %v3310 = vunpack.c.l.b16 %v2687
    %v3311 = vunpack.c.l.b16 %v2697
    %v3312 = vunpack.c.l.b16 %v2711
    %v3313 = vunpack.c.l.b16 %v2721
    %v3314 = vunpack.c.l.b16 %v2735
    %v3315 = vunpack.c.l.b16 %v2745
    %v3316 = vunpack.c.l.b16 %v2759
    %v3317 = vunpack.c.l.b16 %v2769
    %v3318 = vunpack.c.l.b16 %v2783
    %v3319 = vunpack.c.l.b16 %v2793
    %v3320 = vunpack.c.l.b16 %v2807
    %v3321 = vunpack.c.l.b16 %v2817
    %v3322 = vunpack.c.l.b16 %v2831
    %v3323 = vunpack.c.l.b16 %v2841
    %v3324 = vunpack.c.l.b16 %v2855
    %v3325 = vunpack.c.l.b16 %v2865
    %v3326 = vunpack.c.l.b16 %v2879
    %v3327 = vunpack.c.l.b16 %v2889
    %v3328 = vunpack.c.l.b16 %v2903
    %v3329 = vunpack.c.l.b16 %v2913
    %v3330 = vunpack.c.l.b16 %v2927
    %v3331 = vunpack.c.l.b16 %v2937
    %v3332 = vunpack.c.l.b16 %v2951
    %v3333 = vunpack.c.l.b16 %v2961
    %v3334 = vunpack.c.l.b16 %v2975
    %v3335 = vunpack.c.l.b16 %v2985
    %v3336 = vunpack.c.l.b16 %v2999
    %v3337 = vunpack.c.l.b16 %v3009
    %v3338 = vunpack.c.l.b16 %v3023
    %v3339 = vunpack.c.l.b16 %v3033
    %v3340 = vunpack.c.l.b16 %v3047
    %v3341 = vunpack.c.l.b16 %v3057
    %v3342 = vunpack.c.l.b16 %v3071
    %v3343 = vunpack.c.l.b16 %v3081
    %v3344 = vunpack.c.l.b16 %v3095
    %v3345 = vunpack.c.l.b16 %v3105
    %v3346 = vunpack.c.l.b16 %v3119
    %v3347 = vunpack.c.l.b16 %v3129
    %v3348 = vunpack.c.l.b16 %v3143
    %v3349 = vunpack.c.l.b16 %v3153
    %v3350 = vunpack.c.l.b16 %v3167
    %v3351 = vunpack.c.l.b16 %v3177
    %v3352 = vunpack.c.l.b16 %v3191
    %v3353 = vunpack.c.l.b16 %v3201
    %v3354 = vunpack.c.l.b16 %v3215
    %v3355 = vunpack.c.l.b16 %v3225
    %v3356 = vunpack.c.l.b16 %v3239
    %v3357 = vunpack.c.l.b16 %v3249
    %v3358 = vunpack.c.l.b16 %v3263
    %v3359 = vunpack.c.l.b16 %v3273
    %v3360 = vunpack.c.l.b16 %v3287
    %v3361 = vunpack.c.l.b16 %v3297
    %v3362 = vpack.c.b16 %v3299, %v3298
    %v3363 = vpack.c.b16 %v3301, %v3300
    %v3364 = vpack.c.b16 %v3303, %v3302
    %v3365 = vpack.c.b16 %v3305, %v3304
    %v3366 = vpack.c.b16 %v3307, %v3306
    %v3367 = vpack.c.b16 %v3309, %v3308
    %v3368 = vpack.c.b16 %v3311, %v3310
    %v3369 = vpack.c.b16 %v3313, %v3312
    %v3370 = vpack.c.b16 %v3315, %v3314
    %v3371 = vpack.c.b16 %v3317, %v3316
    %v3372 = vpack.c.b16 %v3319, %v3318
    %v3373 = vpack.c.b16 %v3321, %v3320
    %v3374 = vpack.c.b16 %v3323, %v3322
    %v3375 = vpack.c.b16 %v3325, %v3324
    %v3376 = vpack.c.b16 %v3327, %v3326
    %v3377 = vpack.c.b16 %v3329, %v3328
    %v3378 = vpack.c.b16 %v3331, %v3330
    %v3379 = vpack.c.b16 %v3333, %v3332
    %v3380 = vpack.c.b16 %v3335, %v3334
    %v3381 = vpack.c.b16 %v3337, %v3336
    %v3382 = vpack.c.b16 %v3339, %v3338
    %v3383 = vpack.c.b16 %v3341, %v3340
    %v3384 = vpack.c.b16 %v3343, %v3342
    %v3385 = vpack.c.b16 %v3345, %v3344
    %v3386 = vpack.c.b16 %v3347, %v3346
    %v3387 = vpack.c.b16 %v3349, %v3348
    %v3388 = vpack.c.b16 %v3351, %v3350
    %v3389 = vpack.c.b16 %v3353, %v3352
    %v3390 = vpack.c.b16 %v3355, %v3354
    %v3391 = vpack.c.b16 %v3357, %v3356
    %v3392 = vpack.c.b16 %v3359, %v3358
    %v3393 = vpack.c.b16 %v3361, %v3360
    %3394 = vrot.lane.b32.xlu0 %v3362, 16
    %v3395 = vpop.permute.xlu0 %3394
    %3396 = vrot.lane.b32.xlu0 %v3363, 16
    %v3397 = vpop.permute.xlu0 %3396
    %3398 = vrot.lane.b32.xlu0 %v3364, 16
    %v3399 = vpop.permute.xlu0 %3398
    %3400 = vrot.lane.b32.xlu0 %v3365, 16
    %v3401 = vpop.permute.xlu0 %3400
    %3402 = vrot.lane.b32.xlu0 %v3366, 16
    %v3403 = vpop.permute.xlu0 %3402
    %3404 = vrot.lane.b32.xlu0 %v3367, 16
    %v3405 = vpop.permute.xlu0 %3404
    %3406 = vrot.lane.b32.xlu0 %v3368, 16
    %v3407 = vpop.permute.xlu0 %3406
    %3408 = vrot.lane.b32.xlu0 %v3369, 16
    %v3409 = vpop.permute.xlu0 %3408
    %3410 = vrot.lane.b32.xlu0 %v3370, 16
    %v3411 = vpop.permute.xlu0 %3410
    %3412 = vrot.lane.b32.xlu0 %v3371, 16
    %v3413 = vpop.permute.xlu0 %3412
    %3414 = vrot.lane.b32.xlu0 %v3372, 16
    %v3415 = vpop.permute.xlu0 %3414
    %3416 = vrot.lane.b32.xlu0 %v3373, 16
    %v3417 = vpop.permute.xlu0 %3416
    %3418 = vrot.lane.b32.xlu0 %v3374, 16
    %v3419 = vpop.permute.xlu0 %3418
    %3420 = vrot.lane.b32.xlu0 %v3375, 16
    %v3421 = vpop.permute.xlu0 %3420
    %3422 = vrot.lane.b32.xlu0 %v3376, 16
    %v3423 = vpop.permute.xlu0 %3422
    %3424 = vrot.lane.b32.xlu0 %v3377, 16
    %v3425 = vpop.permute.xlu0 %3424
    %3426 = vrot.lane.b32.xlu0 %v3378, 16
    %v3427 = vpop.permute.xlu0 %3426
    %3428 = vrot.lane.b32.xlu0 %v3379, 16
    %v3429 = vpop.permute.xlu0 %3428
    %3430 = vrot.lane.b32.xlu0 %v3380, 16
    %v3431 = vpop.permute.xlu0 %3430
    %3432 = vrot.lane.b32.xlu0 %v3381, 16
    %v3433 = vpop.permute.xlu0 %3432
    %3434 = vrot.lane.b32.xlu0 %v3382, 16
    %v3435 = vpop.permute.xlu0 %3434
    %3436 = vrot.lane.b32.xlu0 %v3383, 16
    %v3437 = vpop.permute.xlu0 %3436
    %3438 = vrot.lane.b32.xlu0 %v3384, 16
    %v3439 = vpop.permute.xlu0 %3438
    %3440 = vrot.lane.b32.xlu0 %v3385, 16
    %v3441 = vpop.permute.xlu0 %3440
    %3442 = vrot.lane.b32.xlu0 %v3386, 16
    %v3443 = vpop.permute.xlu0 %3442
    %3444 = vrot.lane.b32.xlu0 %v3387, 16
    %v3445 = vpop.permute.xlu0 %3444
    %3446 = vrot.lane.b32.xlu0 %v3388, 16
    %v3447 = vpop.permute.xlu0 %3446
    %3448 = vrot.lane.b32.xlu0 %v3389, 16
    %v3449 = vpop.permute.xlu0 %3448
    %3450 = vrot.lane.b32.xlu0 %v3390, 16
    %v3451 = vpop.permute.xlu0 %3450
    %3452 = vrot.lane.b32.xlu0 %v3391, 16
    %v3453 = vpop.permute.xlu0 %3452
    %3454 = vrot.lane.b32.xlu0 %v3392, 16
    %v3455 = vpop.permute.xlu0 %3454
    %3456 = vrot.lane.b32.xlu0 %v3393, 16
    %v3457 = vpop.permute.xlu0 %3456
    %vm3490 = vcmask 162944
    %3491 = vst.msk [vmem:[#allocation2] sm:$0xff] %vm3490, %v3395
    %3492 = vst.msk [vmem:[#allocation2 + $0x8] sm:$0xff] %vm3490, %v3397
    %3493 = vst.msk [vmem:[#allocation2 + $0x10] sm:$0xff] %vm3490, %v3399
    %3494 = vst.msk [vmem:[#allocation2 + $0x18] sm:$0xff] %vm3490, %v3401
    %3495 = vst.msk [vmem:[#allocation2 + $0x20] sm:$0xff] %vm3490, %v3403
    %3496 = vst.msk [vmem:[#allocation2 + $0x28] sm:$0xff] %vm3490, %v3405
    %3497 = vst.msk [vmem:[#allocation2 + $0x30] sm:$0xff] %vm3490, %v3407
    %3498 = vst.msk [vmem:[#allocation2 + $0x38] sm:$0xff] %vm3490, %v3409
    %3499 = vst.msk [vmem:[#allocation2 + $0x40] sm:$0xff] %vm3490, %v3411
    %3500 = vst.msk [vmem:[#allocation2 + $0x48] sm:$0xff] %vm3490, %v3413
    %3501 = vst.msk [vmem:[#allocation2 + $0x50] sm:$0xff] %vm3490, %v3415
    %3502 = vst.msk [vmem:[#allocation2 + $0x58] sm:$0xff] %vm3490, %v3417
    %3503 = vst.msk [vmem:[#allocation2 + $0x60] sm:$0xff] %vm3490, %v3419
    %3504 = vst.msk [vmem:[#allocation2 + $0x68] sm:$0xff] %vm3490, %v3421
    %3505 = vst.msk [vmem:[#allocation2 + $0x70] sm:$0xff] %vm3490, %v3423
    %3506 = vst.msk [vmem:[#allocation2 + $0x78] sm:$0xff] %vm3490, %v3425
    %3507 = vst.msk [vmem:[#allocation2 + $0x80] sm:$0xff] %vm3490, %v3427
    %3508 = vst.msk [vmem:[#allocation2 + $0x88] sm:$0xff] %vm3490, %v3429
    %3509 = vst.msk [vmem:[#allocation2 + $0x90] sm:$0xff] %vm3490, %v3431
    %3510 = vst.msk [vmem:[#allocation2 + $0x98] sm:$0xff] %vm3490, %v3433
    %3511 = vst.msk [vmem:[#allocation2 + $0xa0] sm:$0xff] %vm3490, %v3435
    %3512 = vst.msk [vmem:[#allocation2 + $0xa8] sm:$0xff] %vm3490, %v3437
    %3513 = vst.msk [vmem:[#allocation2 + $0xb0] sm:$0xff] %vm3490, %v3439
    %3514 = vst.msk [vmem:[#allocation2 + $0xb8] sm:$0xff] %vm3490, %v3441
    %3515 = vst.msk [vmem:[#allocation2 + $0xc0] sm:$0xff] %vm3490, %v3443
    %3516 = vst.msk [vmem:[#allocation2 + $0xc8] sm:$0xff] %vm3490, %v3445
    %3517 = vst.msk [vmem:[#allocation2 + $0xd0] sm:$0xff] %vm3490, %v3447
    %3518 = vst.msk [vmem:[#allocation2 + $0xd8] sm:$0xff] %vm3490, %v3449
    %3519 = vst.msk [vmem:[#allocation2 + $0xe0] sm:$0xff] %vm3490, %v3451
    %3520 = vst.msk [vmem:[#allocation2 + $0xe8] sm:$0xff] %vm3490, %v3453
    %3521 = vst.msk [vmem:[#allocation2 + $0xf0] sm:$0xff] %vm3490, %v3455
    %3522 = vst.msk [vmem:[#allocation2 + $0xf8] sm:$0xff] %vm3490, %v3457
    %v3523 = vld [vmem:[%s2080] sm:$0xe]
    %v3524 = vld [vmem:[%s2080 + $0x4] sm:$0xf]
    %v3525 = vld [vmem:[%s2080 + $0x8] sm:$0x1]
    %v3526 = vld [vmem:[%s2080 + $0xc] sm:$0xe]
    %v3527 = vld [vmem:[%s2080 + $0x10] sm:$0xf]
    %v3528 = vld [vmem:[%s2080 + $0x14] sm:$0x1]
    %v3529 = vld [vmem:[%s2080 + $0x18] sm:$0xe]
    %v3530 = vld [vmem:[%s2080 + $0x1c] sm:$0xf]
    %v3531 = vld [vmem:[%s2080 + $0x20] sm:$0x1]
    %v3532 = vld [vmem:[%s2080 + $0x24] sm:$0xe]
    %v3533 = vld [vmem:[%s2080 + $0x28] sm:$0xf]
    %v3534 = vld [vmem:[%s2080 + $0x2c] sm:$0x1]
    %v3535 = vld [vmem:[%s2080 + $0x30] sm:$0xe]
    %v3536 = vld [vmem:[%s2080 + $0x34] sm:$0xf]
    %v3537 = vld [vmem:[%s2080 + $0x38] sm:$0x1]
    %v3538 = vld [vmem:[%s2080 + $0x3c] sm:$0xe]
    %v3539 = vld [vmem:[%s2080 + $0x40] sm:$0xf]
    %v3540 = vld [vmem:[%s2080 + $0x44] sm:$0x1]
    %v3541 = vld [vmem:[%s2080 + $0x48] sm:$0xe]
    %v3542 = vld [vmem:[%s2080 + $0x4c] sm:$0xf]
    %v3543 = vld [vmem:[%s2080 + $0x50] sm:$0x1]
    %v3544 = vld [vmem:[%s2080 + $0x54] sm:$0xe]
    %v3545 = vld [vmem:[%s2080 + $0x58] sm:$0xf]
    %v3546 = vld [vmem:[%s2080 + $0x5c] sm:$0x1]
    %v3547 = vld [vmem:[%s2080 + $0x60] sm:$0xe]
    %v3548 = vld [vmem:[%s2080 + $0x64] sm:$0xf]
    %v3549 = vld [vmem:[%s2080 + $0x68] sm:$0x1]
    %v3550 = vld [vmem:[%s2080 + $0x6c] sm:$0xe]
    %v3551 = vld [vmem:[%s2080 + $0x70] sm:$0xf]
    %v3552 = vld [vmem:[%s2080 + $0x74] sm:$0x1]
    %v3553 = vld [vmem:[%s2080 + $0x78] sm:$0xe]
    %v3554 = vld [vmem:[%s2080 + $0x7c] sm:$0xf]
    %v3555 = vld [vmem:[%s2080 + $0x80] sm:$0x1]
    %v3556 = vld [vmem:[%s2080 + $0x84] sm:$0xe]
    %v3557 = vld [vmem:[%s2080 + $0x88] sm:$0xf]
    %v3558 = vld [vmem:[%s2080 + $0x8c] sm:$0x1]
    %v3559 = vld [vmem:[%s2080 + $0x90] sm:$0xe]
    %v3560 = vld [vmem:[%s2080 + $0x94] sm:$0xf]
    %v3561 = vld [vmem:[%s2080 + $0x98] sm:$0x1]
    %v3562 = vld [vmem:[%s2080 + $0x9c] sm:$0xe]
    %v3563 = vld [vmem:[%s2080 + $0xa0] sm:$0xf]
    %v3564 = vld [vmem:[%s2080 + $0xa4] sm:$0x1]
    %v3565 = vld [vmem:[%s2080 + $0xa8] sm:$0xe]
    %v3566 = vld [vmem:[%s2080 + $0xac] sm:$0xf]
    %v3567 = vld [vmem:[%s2080 + $0xb0] sm:$0x1]
    %v3568 = vld [vmem:[%s2080 + $0xb4] sm:$0xe]
    %v3569 = vld [vmem:[%s2080 + $0xb8] sm:$0xf]
    %v3570 = vld [vmem:[%s2080 + $0xbc] sm:$0x1]
    %v3571 = vld [vmem:[%s2080 + $0xd8] sm:$0xe]
    %v3572 = vld [vmem:[%s2080 + $0xdc] sm:$0xf]
    %v3573 = vld [vmem:[%s2080 + $0xe0] sm:$0x1]
    %v3574 = vld [vmem:[%s2080 + $0xe4] sm:$0xe]
    %v3575 = vld [vmem:[%s2080 + $0xe8] sm:$0xf]
    %v3576 = vld [vmem:[%s2080 + $0xec] sm:$0x1]
    %v3577 = vld [vmem:[%s2080 + $0xf0] sm:$0xe]
    %v3578 = vld [vmem:[%s2080 + $0xf4] sm:$0xf]
    %v3579 = vld [vmem:[%s2080 + $0xf8] sm:$0x1]
    %v3580 = vld [vmem:[%s2080 + $0xfc] sm:$0xe]
    %v3581 = vld [vmem:[%s2080 + $0x100] sm:$0xf]
    %v3582 = vld [vmem:[%s2080 + $0x104] sm:$0x1]
    %v3583 = vld [vmem:[%s2080 + $0x108] sm:$0xe]
    %v3584 = vld [vmem:[%s2080 + $0x10c] sm:$0xf]
    %v3585 = vld [vmem:[%s2080 + $0x110] sm:$0x1]
    %v3586 = vld [vmem:[%s2080 + $0x114] sm:$0xe]
    %v3587 = vld [vmem:[%s2080 + $0x118] sm:$0xf]
    %v3588 = vld [vmem:[%s2080 + $0x11c] sm:$0x1]
    %v3589 = vld [vmem:[%s2080 + $0x120] sm:$0xe]
    %v3590 = vld [vmem:[%s2080 + $0x124] sm:$0xf]
    %v3591 = vld [vmem:[%s2080 + $0x128] sm:$0x1]
    %v3592 = vld [vmem:[%s2080 + $0x12c] sm:$0xe]
    %v3593 = vld [vmem:[%s2080 + $0x130] sm:$0xf]
    %v3594 = vld [vmem:[%s2080 + $0x134] sm:$0x1]
    %v3595 = vld [vmem:[%s2080 + $0x138] sm:$0xe]
    %v3596 = vld [vmem:[%s2080 + $0x13c] sm:$0xf]
    %v3597 = vld [vmem:[%s2080 + $0x140] sm:$0x1]
    %v3598 = vld [vmem:[%s2080 + $0x144] sm:$0xe]
    %v3599 = vld [vmem:[%s2080 + $0x148] sm:$0xf]
    %v3600 = vld [vmem:[%s2080 + $0x14c] sm:$0x1]
    %v3601 = vld [vmem:[%s2080 + $0x150] sm:$0xe]
    %v3602 = vld [vmem:[%s2080 + $0x154] sm:$0xf]
    %v3603 = vld [vmem:[%s2080 + $0x158] sm:$0x1]
    %v3604 = vld [vmem:[%s2080 + $0x15c] sm:$0xe]
    %v3605 = vld [vmem:[%s2080 + $0x160] sm:$0xf]
    %v3606 = vld [vmem:[%s2080 + $0x164] sm:$0x1]
    %v3607 = vld [vmem:[%s2080 + $0x168] sm:$0xe]
    %v3608 = vld [vmem:[%s2080 + $0x16c] sm:$0xf]
    %v3609 = vld [vmem:[%s2080 + $0x170] sm:$0x1]
    %v3610 = vld [vmem:[%s2080 + $0x174] sm:$0xe]
    %v3611 = vld [vmem:[%s2080 + $0x178] sm:$0xf]
    %v3612 = vld [vmem:[%s2080 + $0x17c] sm:$0x1]
    %v3613 = vld [vmem:[%s2080 + $0x180] sm:$0xe]
    %v3614 = vld [vmem:[%s2080 + $0x184] sm:$0xf]
    %v3615 = vld [vmem:[%s2080 + $0x188] sm:$0x1]
    %v3616 = vld [vmem:[%s2080 + $0x18c] sm:$0xe]
    %v3617 = vld [vmem:[%s2080 + $0x190] sm:$0xf]
    %v3618 = vld [vmem:[%s2080 + $0x194] sm:$0x1]
    %v3715 = vrot.slane %v3523, 5
    %v3716 = vrot.slane %v3715, 4
    %v3717 = vrot.slane %v3524, 5
    %v3718 = vsel %vm1630, %v3716, %v3717
    %v3719 = vrot.slane %v3717, 4
    %v3720 = vrot.slane %v3525, 5
    %v3721 = vsel %vm1630, %v3719, %v3720
    %v3722 = vrot.slane %v3526, 5
    %v3723 = vrot.slane %v3722, 4
    %v3724 = vrot.slane %v3527, 5
    %v3725 = vsel %vm1630, %v3723, %v3724
    %v3726 = vrot.slane %v3724, 4
    %v3727 = vrot.slane %v3528, 5
    %v3728 = vsel %vm1630, %v3726, %v3727
    %v3729 = vrot.slane %v3529, 5
    %v3730 = vrot.slane %v3729, 4
    %v3731 = vrot.slane %v3530, 5
    %v3732 = vsel %vm1630, %v3730, %v3731
    %v3733 = vrot.slane %v3731, 4
    %v3734 = vrot.slane %v3531, 5
    %v3735 = vsel %vm1630, %v3733, %v3734
    %v3736 = vrot.slane %v3532, 5
    %v3737 = vrot.slane %v3736, 4
    %v3738 = vrot.slane %v3533, 5
    %v3739 = vsel %vm1630, %v3737, %v3738
    %v3740 = vrot.slane %v3738, 4
    %v3741 = vrot.slane %v3534, 5
    %v3742 = vsel %vm1630, %v3740, %v3741
    %v3743 = vrot.slane %v3535, 5
    %v3744 = vrot.slane %v3743, 4
    %v3745 = vrot.slane %v3536, 5
    %v3746 = vsel %vm1630, %v3744, %v3745
    %v3747 = vrot.slane %v3745, 4
    %v3748 = vrot.slane %v3537, 5
    %v3749 = vsel %vm1630, %v3747, %v3748
    %v3750 = vrot.slane %v3538, 5
    %v3751 = vrot.slane %v3750, 4
    %v3752 = vrot.slane %v3539, 5
    %v3753 = vsel %vm1630, %v3751, %v3752
    %v3754 = vrot.slane %v3752, 4
    %v3755 = vrot.slane %v3540, 5
    %v3756 = vsel %vm1630, %v3754, %v3755
    %v3757 = vrot.slane %v3541, 5
    %v3758 = vrot.slane %v3757, 4
    %v3759 = vrot.slane %v3542, 5
    %v3760 = vsel %vm1630, %v3758, %v3759
    %v3761 = vrot.slane %v3759, 4
    %v3762 = vrot.slane %v3543, 5
    %v3763 = vsel %vm1630, %v3761, %v3762
    %v3764 = vrot.slane %v3544, 5
    %v3765 = vrot.slane %v3764, 4
    %v3766 = vrot.slane %v3545, 5
    %v3767 = vsel %vm1630, %v3765, %v3766
    %v3768 = vrot.slane %v3766, 4
    %v3769 = vrot.slane %v3546, 5
    %v3770 = vsel %vm1630, %v3768, %v3769
    %v3771 = vrot.slane %v3547, 5
    %v3772 = vrot.slane %v3771, 4
    %v3773 = vrot.slane %v3548, 5
    %v3774 = vsel %vm1630, %v3772, %v3773
    %v3775 = vrot.slane %v3773, 4
    %v3776 = vrot.slane %v3549, 5
    %v3777 = vsel %vm1630, %v3775, %v3776
    %v3778 = vrot.slane %v3550, 5
    %v3779 = vrot.slane %v3778, 4
    %v3780 = vrot.slane %v3551, 5
    %v3781 = vsel %vm1630, %v3779, %v3780
    %v3782 = vrot.slane %v3780, 4
    %v3783 = vrot.slane %v3552, 5
    %v3784 = vsel %vm1630, %v3782, %v3783
    %v3785 = vrot.slane %v3553, 5
    %v3786 = vrot.slane %v3785, 4
    %v3787 = vrot.slane %v3554, 5
    %v3788 = vsel %vm1630, %v3786, %v3787
    %v3789 = vrot.slane %v3787, 4
    %v3790 = vrot.slane %v3555, 5
    %v3791 = vsel %vm1630, %v3789, %v3790
    %v3792 = vrot.slane %v3556, 5
    %v3793 = vrot.slane %v3792, 4
    %v3794 = vrot.slane %v3557, 5
    %v3795 = vsel %vm1630, %v3793, %v3794
    %v3796 = vrot.slane %v3794, 4
    %v3797 = vrot.slane %v3558, 5
    %v3798 = vsel %vm1630, %v3796, %v3797
    %v3799 = vrot.slane %v3559, 5
    %v3800 = vrot.slane %v3799, 4
    %v3801 = vrot.slane %v3560, 5
    %v3802 = vsel %vm1630, %v3800, %v3801
    %v3803 = vrot.slane %v3801, 4
    %v3804 = vrot.slane %v3561, 5
    %v3805 = vsel %vm1630, %v3803, %v3804
    %v3806 = vrot.slane %v3562, 5
    %v3807 = vrot.slane %v3806, 4
    %v3808 = vrot.slane %v3563, 5
    %v3809 = vsel %vm1630, %v3807, %v3808
    %v3810 = vrot.slane %v3808, 4
    %v3811 = vrot.slane %v3564, 5
    %v3812 = vsel %vm1630, %v3810, %v3811
    %v3813 = vrot.slane %v3565, 5
    %v3814 = vrot.slane %v3813, 4
    %v3815 = vrot.slane %v3566, 5
    %v3816 = vsel %vm1630, %v3814, %v3815
    %v3817 = vrot.slane %v3815, 4
    %v3818 = vrot.slane %v3567, 5
    %v3819 = vsel %vm1630, %v3817, %v3818
    %v3820 = vrot.slane %v3568, 5
    %v3821 = vrot.slane %v3820, 4
    %v3822 = vrot.slane %v3569, 5
    %v3823 = vsel %vm1630, %v3821, %v3822
    %v3824 = vrot.slane %v3822, 4
    %v3825 = vrot.slane %v3570, 5
    %v3826 = vsel %vm1630, %v3824, %v3825
    %v3827 = vrot.slane %v3571, 5
    %v3828 = vrot.slane %v3827, 4
    %v3829 = vrot.slane %v3572, 5
    %v3830 = vsel %vm1630, %v3828, %v3829
    %v3831 = vrot.slane %v3829, 4
    %v3832 = vrot.slane %v3573, 5
    %v3833 = vsel %vm1630, %v3831, %v3832
    %v3834 = vrot.slane %v3574, 5
    %v3835 = vrot.slane %v3834, 4
    %v3836 = vrot.slane %v3575, 5
    %v3837 = vsel %vm1630, %v3835, %v3836
    %v3838 = vrot.slane %v3836, 4
    %v3839 = vrot.slane %v3576, 5
    %v3840 = vsel %vm1630, %v3838, %v3839
    %v3841 = vrot.slane %v3577, 5
    %v3842 = vrot.slane %v3841, 4
    %v3843 = vrot.slane %v3578, 5
    %v3844 = vsel %vm1630, %v3842, %v3843
    %v3845 = vrot.slane %v3843, 4
    %v3846 = vrot.slane %v3579, 5
    %v3847 = vsel %vm1630, %v3845, %v3846
    %v3848 = vrot.slane %v3580, 5
    %v3849 = vrot.slane %v3848, 4
    %v3850 = vrot.slane %v3581, 5
    %v3851 = vsel %vm1630, %v3849, %v3850
    %v3852 = vrot.slane %v3850, 4
    %v3853 = vrot.slane %v3582, 5
    %v3854 = vsel %vm1630, %v3852, %v3853
    %v3855 = vrot.slane %v3583, 5
    %v3856 = vrot.slane %v3855, 4
    %v3857 = vrot.slane %v3584, 5
    %v3858 = vsel %vm1630, %v3856, %v3857
    %v3859 = vrot.slane %v3857, 4
    %v3860 = vrot.slane %v3585, 5
    %v3861 = vsel %vm1630, %v3859, %v3860
    %v3862 = vrot.slane %v3586, 5
    %v3863 = vrot.slane %v3862, 4
    %v3864 = vrot.slane %v3587, 5
    %v3865 = vsel %vm1630, %v3863, %v3864
    %v3866 = vrot.slane %v3864, 4
    %v3867 = vrot.slane %v3588, 5
    %v3868 = vsel %vm1630, %v3866, %v3867
    %v3869 = vrot.slane %v3589, 5
    %v3870 = vrot.slane %v3869, 4
    %v3871 = vrot.slane %v3590, 5
    %v3872 = vsel %vm1630, %v3870, %v3871
    %v3873 = vrot.slane %v3871, 4
    %v3874 = vrot.slane %v3591, 5
    %v3875 = vsel %vm1630, %v3873, %v3874
    %v3876 = vrot.slane %v3592, 5
    %v3877 = vrot.slane %v3876, 4
    %v3878 = vrot.slane %v3593, 5
    %v3879 = vsel %vm1630, %v3877, %v3878
    %v3880 = vrot.slane %v3878, 4
    %v3881 = vrot.slane %v3594, 5
    %v3882 = vsel %vm1630, %v3880, %v3881
    %v3883 = vrot.slane %v3595, 5
    %v3884 = vrot.slane %v3883, 4
    %v3885 = vrot.slane %v3596, 5
    %v3886 = vsel %vm1630, %v3884, %v3885
    %v3887 = vrot.slane %v3885, 4
    %v3888 = vrot.slane %v3597, 5
    %v3889 = vsel %vm1630, %v3887, %v3888
    %v3890 = vrot.slane %v3598, 5
    %v3891 = vrot.slane %v3890, 4
    %v3892 = vrot.slane %v3599, 5
    %v3893 = vsel %vm1630, %v3891, %v3892
    %v3894 = vrot.slane %v3892, 4
    %v3895 = vrot.slane %v3600, 5
    %v3896 = vsel %vm1630, %v3894, %v3895
    %v3897 = vrot.slane %v3601, 5
    %v3898 = vrot.slane %v3897, 4
    %v3899 = vrot.slane %v3602, 5
    %v3900 = vsel %vm1630, %v3898, %v3899
    %v3901 = vrot.slane %v3899, 4
    %v3902 = vrot.slane %v3603, 5
    %v3903 = vsel %vm1630, %v3901, %v3902
    %v3904 = vrot.slane %v3604, 5
    %v3905 = vrot.slane %v3904, 4
    %v3906 = vrot.slane %v3605, 5
    %v3907 = vsel %vm1630, %v3905, %v3906
    %v3908 = vrot.slane %v3906, 4
    %v3909 = vrot.slane %v3606, 5
    %v3910 = vsel %vm1630, %v3908, %v3909
    %v3911 = vrot.slane %v3607, 5
    %v3912 = vrot.slane %v3911, 4
    %v3913 = vrot.slane %v3608, 5
    %v3914 = vsel %vm1630, %v3912, %v3913
    %v3915 = vrot.slane %v3913, 4
    %v3916 = vrot.slane %v3609, 5
    %v3917 = vsel %vm1630, %v3915, %v3916
    %v3918 = vrot.slane %v3610, 5
    %v3919 = vrot.slane %v3918, 4
    %v3920 = vrot.slane %v3611, 5
    %v3921 = vsel %vm1630, %v3919, %v3920
    %v3922 = vrot.slane %v3920, 4
    %v3923 = vrot.slane %v3612, 5
    %v3924 = vsel %vm1630, %v3922, %v3923
    %v3925 = vrot.slane %v3613, 5
    %v3926 = vrot.slane %v3925, 4
    %v3927 = vrot.slane %v3614, 5
    %v3928 = vsel %vm1630, %v3926, %v3927
    %v3929 = vrot.slane %v3927, 4
    %v3930 = vrot.slane %v3615, 5
    %v3931 = vsel %vm1630, %v3929, %v3930
    %v3932 = vrot.slane %v3616, 5
    %v3933 = vrot.slane %v3932, 4
    %v3934 = vrot.slane %v3617, 5
    %v3935 = vsel %vm1630, %v3933, %v3934
    %v3936 = vrot.slane %v3934, 4
    %v3937 = vrot.slane %v3618, 5
    %v3938 = vsel %vm1630, %v3936, %v3937
    %v3939 = vunpack.c.l.b16 %v3718
    %v3940 = vunpack.c.l.b16 %v3721
    %v3941 = vunpack.c.l.b16 %v3725
    %v3942 = vunpack.c.l.b16 %v3728
    %v3943 = vunpack.c.l.b16 %v3732
    %v3944 = vunpack.c.l.b16 %v3735
    %v3945 = vunpack.c.l.b16 %v3739
    %v3946 = vunpack.c.l.b16 %v3742
    %v3947 = vunpack.c.l.b16 %v3746
    %v3948 = vunpack.c.l.b16 %v3749
    %v3949 = vunpack.c.l.b16 %v3753
    %v3950 = vunpack.c.l.b16 %v3756
    %v3951 = vunpack.c.l.b16 %v3760
    %v3952 = vunpack.c.l.b16 %v3763
    %v3953 = vunpack.c.l.b16 %v3767
    %v3954 = vunpack.c.l.b16 %v3770
    %v3955 = vunpack.c.l.b16 %v3774
    %v3956 = vunpack.c.l.b16 %v3777
    %v3957 = vunpack.c.l.b16 %v3781
    %v3958 = vunpack.c.l.b16 %v3784
    %v3959 = vunpack.c.l.b16 %v3788
    %v3960 = vunpack.c.l.b16 %v3791
    %v3961 = vunpack.c.l.b16 %v3795
    %v3962 = vunpack.c.l.b16 %v3798
    %v3963 = vunpack.c.l.b16 %v3802
    %v3964 = vunpack.c.l.b16 %v3805
    %v3965 = vunpack.c.l.b16 %v3809
    %v3966 = vunpack.c.l.b16 %v3812
    %v3967 = vunpack.c.l.b16 %v3816
    %v3968 = vunpack.c.l.b16 %v3819
    %v3969 = vunpack.c.l.b16 %v3823
    %v3970 = vunpack.c.l.b16 %v3826
    %v3971 = vunpack.c.l.b16 %v3830
    %v3972 = vunpack.c.l.b16 %v3833
    %v3973 = vunpack.c.l.b16 %v3837
    %v3974 = vunpack.c.l.b16 %v3840
    %v3975 = vunpack.c.l.b16 %v3844
    %v3976 = vunpack.c.l.b16 %v3847
    %v3977 = vunpack.c.l.b16 %v3851
    %v3978 = vunpack.c.l.b16 %v3854
    %v3979 = vunpack.c.l.b16 %v3858
    %v3980 = vunpack.c.l.b16 %v3861
    %v3981 = vunpack.c.l.b16 %v3865
    %v3982 = vunpack.c.l.b16 %v3868
    %v3983 = vunpack.c.l.b16 %v3872
    %v3984 = vunpack.c.l.b16 %v3875
    %v3985 = vunpack.c.l.b16 %v3879
    %v3986 = vunpack.c.l.b16 %v3882
    %v3987 = vunpack.c.l.b16 %v3886
    %v3988 = vunpack.c.l.b16 %v3889
    %v3989 = vunpack.c.l.b16 %v3893
    %v3990 = vunpack.c.l.b16 %v3896
    %v3991 = vunpack.c.l.b16 %v3900
    %v3992 = vunpack.c.l.b16 %v3903
    %v3993 = vunpack.c.l.b16 %v3907
    %v3994 = vunpack.c.l.b16 %v3910
    %v3995 = vunpack.c.l.b16 %v3914
    %v3996 = vunpack.c.l.b16 %v3917
    %v3997 = vunpack.c.l.b16 %v3921
    %v3998 = vunpack.c.l.b16 %v3924
    %v3999 = vunpack.c.l.b16 %v3928
    %v4000 = vunpack.c.l.b16 %v3931
    %v4001 = vunpack.c.l.b16 %v3935
    %v4002 = vunpack.c.l.b16 %v3938
    %v4003 = vpack.c.b16 %v3940, %v3939
    %v4004 = vpack.c.b16 %v3942, %v3941
    %v4005 = vpack.c.b16 %v3944, %v3943
    %v4006 = vpack.c.b16 %v3946, %v3945
    %v4007 = vpack.c.b16 %v3948, %v3947
    %v4008 = vpack.c.b16 %v3950, %v3949
    %v4009 = vpack.c.b16 %v3952, %v3951
    %v4010 = vpack.c.b16 %v3954, %v3953
    %v4011 = vpack.c.b16 %v3956, %v3955
    %v4012 = vpack.c.b16 %v3958, %v3957
    %v4013 = vpack.c.b16 %v3960, %v3959
    %v4014 = vpack.c.b16 %v3962, %v3961
    %v4015 = vpack.c.b16 %v3964, %v3963
    %v4016 = vpack.c.b16 %v3966, %v3965
    %v4017 = vpack.c.b16 %v3968, %v3967
    %v4018 = vpack.c.b16 %v3970, %v3969
    %v4019 = vpack.c.b16 %v3972, %v3971
    %v4020 = vpack.c.b16 %v3974, %v3973
    %v4021 = vpack.c.b16 %v3976, %v3975
    %v4022 = vpack.c.b16 %v3978, %v3977
    %v4023 = vpack.c.b16 %v3980, %v3979
    %v4024 = vpack.c.b16 %v3982, %v3981
    %v4025 = vpack.c.b16 %v3984, %v3983
    %v4026 = vpack.c.b16 %v3986, %v3985
    %v4027 = vpack.c.b16 %v3988, %v3987
    %v4028 = vpack.c.b16 %v3990, %v3989
    %v4029 = vpack.c.b16 %v3992, %v3991
    %v4030 = vpack.c.b16 %v3994, %v3993
    %v4031 = vpack.c.b16 %v3996, %v3995
    %v4032 = vpack.c.b16 %v3998, %v3997
    %v4033 = vpack.c.b16 %v4000, %v3999
    %v4034 = vpack.c.b16 %v4002, %v4001
    %4035 = vrot.lane.b32.xlu0 %v4003, 20
    %v4036 = vpop.permute.xlu0 %4035
    %4037 = vrot.lane.b32.xlu0 %v4004, 20
    %v4038 = vpop.permute.xlu0 %4037
    %4039 = vrot.lane.b32.xlu0 %v4005, 20
    %v4040 = vpop.permute.xlu0 %4039
    %4041 = vrot.lane.b32.xlu0 %v4006, 20
    %v4042 = vpop.permute.xlu0 %4041
    %4043 = vrot.lane.b32.xlu0 %v4007, 20
    %v4044 = vpop.permute.xlu0 %4043
    %4045 = vrot.lane.b32.xlu0 %v4008, 20
    %v4046 = vpop.permute.xlu0 %4045
    %4047 = vrot.lane.b32.xlu0 %v4009, 20
    %v4048 = vpop.permute.xlu0 %4047
    %4049 = vrot.lane.b32.xlu0 %v4010, 20
    %v4050 = vpop.permute.xlu0 %4049
    %4051 = vrot.lane.b32.xlu0 %v4011, 20
    %v4052 = vpop.permute.xlu0 %4051
    %4053 = vrot.lane.b32.xlu0 %v4012, 20
    %v4054 = vpop.permute.xlu0 %4053
    %4055 = vrot.lane.b32.xlu0 %v4013, 20
    %v4056 = vpop.permute.xlu0 %4055
    %4057 = vrot.lane.b32.xlu0 %v4014, 20
    %v4058 = vpop.permute.xlu0 %4057
    %4059 = vrot.lane.b32.xlu0 %v4015, 20
    %v4060 = vpop.permute.xlu0 %4059
    %4061 = vrot.lane.b32.xlu0 %v4016, 20
    %v4062 = vpop.permute.xlu0 %4061
    %4063 = vrot.lane.b32.xlu0 %v4017, 20
    %v4064 = vpop.permute.xlu0 %4063
    %4065 = vrot.lane.b32.xlu0 %v4018, 20
    %v4066 = vpop.permute.xlu0 %4065
    %4067 = vrot.lane.b32.xlu0 %v4019, 20
    %v4068 = vpop.permute.xlu0 %4067
    %4069 = vrot.lane.b32.xlu0 %v4020, 20
    %v4070 = vpop.permute.xlu0 %4069
    %4071 = vrot.lane.b32.xlu0 %v4021, 20
    %v4072 = vpop.permute.xlu0 %4071
    %4073 = vrot.lane.b32.xlu0 %v4022, 20
    %v4074 = vpop.permute.xlu0 %4073
    %4075 = vrot.lane.b32.xlu0 %v4023, 20
    %v4076 = vpop.permute.xlu0 %4075
    %4077 = vrot.lane.b32.xlu0 %v4024, 20
    %v4078 = vpop.permute.xlu0 %4077
    %4079 = vrot.lane.b32.xlu0 %v4025, 20
    %v4080 = vpop.permute.xlu0 %4079
    %4081 = vrot.lane.b32.xlu0 %v4026, 20
    %v4082 = vpop.permute.xlu0 %4081
    %4083 = vrot.lane.b32.xlu0 %v4027, 20
    %v4084 = vpop.permute.xlu0 %4083
    %4085 = vrot.lane.b32.xlu0 %v4028, 20
    %v4086 = vpop.permute.xlu0 %4085
    %4087 = vrot.lane.b32.xlu0 %v4029, 20
    %v4088 = vpop.permute.xlu0 %4087
    %4089 = vrot.lane.b32.xlu0 %v4030, 20
    %v4090 = vpop.permute.xlu0 %4089
    %4091 = vrot.lane.b32.xlu0 %v4031, 20
    %v4092 = vpop.permute.xlu0 %4091
    %4093 = vrot.lane.b32.xlu0 %v4032, 20
    %v4094 = vpop.permute.xlu0 %4093
    %4095 = vrot.lane.b32.xlu0 %v4033, 20
    %v4096 = vpop.permute.xlu0 %4095
    %4097 = vrot.lane.b32.xlu0 %v4034, 20
    %v4098 = vpop.permute.xlu0 %4097
    %vm4131 = vcmask 195744
    %4132 = vst.msk [vmem:[#allocation2] sm:$0xff] %vm4131, %v4036
    %4133 = vst.msk [vmem:[#allocation2 + $0x8] sm:$0xff] %vm4131, %v4038
    %4134 = vst.msk [vmem:[#allocation2 + $0x10] sm:$0xff] %vm4131, %v4040
    %4135 = vst.msk [vmem:[#allocation2 + $0x18] sm:$0xff] %vm4131, %v4042
    %4136 = vst.msk [vmem:[#allocation2 + $0x20] sm:$0xff] %vm4131, %v4044
    %4137 = vst.msk [vmem:[#allocation2 + $0x28] sm:$0xff] %vm4131, %v4046
    %4138 = vst.msk [vmem:[#allocation2 + $0x30] sm:$0xff] %vm4131, %v4048
    %4139 = vst.msk [vmem:[#allocation2 + $0x38] sm:$0xff] %vm4131, %v4050
    %4140 = vst.msk [vmem:[#allocation2 + $0x40] sm:$0xff] %vm4131, %v4052
    %4141 = vst.msk [vmem:[#allocation2 + $0x48] sm:$0xff] %vm4131, %v4054
    %4142 = vst.msk [vmem:[#allocation2 + $0x50] sm:$0xff] %vm4131, %v4056
    %4143 = vst.msk [vmem:[#allocation2 + $0x58] sm:$0xff] %vm4131, %v4058
    %4144 = vst.msk [vmem:[#allocation2 + $0x60] sm:$0xff] %vm4131, %v4060
    %4145 = vst.msk [vmem:[#allocation2 + $0x68] sm:$0xff] %vm4131, %v4062
    %4146 = vst.msk [vmem:[#allocation2 + $0x70] sm:$0xff] %vm4131, %v4064
    %4147 = vst.msk [vmem:[#allocation2 + $0x78] sm:$0xff] %vm4131, %v4066
    %4148 = vst.msk [vmem:[#allocation2 + $0x80] sm:$0xff] %vm4131, %v4068
    %4149 = vst.msk [vmem:[#allocation2 + $0x88] sm:$0xff] %vm4131, %v4070
    %4150 = vst.msk [vmem:[#allocation2 + $0x90] sm:$0xff] %vm4131, %v4072
    %4151 = vst.msk [vmem:[#allocation2 + $0x98] sm:$0xff] %vm4131, %v4074
    %4152 = vst.msk [vmem:[#allocation2 + $0xa0] sm:$0xff] %vm4131, %v4076
    %4153 = vst.msk [vmem:[#allocation2 + $0xa8] sm:$0xff] %vm4131, %v4078
    %4154 = vst.msk [vmem:[#allocation2 + $0xb0] sm:$0xff] %vm4131, %v4080
    %4155 = vst.msk [vmem:[#allocation2 + $0xb8] sm:$0xff] %vm4131, %v4082
    %4156 = vst.msk [vmem:[#allocation2 + $0xc0] sm:$0xff] %vm4131, %v4084
    %4157 = vst.msk [vmem:[#allocation2 + $0xc8] sm:$0xff] %vm4131, %v4086
    %4158 = vst.msk [vmem:[#allocation2 + $0xd0] sm:$0xff] %vm4131, %v4088
    %4159 = vst.msk [vmem:[#allocation2 + $0xd8] sm:$0xff] %vm4131, %v4090
    %4160 = vst.msk [vmem:[#allocation2 + $0xe0] sm:$0xff] %vm4131, %v4092
    %4161 = vst.msk [vmem:[#allocation2 + $0xe8] sm:$0xff] %vm4131, %v4094
    %4162 = vst.msk [vmem:[#allocation2 + $0xf0] sm:$0xff] %vm4131, %v4096
    %4163 = vst.msk [vmem:[#allocation2 + $0xf8] sm:$0xff] %vm4131, %v4098
    %s4164 = scalar_lea.vmem %s0, 24
    %v4165 = vld [vmem:[%s4164] sm:$0xf]
    %v4166 = vld [vmem:[%s4164 + $0x4] sm:$0xf]
    %v4167 = vld [vmem:[%s4164 + $0xc] sm:$0xf]
    %v4168 = vld [vmem:[%s4164 + $0x10] sm:$0xf]
    %v4169 = vld [vmem:[%s4164 + $0x18] sm:$0xf]
    %v4170 = vld [vmem:[%s4164 + $0x1c] sm:$0xf]
    %v4171 = vld [vmem:[%s4164 + $0x24] sm:$0xf]
    %v4172 = vld [vmem:[%s4164 + $0x28] sm:$0xf]
    %v4173 = vld [vmem:[%s4164 + $0x30] sm:$0xf]
    %v4174 = vld [vmem:[%s4164 + $0x34] sm:$0xf]
    %v4175 = vld [vmem:[%s4164 + $0x3c] sm:$0xf]
    %v4176 = vld [vmem:[%s4164 + $0x40] sm:$0xf]
    %v4177 = vld [vmem:[%s4164 + $0x48] sm:$0xf]
    %v4178 = vld [vmem:[%s4164 + $0x4c] sm:$0xf]
    %v4179 = vld [vmem:[%s4164 + $0x54] sm:$0xf]
    %v4180 = vld [vmem:[%s4164 + $0x58] sm:$0xf]
    %v4181 = vld [vmem:[%s4164 + $0x60] sm:$0xf]
    %v4182 = vld [vmem:[%s4164 + $0x64] sm:$0xf]
    %v4183 = vld [vmem:[%s4164 + $0x6c] sm:$0xf]
    %v4184 = vld [vmem:[%s4164 + $0x70] sm:$0xf]
    %v4185 = vld [vmem:[%s4164 + $0x78] sm:$0xf]
    %v4186 = vld [vmem:[%s4164 + $0x7c] sm:$0xf]
    %v4187 = vld [vmem:[%s4164 + $0x84] sm:$0xf]
    %v4188 = vld [vmem:[%s4164 + $0x88] sm:$0xf]
    %v4189 = vld [vmem:[%s4164 + $0x90] sm:$0xf]
    %v4190 = vld [vmem:[%s4164 + $0x94] sm:$0xf]
    %v4191 = vld [vmem:[%s4164 + $0x9c] sm:$0xf]
    %v4192 = vld [vmem:[%s4164 + $0xa0] sm:$0xf]
    %v4193 = vld [vmem:[%s4164 + $0xa8] sm:$0xf]
    %v4194 = vld [vmem:[%s4164 + $0xac] sm:$0xf]
    %v4195 = vld [vmem:[%s4164 + $0xb4] sm:$0xf]
    %v4196 = vld [vmem:[%s4164 + $0xb8] sm:$0xf]
    %v4197 = vld [vmem:[%s4164 + $0xd8] sm:$0xf]
    %v4198 = vld [vmem:[%s4164 + $0xdc] sm:$0xf]
    %v4199 = vld [vmem:[%s4164 + $0xe4] sm:$0xf]
    %v4200 = vld [vmem:[%s4164 + $0xe8] sm:$0xf]
    %v4201 = vld [vmem:[%s4164 + $0xf0] sm:$0xf]
    %v4202 = vld [vmem:[%s4164 + $0xf4] sm:$0xf]
    %v4203 = vld [vmem:[%s4164 + $0xfc] sm:$0xf]
    %v4204 = vld [vmem:[%s4164 + $0x100] sm:$0xf]
    %v4205 = vld [vmem:[%s4164 + $0x108] sm:$0xf]
    %v4206 = vld [vmem:[%s4164 + $0x10c] sm:$0xf]
    %v4207 = vld [vmem:[%s4164 + $0x114] sm:$0xf]
    %v4208 = vld [vmem:[%s4164 + $0x118] sm:$0xf]
    %v4209 = vld [vmem:[%s4164 + $0x120] sm:$0xf]
    %v4210 = vld [vmem:[%s4164 + $0x124] sm:$0xf]
    %v4211 = vld [vmem:[%s4164 + $0x12c] sm:$0xf]
    %v4212 = vld [vmem:[%s4164 + $0x130] sm:$0xf]
    %v4213 = vld [vmem:[%s4164 + $0x138] sm:$0xf]
    %v4214 = vld [vmem:[%s4164 + $0x13c] sm:$0xf]
    %v4215 = vld [vmem:[%s4164 + $0x144] sm:$0xf]
    %v4216 = vld [vmem:[%s4164 + $0x148] sm:$0xf]
    %v4217 = vld [vmem:[%s4164 + $0x150] sm:$0xf]
    %v4218 = vld [vmem:[%s4164 + $0x154] sm:$0xf]
    %v4219 = vld [vmem:[%s4164 + $0x15c] sm:$0xf]
    %v4220 = vld [vmem:[%s4164 + $0x160] sm:$0xf]
    %v4221 = vld [vmem:[%s4164 + $0x168] sm:$0xf]
    %v4222 = vld [vmem:[%s4164 + $0x16c] sm:$0xf]
    %v4223 = vld [vmem:[%s4164 + $0x174] sm:$0xf]
    %v4224 = vld [vmem:[%s4164 + $0x178] sm:$0xf]
    %v4225 = vld [vmem:[%s4164 + $0x180] sm:$0xf]
    %v4226 = vld [vmem:[%s4164 + $0x184] sm:$0xf]
    %v4227 = vld [vmem:[%s4164 + $0x18c] sm:$0xf]
    %v4228 = vld [vmem:[%s4164 + $0x190] sm:$0xf]
    %v4293 = vunpack.c.l.b16 %v4165
    %v4294 = vunpack.c.l.b16 %v4166
    %v4295 = vunpack.c.l.b16 %v4167
    %v4296 = vunpack.c.l.b16 %v4168
    %v4297 = vunpack.c.l.b16 %v4169
    %v4298 = vunpack.c.l.b16 %v4170
    %v4299 = vunpack.c.l.b16 %v4171
    %v4300 = vunpack.c.l.b16 %v4172
    %v4301 = vunpack.c.l.b16 %v4173
    %v4302 = vunpack.c.l.b16 %v4174
    %v4303 = vunpack.c.l.b16 %v4175
    %v4304 = vunpack.c.l.b16 %v4176
    %v4305 = vunpack.c.l.b16 %v4177
    %v4306 = vunpack.c.l.b16 %v4178
    %v4307 = vunpack.c.l.b16 %v4179
    %v4308 = vunpack.c.l.b16 %v4180
    %v4309 = vunpack.c.l.b16 %v4181
    %v4310 = vunpack.c.l.b16 %v4182
    %v4311 = vunpack.c.l.b16 %v4183
    %v4312 = vunpack.c.l.b16 %v4184
    %v4313 = vunpack.c.l.b16 %v4185
    %v4314 = vunpack.c.l.b16 %v4186
    %v4315 = vunpack.c.l.b16 %v4187
    %v4316 = vunpack.c.l.b16 %v4188
    %v4317 = vunpack.c.l.b16 %v4189
    %v4318 = vunpack.c.l.b16 %v4190
    %v4319 = vunpack.c.l.b16 %v4191
    %v4320 = vunpack.c.l.b16 %v4192
    %v4321 = vunpack.c.l.b16 %v4193
    %v4322 = vunpack.c.l.b16 %v4194
    %v4323 = vunpack.c.l.b16 %v4195
    %v4324 = vunpack.c.l.b16 %v4196
    %v4325 = vunpack.c.l.b16 %v4197
    %v4326 = vunpack.c.l.b16 %v4198
    %v4327 = vunpack.c.l.b16 %v4199
    %v4328 = vunpack.c.l.b16 %v4200
    %v4329 = vunpack.c.l.b16 %v4201
    %v4330 = vunpack.c.l.b16 %v4202
    %v4331 = vunpack.c.l.b16 %v4203
    %v4332 = vunpack.c.l.b16 %v4204
    %v4333 = vunpack.c.l.b16 %v4205
    %v4334 = vunpack.c.l.b16 %v4206
    %v4335 = vunpack.c.l.b16 %v4207
    %v4336 = vunpack.c.l.b16 %v4208
    %v4337 = vunpack.c.l.b16 %v4209
    %v4338 = vunpack.c.l.b16 %v4210
    %v4339 = vunpack.c.l.b16 %v4211
    %v4340 = vunpack.c.l.b16 %v4212
    %v4341 = vunpack.c.l.b16 %v4213
    %v4342 = vunpack.c.l.b16 %v4214
    %v4343 = vunpack.c.l.b16 %v4215
    %v4344 = vunpack.c.l.b16 %v4216
    %v4345 = vunpack.c.l.b16 %v4217
    %v4346 = vunpack.c.l.b16 %v4218
    %v4347 = vunpack.c.l.b16 %v4219
    %v4348 = vunpack.c.l.b16 %v4220
    %v4349 = vunpack.c.l.b16 %v4221
    %v4350 = vunpack.c.l.b16 %v4222
    %v4351 = vunpack.c.l.b16 %v4223
    %v4352 = vunpack.c.l.b16 %v4224
    %v4353 = vunpack.c.l.b16 %v4225
    %v4354 = vunpack.c.l.b16 %v4226
    %v4355 = vunpack.c.l.b16 %v4227
    %v4356 = vunpack.c.l.b16 %v4228
    %v4357 = vpack.c.b16 %v4294, %v4293
    %v4358 = vpack.c.b16 %v4296, %v4295
    %v4359 = vpack.c.b16 %v4298, %v4297
    %v4360 = vpack.c.b16 %v4300, %v4299
    %v4361 = vpack.c.b16 %v4302, %v4301
    %v4362 = vpack.c.b16 %v4304, %v4303
    %v4363 = vpack.c.b16 %v4306, %v4305
    %v4364 = vpack.c.b16 %v4308, %v4307
    %v4365 = vpack.c.b16 %v4310, %v4309
    %v4366 = vpack.c.b16 %v4312, %v4311
    %v4367 = vpack.c.b16 %v4314, %v4313
    %v4368 = vpack.c.b16 %v4316, %v4315
    %v4369 = vpack.c.b16 %v4318, %v4317
    %v4370 = vpack.c.b16 %v4320, %v4319
    %v4371 = vpack.c.b16 %v4322, %v4321
    %v4372 = vpack.c.b16 %v4324, %v4323
    %v4373 = vpack.c.b16 %v4326, %v4325
    %v4374 = vpack.c.b16 %v4328, %v4327
    %v4375 = vpack.c.b16 %v4330, %v4329
    %v4376 = vpack.c.b16 %v4332, %v4331
    %v4377 = vpack.c.b16 %v4334, %v4333
    %v4378 = vpack.c.b16 %v4336, %v4335
    %v4379 = vpack.c.b16 %v4338, %v4337
    %v4380 = vpack.c.b16 %v4340, %v4339
    %v4381 = vpack.c.b16 %v4342, %v4341
    %v4382 = vpack.c.b16 %v4344, %v4343
    %v4383 = vpack.c.b16 %v4346, %v4345
    %v4384 = vpack.c.b16 %v4348, %v4347
    %v4385 = vpack.c.b16 %v4350, %v4349
    %v4386 = vpack.c.b16 %v4352, %v4351
    %v4387 = vpack.c.b16 %v4354, %v4353
    %v4388 = vpack.c.b16 %v4356, %v4355
    %4389 = vrot.lane.b32.xlu0 %v4357, 24
    %v4390 = vpop.permute.xlu0 %4389
    %4391 = vrot.lane.b32.xlu0 %v4358, 24
    %v4392 = vpop.permute.xlu0 %4391
    %4393 = vrot.lane.b32.xlu0 %v4359, 24
    %v4394 = vpop.permute.xlu0 %4393
    %4395 = vrot.lane.b32.xlu0 %v4360, 24
    %v4396 = vpop.permute.xlu0 %4395
    %4397 = vrot.lane.b32.xlu0 %v4361, 24
    %v4398 = vpop.permute.xlu0 %4397
    %4399 = vrot.lane.b32.xlu0 %v4362, 24
    %v4400 = vpop.permute.xlu0 %4399
    %4401 = vrot.lane.b32.xlu0 %v4363, 24
    %v4402 = vpop.permute.xlu0 %4401
    %4403 = vrot.lane.b32.xlu0 %v4364, 24
    %v4404 = vpop.permute.xlu0 %4403
    %4405 = vrot.lane.b32.xlu0 %v4365, 24
    %v4406 = vpop.permute.xlu0 %4405
    %4407 = vrot.lane.b32.xlu0 %v4366, 24
    %v4408 = vpop.permute.xlu0 %4407
    %4409 = vrot.lane.b32.xlu0 %v4367, 24
    %v4410 = vpop.permute.xlu0 %4409
    %4411 = vrot.lane.b32.xlu0 %v4368, 24
    %v4412 = vpop.permute.xlu0 %4411
    %4413 = vrot.lane.b32.xlu0 %v4369, 24
    %v4414 = vpop.permute.xlu0 %4413
    %4415 = vrot.lane.b32.xlu0 %v4370, 24
    %v4416 = vpop.permute.xlu0 %4415
    %4417 = vrot.lane.b32.xlu0 %v4371, 24
    %v4418 = vpop.permute.xlu0 %4417
    %4419 = vrot.lane.b32.xlu0 %v4372, 24
    %v4420 = vpop.permute.xlu0 %4419
    %4421 = vrot.lane.b32.xlu0 %v4373, 24
    %v4422 = vpop.permute.xlu0 %4421
    %4423 = vrot.lane.b32.xlu0 %v4374, 24
    %v4424 = vpop.permute.xlu0 %4423
    %4425 = vrot.lane.b32.xlu0 %v4375, 24
    %v4426 = vpop.permute.xlu0 %4425
    %4427 = vrot.lane.b32.xlu0 %v4376, 24
    %v4428 = vpop.permute.xlu0 %4427
    %4429 = vrot.lane.b32.xlu0 %v4377, 24
    %v4430 = vpop.permute.xlu0 %4429
    %4431 = vrot.lane.b32.xlu0 %v4378, 24
    %v4432 = vpop.permute.xlu0 %4431
    %4433 = vrot.lane.b32.xlu0 %v4379, 24
    %v4434 = vpop.permute.xlu0 %4433
    %4435 = vrot.lane.b32.xlu0 %v4380, 24
    %v4436 = vpop.permute.xlu0 %4435
    %4437 = vrot.lane.b32.xlu0 %v4381, 24
    %v4438 = vpop.permute.xlu0 %4437
    %4439 = vrot.lane.b32.xlu0 %v4382, 24
    %v4440 = vpop.permute.xlu0 %4439
    %4441 = vrot.lane.b32.xlu0 %v4383, 24
    %v4442 = vpop.permute.xlu0 %4441
    %4443 = vrot.lane.b32.xlu0 %v4384, 24
    %v4444 = vpop.permute.xlu0 %4443
    %4445 = vrot.lane.b32.xlu0 %v4385, 24
    %v4446 = vpop.permute.xlu0 %4445
    %4447 = vrot.lane.b32.xlu0 %v4386, 24
    %v4448 = vpop.permute.xlu0 %4447
    %4449 = vrot.lane.b32.xlu0 %v4387, 24
    %v4450 = vpop.permute.xlu0 %4449
    %4451 = vrot.lane.b32.xlu0 %v4388, 24
    %v4452 = vpop.permute.xlu0 %4451
    %vm4485 = vcmask 228544
    %4486 = vst.msk [vmem:[#allocation2] sm:$0xff] %vm4485, %v4390
    %4487 = vst.msk [vmem:[#allocation2 + $0x8] sm:$0xff] %vm4485, %v4392
    %4488 = vst.msk [vmem:[#allocation2 + $0x10] sm:$0xff] %vm4485, %v4394
    %4489 = vst.msk [vmem:[#allocation2 + $0x18] sm:$0xff] %vm4485, %v4396
    %4490 = vst.msk [vmem:[#allocation2 + $0x20] sm:$0xff] %vm4485, %v4398
    %4491 = vst.msk [vmem:[#allocation2 + $0x28] sm:$0xff] %vm4485, %v4400
    %4492 = vst.msk [vmem:[#allocation2 + $0x30] sm:$0xff] %vm4485, %v4402
    %4493 = vst.msk [vmem:[#allocation2 + $0x38] sm:$0xff] %vm4485, %v4404
    %4494 = vst.msk [vmem:[#allocation2 + $0x40] sm:$0xff] %vm4485, %v4406
    %4495 = vst.msk [vmem:[#allocation2 + $0x48] sm:$0xff] %vm4485, %v4408
    %4496 = vst.msk [vmem:[#allocation2 + $0x50] sm:$0xff] %vm4485, %v4410
    %4497 = vst.msk [vmem:[#allocation2 + $0x58] sm:$0xff] %vm4485, %v4412
    %4498 = vst.msk [vmem:[#allocation2 + $0x60] sm:$0xff] %vm4485, %v4414
    %4499 = vst.msk [vmem:[#allocation2 + $0x68] sm:$0xff] %vm4485, %v4416
    %4500 = vst.msk [vmem:[#allocation2 + $0x70] sm:$0xff] %vm4485, %v4418
    %4501 = vst.msk [vmem:[#allocation2 + $0x78] sm:$0xff] %vm4485, %v4420
    %4502 = vst.msk [vmem:[#allocation2 + $0x80] sm:$0xff] %vm4485, %v4422
    %4503 = vst.msk [vmem:[#allocation2 + $0x88] sm:$0xff] %vm4485, %v4424
    %4504 = vst.msk [vmem:[#allocation2 + $0x90] sm:$0xff] %vm4485, %v4426
    %4505 = vst.msk [vmem:[#allocation2 + $0x98] sm:$0xff] %vm4485, %v4428
    %4506 = vst.msk [vmem:[#allocation2 + $0xa0] sm:$0xff] %vm4485, %v4430
    %4507 = vst.msk [vmem:[#allocation2 + $0xa8] sm:$0xff] %vm4485, %v4432
    %4508 = vst.msk [vmem:[#allocation2 + $0xb0] sm:$0xff] %vm4485, %v4434
    %4509 = vst.msk [vmem:[#allocation2 + $0xb8] sm:$0xff] %vm4485, %v4436
    %4510 = vst.msk [vmem:[#allocation2 + $0xc0] sm:$0xff] %vm4485, %v4438
    %4511 = vst.msk [vmem:[#allocation2 + $0xc8] sm:$0xff] %vm4485, %v4440
    %4512 = vst.msk [vmem:[#allocation2 + $0xd0] sm:$0xff] %vm4485, %v4442
    %4513 = vst.msk [vmem:[#allocation2 + $0xd8] sm:$0xff] %vm4485, %v4444
    %4514 = vst.msk [vmem:[#allocation2 + $0xe0] sm:$0xff] %vm4485, %v4446
    %4515 = vst.msk [vmem:[#allocation2 + $0xe8] sm:$0xff] %vm4485, %v4448
    %4516 = vst.msk [vmem:[#allocation2 + $0xf0] sm:$0xff] %vm4485, %v4450
    %4517 = vst.msk [vmem:[#allocation2 + $0xf8] sm:$0xff] %vm4485, %v4452
    %v4518 = vld [vmem:[%s4164] sm:$0xf]
    %v4519 = vld [vmem:[%s4164 + $0x4] sm:$0xf]
    %v4520 = vld [vmem:[%s4164 + $0x8] sm:$0x1]
    %v4521 = vld [vmem:[%s4164 + $0xc] sm:$0xf]
    %v4522 = vld [vmem:[%s4164 + $0x10] sm:$0xf]
    %v4523 = vld [vmem:[%s4164 + $0x14] sm:$0x1]
    %v4524 = vld [vmem:[%s4164 + $0x18] sm:$0xf]
    %v4525 = vld [vmem:[%s4164 + $0x1c] sm:$0xf]
    %v4526 = vld [vmem:[%s4164 + $0x20] sm:$0x1]
    %v4527 = vld [vmem:[%s4164 + $0x24] sm:$0xf]
    %v4528 = vld [vmem:[%s4164 + $0x28] sm:$0xf]
    %v4529 = vld [vmem:[%s4164 + $0x2c] sm:$0x1]
    %v4530 = vld [vmem:[%s4164 + $0x30] sm:$0xf]
    %v4531 = vld [vmem:[%s4164 + $0x34] sm:$0xf]
    %v4532 = vld [vmem:[%s4164 + $0x38] sm:$0x1]
    %v4533 = vld [vmem:[%s4164 + $0x3c] sm:$0xf]
    %v4534 = vld [vmem:[%s4164 + $0x40] sm:$0xf]
    %v4535 = vld [vmem:[%s4164 + $0x44] sm:$0x1]
    %v4536 = vld [vmem:[%s4164 + $0x48] sm:$0xf]
    %v4537 = vld [vmem:[%s4164 + $0x4c] sm:$0xf]
    %v4538 = vld [vmem:[%s4164 + $0x50] sm:$0x1]
    %v4539 = vld [vmem:[%s4164 + $0x54] sm:$0xf]
    %v4540 = vld [vmem:[%s4164 + $0x58] sm:$0xf]
    %v4541 = vld [vmem:[%s4164 + $0x5c] sm:$0x1]
    %v4542 = vld [vmem:[%s4164 + $0x60] sm:$0xf]
    %v4543 = vld [vmem:[%s4164 + $0x64] sm:$0xf]
    %v4544 = vld [vmem:[%s4164 + $0x68] sm:$0x1]
    %v4545 = vld [vmem:[%s4164 + $0x6c] sm:$0xf]
    %v4546 = vld [vmem:[%s4164 + $0x70] sm:$0xf]
    %v4547 = vld [vmem:[%s4164 + $0x74] sm:$0x1]
    %v4548 = vld [vmem:[%s4164 + $0x78] sm:$0xf]
    %v4549 = vld [vmem:[%s4164 + $0x7c] sm:$0xf]
    %v4550 = vld [vmem:[%s4164 + $0x80] sm:$0x1]
    %v4551 = vld [vmem:[%s4164 + $0x84] sm:$0xf]
    %v4552 = vld [vmem:[%s4164 + $0x88] sm:$0xf]
    %v4553 = vld [vmem:[%s4164 + $0x8c] sm:$0x1]
    %v4554 = vld [vmem:[%s4164 + $0x90] sm:$0xf]
    %v4555 = vld [vmem:[%s4164 + $0x94] sm:$0xf]
    %v4556 = vld [vmem:[%s4164 + $0x98] sm:$0x1]
    %v4557 = vld [vmem:[%s4164 + $0x9c] sm:$0xf]
    %v4558 = vld [vmem:[%s4164 + $0xa0] sm:$0xf]
    %v4559 = vld [vmem:[%s4164 + $0xa4] sm:$0x1]
    %v4560 = vld [vmem:[%s4164 + $0xa8] sm:$0xf]
    %v4561 = vld [vmem:[%s4164 + $0xac] sm:$0xf]
    %v4562 = vld [vmem:[%s4164 + $0xb0] sm:$0x1]
    %v4563 = vld [vmem:[%s4164 + $0xb4] sm:$0xf]
    %v4564 = vld [vmem:[%s4164 + $0xb8] sm:$0xf]
    %v4565 = vld [vmem:[%s4164 + $0xbc] sm:$0x1]
    %v4566 = vld [vmem:[%s4164 + $0xd8] sm:$0xf]
    %v4567 = vld [vmem:[%s4164 + $0xdc] sm:$0xf]
    %v4568 = vld [vmem:[%s4164 + $0xe0] sm:$0x1]
    %v4569 = vld [vmem:[%s4164 + $0xe4] sm:$0xf]
    %v4570 = vld [vmem:[%s4164 + $0xe8] sm:$0xf]
    %v4571 = vld [vmem:[%s4164 + $0xec] sm:$0x1]
    %v4572 = vld [vmem:[%s4164 + $0xf0] sm:$0xf]
    %v4573 = vld [vmem:[%s4164 + $0xf4] sm:$0xf]
    %v4574 = vld [vmem:[%s4164 + $0xf8] sm:$0x1]
    %v4575 = vld [vmem:[%s4164 + $0xfc] sm:$0xf]
    %v4576 = vld [vmem:[%s4164 + $0x100] sm:$0xf]
    %v4577 = vld [vmem:[%s4164 + $0x104] sm:$0x1]
    %v4578 = vld [vmem:[%s4164 + $0x108] sm:$0xf]
    %v4579 = vld [vmem:[%s4164 + $0x10c] sm:$0xf]
    %v4580 = vld [vmem:[%s4164 + $0x110] sm:$0x1]
    %v4581 = vld [vmem:[%s4164 + $0x114] sm:$0xf]
    %v4582 = vld [vmem:[%s4164 + $0x118] sm:$0xf]
    %v4583 = vld [vmem:[%s4164 + $0x11c] sm:$0x1]
    %v4584 = vld [vmem:[%s4164 + $0x120] sm:$0xf]
    %v4585 = vld [vmem:[%s4164 + $0x124] sm:$0xf]
    %v4586 = vld [vmem:[%s4164 + $0x128] sm:$0x1]
    %v4587 = vld [vmem:[%s4164 + $0x12c] sm:$0xf]
    %v4588 = vld [vmem:[%s4164 + $0x130] sm:$0xf]
    %v4589 = vld [vmem:[%s4164 + $0x134] sm:$0x1]
    %v4590 = vld [vmem:[%s4164 + $0x138] sm:$0xf]
    %v4591 = vld [vmem:[%s4164 + $0x13c] sm:$0xf]
    %v4592 = vld [vmem:[%s4164 + $0x140] sm:$0x1]
    %v4593 = vld [vmem:[%s4164 + $0x144] sm:$0xf]
    %v4594 = vld [vmem:[%s4164 + $0x148] sm:$0xf]
    %v4595 = vld [vmem:[%s4164 + $0x14c] sm:$0x1]
    %v4596 = vld [vmem:[%s4164 + $0x150] sm:$0xf]
    %v4597 = vld [vmem:[%s4164 + $0x154] sm:$0xf]
    %v4598 = vld [vmem:[%s4164 + $0x158] sm:$0x1]
    %v4599 = vld [vmem:[%s4164 + $0x15c] sm:$0xf]
    %v4600 = vld [vmem:[%s4164 + $0x160] sm:$0xf]
    %v4601 = vld [vmem:[%s4164 + $0x164] sm:$0x1]
    %v4602 = vld [vmem:[%s4164 + $0x168] sm:$0xf]
    %v4603 = vld [vmem:[%s4164 + $0x16c] sm:$0xf]
    %v4604 = vld [vmem:[%s4164 + $0x170] sm:$0x1]
    %v4605 = vld [vmem:[%s4164 + $0x174] sm:$0xf]
    %v4606 = vld [vmem:[%s4164 + $0x178] sm:$0xf]
    %v4607 = vld [vmem:[%s4164 + $0x17c] sm:$0x1]
    %v4608 = vld [vmem:[%s4164 + $0x180] sm:$0xf]
    %v4609 = vld [vmem:[%s4164 + $0x184] sm:$0xf]
    %v4610 = vld [vmem:[%s4164 + $0x188] sm:$0x1]
    %v4611 = vld [vmem:[%s4164 + $0x18c] sm:$0xf]
    %v4612 = vld [vmem:[%s4164 + $0x190] sm:$0xf]
    %v4613 = vld [vmem:[%s4164 + $0x194] sm:$0x1]
    %v4615 = vshrl.u32 %v4518, 16
    %v4617 = vrot.slane %v4615, 4
    %v4618 = vshll.u32 %v4518, 16
    %v4620 = vrot.slane %v4618, 5
    %v4621 = vor.u32 %v4617, %v4620
    %v4622 = vrot.slane %v4621, 4
    %v4624 = vshll.u32 %v4519, 16
    %v4626 = vrot.slane %v4624, 5
    %v4627 = vsel %vm442, %v4622, %v4626
    %v4628 = vshrl.u32 %v4519, 16
    %v4630 = vrot.slane %v4628, 4
    %v4631 = vor.u32 %v4630, %v4626
    %v4632 = vrot.slane %v4631, 4
    %v4634 = vshll.u32 %v4520, 16
    %v4636 = vrot.slane %v4634, 5
    %v4637 = vsel %vm442, %v4632, %v4636
    %v4639 = vshrl.u32 %v4521, 16
    %v4641 = vrot.slane %v4639, 4
    %v4642 = vshll.u32 %v4521, 16
    %v4644 = vrot.slane %v4642, 5
    %v4645 = vor.u32 %v4641, %v4644
    %v4646 = vrot.slane %v4645, 4
    %v4648 = vshll.u32 %v4522, 16
    %v4650 = vrot.slane %v4648, 5
    %v4651 = vsel %vm442, %v4646, %v4650
    %v4652 = vshrl.u32 %v4522, 16
    %v4654 = vrot.slane %v4652, 4
    %v4655 = vor.u32 %v4654, %v4650
    %v4656 = vrot.slane %v4655, 4
    %v4658 = vshll.u32 %v4523, 16
    %v4660 = vrot.slane %v4658, 5
    %v4661 = vsel %vm442, %v4656, %v4660
    %v4663 = vshrl.u32 %v4524, 16
    %v4665 = vrot.slane %v4663, 4
    %v4666 = vshll.u32 %v4524, 16
    %v4668 = vrot.slane %v4666, 5
    %v4669 = vor.u32 %v4665, %v4668
    %v4670 = vrot.slane %v4669, 4
    %v4672 = vshll.u32 %v4525, 16
    %v4674 = vrot.slane %v4672, 5
    %v4675 = vsel %vm442, %v4670, %v4674
    %v4676 = vshrl.u32 %v4525, 16
    %v4678 = vrot.slane %v4676, 4
    %v4679 = vor.u32 %v4678, %v4674
    %v4680 = vrot.slane %v4679, 4
    %v4682 = vshll.u32 %v4526, 16
    %v4684 = vrot.slane %v4682, 5
    %v4685 = vsel %vm442, %v4680, %v4684
    %v4687 = vshrl.u32 %v4527, 16
    %v4689 = vrot.slane %v4687, 4
    %v4690 = vshll.u32 %v4527, 16
    %v4692 = vrot.slane %v4690, 5
    %v4693 = vor.u32 %v4689, %v4692
    %v4694 = vrot.slane %v4693, 4
    %v4696 = vshll.u32 %v4528, 16
    %v4698 = vrot.slane %v4696, 5
    %v4699 = vsel %vm442, %v4694, %v4698
    %v4700 = vshrl.u32 %v4528, 16
    %v4702 = vrot.slane %v4700, 4
    %v4703 = vor.u32 %v4702, %v4698
    %v4704 = vrot.slane %v4703, 4
    %v4706 = vshll.u32 %v4529, 16
    %v4708 = vrot.slane %v4706, 5
    %v4709 = vsel %vm442, %v4704, %v4708
    %v4711 = vshrl.u32 %v4530, 16
    %v4713 = vrot.slane %v4711, 4
    %v4714 = vshll.u32 %v4530, 16
    %v4716 = vrot.slane %v4714, 5
    %v4717 = vor.u32 %v4713, %v4716
    %v4718 = vrot.slane %v4717, 4
    %v4720 = vshll.u32 %v4531, 16
    %v4722 = vrot.slane %v4720, 5
    %v4723 = vsel %vm442, %v4718, %v4722
    %v4724 = vshrl.u32 %v4531, 16
    %v4726 = vrot.slane %v4724, 4
    %v4727 = vor.u32 %v4726, %v4722
    %v4728 = vrot.slane %v4727, 4
    %v4730 = vshll.u32 %v4532, 16
    %v4732 = vrot.slane %v4730, 5
    %v4733 = vsel %vm442, %v4728, %v4732
    %v4735 = vshrl.u32 %v4533, 16
    %v4737 = vrot.slane %v4735, 4
    %v4738 = vshll.u32 %v4533, 16
    %v4740 = vrot.slane %v4738, 5
    %v4741 = vor.u32 %v4737, %v4740
    %v4742 = vrot.slane %v4741, 4
    %v4744 = vshll.u32 %v4534, 16
    %v4746 = vrot.slane %v4744, 5
    %v4747 = vsel %vm442, %v4742, %v4746
    %v4748 = vshrl.u32 %v4534, 16
    %v4750 = vrot.slane %v4748, 4
    %v4751 = vor.u32 %v4750, %v4746
    %v4752 = vrot.slane %v4751, 4
    %v4754 = vshll.u32 %v4535, 16
    %v4756 = vrot.slane %v4754, 5
    %v4757 = vsel %vm442, %v4752, %v4756
    %v4759 = vshrl.u32 %v4536, 16
    %v4761 = vrot.slane %v4759, 4
    %v4762 = vshll.u32 %v4536, 16
    %v4764 = vrot.slane %v4762, 5
    %v4765 = vor.u32 %v4761, %v4764
    %v4766 = vrot.slane %v4765, 4
    %v4768 = vshll.u32 %v4537, 16
    %v4770 = vrot.slane %v4768, 5
    %v4771 = vsel %vm442, %v4766, %v4770
    %v4772 = vshrl.u32 %v4537, 16
    %v4774 = vrot.slane %v4772, 4
    %v4775 = vor.u32 %v4774, %v4770
    %v4776 = vrot.slane %v4775, 4
    %v4778 = vshll.u32 %v4538, 16
    %v4780 = vrot.slane %v4778, 5
    %v4781 = vsel %vm442, %v4776, %v4780
    %v4783 = vshrl.u32 %v4539, 16
    %v4785 = vrot.slane %v4783, 4
    %v4786 = vshll.u32 %v4539, 16
    %v4788 = vrot.slane %v4786, 5
    %v4789 = vor.u32 %v4785, %v4788
    %v4790 = vrot.slane %v4789, 4
    %v4792 = vshll.u32 %v4540, 16
    %v4794 = vrot.slane %v4792, 5
    %v4795 = vsel %vm442, %v4790, %v4794
    %v4796 = vshrl.u32 %v4540, 16
    %v4798 = vrot.slane %v4796, 4
    %v4799 = vor.u32 %v4798, %v4794
    %v4800 = vrot.slane %v4799, 4
    %v4802 = vshll.u32 %v4541, 16
    %v4804 = vrot.slane %v4802, 5
    %v4805 = vsel %vm442, %v4800, %v4804
    %v4807 = vshrl.u32 %v4542, 16
    %v4809 = vrot.slane %v4807, 4
    %v4810 = vshll.u32 %v4542, 16
    %v4812 = vrot.slane %v4810, 5
    %v4813 = vor.u32 %v4809, %v4812
    %v4814 = vrot.slane %v4813, 4
    %v4816 = vshll.u32 %v4543, 16
    %v4818 = vrot.slane %v4816, 5
    %v4819 = vsel %vm442, %v4814, %v4818
    %v4820 = vshrl.u32 %v4543, 16
    %v4822 = vrot.slane %v4820, 4
    %v4823 = vor.u32 %v4822, %v4818
    %v4824 = vrot.slane %v4823, 4
    %v4826 = vshll.u32 %v4544, 16
    %v4828 = vrot.slane %v4826, 5
    %v4829 = vsel %vm442, %v4824, %v4828
    %v4831 = vshrl.u32 %v4545, 16
    %v4833 = vrot.slane %v4831, 4
    %v4834 = vshll.u32 %v4545, 16
    %v4836 = vrot.slane %v4834, 5
    %v4837 = vor.u32 %v4833, %v4836
    %v4838 = vrot.slane %v4837, 4
    %v4840 = vshll.u32 %v4546, 16
    %v4842 = vrot.slane %v4840, 5
    %v4843 = vsel %vm442, %v4838, %v4842
    %v4844 = vshrl.u32 %v4546, 16
    %v4846 = vrot.slane %v4844, 4
    %v4847 = vor.u32 %v4846, %v4842
    %v4848 = vrot.slane %v4847, 4
    %v4850 = vshll.u32 %v4547, 16
    %v4852 = vrot.slane %v4850, 5
    %v4853 = vsel %vm442, %v4848, %v4852
    %v4855 = vshrl.u32 %v4548, 16
    %v4857 = vrot.slane %v4855, 4
    %v4858 = vshll.u32 %v4548, 16
    %v4860 = vrot.slane %v4858, 5
    %v4861 = vor.u32 %v4857, %v4860
    %v4862 = vrot.slane %v4861, 4
    %v4864 = vshll.u32 %v4549, 16
    %v4866 = vrot.slane %v4864, 5
    %v4867 = vsel %vm442, %v4862, %v4866
    %v4868 = vshrl.u32 %v4549, 16
    %v4870 = vrot.slane %v4868, 4
    %v4871 = vor.u32 %v4870, %v4866
    %v4872 = vrot.slane %v4871, 4
    %v4874 = vshll.u32 %v4550, 16
    %v4876 = vrot.slane %v4874, 5
    %v4877 = vsel %vm442, %v4872, %v4876
    %v4879 = vshrl.u32 %v4551, 16
    %v4881 = vrot.slane %v4879, 4
    %v4882 = vshll.u32 %v4551, 16
    %v4884 = vrot.slane %v4882, 5
    %v4885 = vor.u32 %v4881, %v4884
    %v4886 = vrot.slane %v4885, 4
    %v4888 = vshll.u32 %v4552, 16
    %v4890 = vrot.slane %v4888, 5
    %v4891 = vsel %vm442, %v4886, %v4890
    %v4892 = vshrl.u32 %v4552, 16
    %v4894 = vrot.slane %v4892, 4
    %v4895 = vor.u32 %v4894, %v4890
    %v4896 = vrot.slane %v4895, 4
    %v4898 = vshll.u32 %v4553, 16
    %v4900 = vrot.slane %v4898, 5
    %v4901 = vsel %vm442, %v4896, %v4900
    %v4903 = vshrl.u32 %v4554, 16
    %v4905 = vrot.slane %v4903, 4
    %v4906 = vshll.u32 %v4554, 16
    %v4908 = vrot.slane %v4906, 5
    %v4909 = vor.u32 %v4905, %v4908
    %v4910 = vrot.slane %v4909, 4
    %v4912 = vshll.u32 %v4555, 16
    %v4914 = vrot.slane %v4912, 5
    %v4915 = vsel %vm442, %v4910, %v4914
    %v4916 = vshrl.u32 %v4555, 16
    %v4918 = vrot.slane %v4916, 4
    %v4919 = vor.u32 %v4918, %v4914
    %v4920 = vrot.slane %v4919, 4
    %v4922 = vshll.u32 %v4556, 16
    %v4924 = vrot.slane %v4922, 5
    %v4925 = vsel %vm442, %v4920, %v4924
    %v4927 = vshrl.u32 %v4557, 16
    %v4929 = vrot.slane %v4927, 4
    %v4930 = vshll.u32 %v4557, 16
    %v4932 = vrot.slane %v4930, 5
    %v4933 = vor.u32 %v4929, %v4932
    %v4934 = vrot.slane %v4933, 4
    %v4936 = vshll.u32 %v4558, 16
    %v4938 = vrot.slane %v4936, 5
    %v4939 = vsel %vm442, %v4934, %v4938
    %v4940 = vshrl.u32 %v4558, 16
    %v4942 = vrot.slane %v4940, 4
    %v4943 = vor.u32 %v4942, %v4938
    %v4944 = vrot.slane %v4943, 4
    %v4946 = vshll.u32 %v4559, 16
    %v4948 = vrot.slane %v4946, 5
    %v4949 = vsel %vm442, %v4944, %v4948
    %v4951 = vshrl.u32 %v4560, 16
    %v4953 = vrot.slane %v4951, 4
    %v4954 = vshll.u32 %v4560, 16
    %v4956 = vrot.slane %v4954, 5
    %v4957 = vor.u32 %v4953, %v4956
    %v4958 = vrot.slane %v4957, 4
    %v4960 = vshll.u32 %v4561, 16
    %v4962 = vrot.slane %v4960, 5
    %v4963 = vsel %vm442, %v4958, %v4962
    %v4964 = vshrl.u32 %v4561, 16
    %v4966 = vrot.slane %v4964, 4
    %v4967 = vor.u32 %v4966, %v4962
    %v4968 = vrot.slane %v4967, 4
    %v4970 = vshll.u32 %v4562, 16
    %v4972 = vrot.slane %v4970, 5
    %v4973 = vsel %vm442, %v4968, %v4972
    %v4975 = vshrl.u32 %v4563, 16
    %v4977 = vrot.slane %v4975, 4
    %v4978 = vshll.u32 %v4563, 16
    %v4980 = vrot.slane %v4978, 5
    %v4981 = vor.u32 %v4977, %v4980
    %v4982 = vrot.slane %v4981, 4
    %v4984 = vshll.u32 %v4564, 16
    %v4986 = vrot.slane %v4984, 5
    %v4987 = vsel %vm442, %v4982, %v4986
    %v4988 = vshrl.u32 %v4564, 16
    %v4990 = vrot.slane %v4988, 4
    %v4991 = vor.u32 %v4990, %v4986
    %v4992 = vrot.slane %v4991, 4
    %v4994 = vshll.u32 %v4565, 16
    %v4996 = vrot.slane %v4994, 5
    %v4997 = vsel %vm442, %v4992, %v4996
    %v4999 = vshrl.u32 %v4566, 16
    %v5001 = vrot.slane %v4999, 4
    %v5002 = vshll.u32 %v4566, 16
    %v5004 = vrot.slane %v5002, 5
    %v5005 = vor.u32 %v5001, %v5004
    %v5006 = vrot.slane %v5005, 4
    %v5008 = vshll.u32 %v4567, 16
    %v5010 = vrot.slane %v5008, 5
    %v5011 = vsel %vm442, %v5006, %v5010
    %v5012 = vshrl.u32 %v4567, 16
    %v5014 = vrot.slane %v5012, 4
    %v5015 = vor.u32 %v5014, %v5010
    %v5016 = vrot.slane %v5015, 4
    %v5018 = vshll.u32 %v4568, 16
    %v5020 = vrot.slane %v5018, 5
    %v5021 = vsel %vm442, %v5016, %v5020
    %v5023 = vshrl.u32 %v4569, 16
    %v5025 = vrot.slane %v5023, 4
    %v5026 = vshll.u32 %v4569, 16
    %v5028 = vrot.slane %v5026, 5
    %v5029 = vor.u32 %v5025, %v5028
    %v5030 = vrot.slane %v5029, 4
    %v5032 = vshll.u32 %v4570, 16
    %v5034 = vrot.slane %v5032, 5
    %v5035 = vsel %vm442, %v5030, %v5034
    %v5036 = vshrl.u32 %v4570, 16
    %v5038 = vrot.slane %v5036, 4
    %v5039 = vor.u32 %v5038, %v5034
    %v5040 = vrot.slane %v5039, 4
    %v5042 = vshll.u32 %v4571, 16
    %v5044 = vrot.slane %v5042, 5
    %v5045 = vsel %vm442, %v5040, %v5044
    %v5047 = vshrl.u32 %v4572, 16
    %v5049 = vrot.slane %v5047, 4
    %v5050 = vshll.u32 %v4572, 16
    %v5052 = vrot.slane %v5050, 5
    %v5053 = vor.u32 %v5049, %v5052
    %v5054 = vrot.slane %v5053, 4
    %v5056 = vshll.u32 %v4573, 16
    %v5058 = vrot.slane %v5056, 5
    %v5059 = vsel %vm442, %v5054, %v5058
    %v5060 = vshrl.u32 %v4573, 16
    %v5062 = vrot.slane %v5060, 4
    %v5063 = vor.u32 %v5062, %v5058
    %v5064 = vrot.slane %v5063, 4
    %v5066 = vshll.u32 %v4574, 16
    %v5068 = vrot.slane %v5066, 5
    %v5069 = vsel %vm442, %v5064, %v5068
    %v5071 = vshrl.u32 %v4575, 16
    %v5073 = vrot.slane %v5071, 4
    %v5074 = vshll.u32 %v4575, 16
    %v5076 = vrot.slane %v5074, 5
    %v5077 = vor.u32 %v5073, %v5076
    %v5078 = vrot.slane %v5077, 4
    %v5080 = vshll.u32 %v4576, 16
    %v5082 = vrot.slane %v5080, 5
    %v5083 = vsel %vm442, %v5078, %v5082
    %v5084 = vshrl.u32 %v4576, 16
    %v5086 = vrot.slane %v5084, 4
    %v5087 = vor.u32 %v5086, %v5082
    %v5088 = vrot.slane %v5087, 4
    %v5090 = vshll.u32 %v4577, 16
    %v5092 = vrot.slane %v5090, 5
    %v5093 = vsel %vm442, %v5088, %v5092
    %v5095 = vshrl.u32 %v4578, 16
    %v5097 = vrot.slane %v5095, 4
    %v5098 = vshll.u32 %v4578, 16
    %v5100 = vrot.slane %v5098, 5
    %v5101 = vor.u32 %v5097, %v5100
    %v5102 = vrot.slane %v5101, 4
    %v5104 = vshll.u32 %v4579, 16
    %v5106 = vrot.slane %v5104, 5
    %v5107 = vsel %vm442, %v5102, %v5106
    %v5108 = vshrl.u32 %v4579, 16
    %v5110 = vrot.slane %v5108, 4
    %v5111 = vor.u32 %v5110, %v5106
    %v5112 = vrot.slane %v5111, 4
    %v5114 = vshll.u32 %v4580, 16
    %v5116 = vrot.slane %v5114, 5
    %v5117 = vsel %vm442, %v5112, %v5116
    %v5119 = vshrl.u32 %v4581, 16
    %v5121 = vrot.slane %v5119, 4
    %v5122 = vshll.u32 %v4581, 16
    %v5124 = vrot.slane %v5122, 5
    %v5125 = vor.u32 %v5121, %v5124
    %v5126 = vrot.slane %v5125, 4
    %v5128 = vshll.u32 %v4582, 16
    %v5130 = vrot.slane %v5128, 5
    %v5131 = vsel %vm442, %v5126, %v5130
    %v5132 = vshrl.u32 %v4582, 16
    %v5134 = vrot.slane %v5132, 4
    %v5135 = vor.u32 %v5134, %v5130
    %v5136 = vrot.slane %v5135, 4
    %v5138 = vshll.u32 %v4583, 16
    %v5140 = vrot.slane %v5138, 5
    %v5141 = vsel %vm442, %v5136, %v5140
    %v5143 = vshrl.u32 %v4584, 16
    %v5145 = vrot.slane %v5143, 4
    %v5146 = vshll.u32 %v4584, 16
    %v5148 = vrot.slane %v5146, 5
    %v5149 = vor.u32 %v5145, %v5148
    %v5150 = vrot.slane %v5149, 4
    %v5152 = vshll.u32 %v4585, 16
    %v5154 = vrot.slane %v5152, 5
    %v5155 = vsel %vm442, %v5150, %v5154
    %v5156 = vshrl.u32 %v4585, 16
    %v5158 = vrot.slane %v5156, 4
    %v5159 = vor.u32 %v5158, %v5154
    %v5160 = vrot.slane %v5159, 4
    %v5162 = vshll.u32 %v4586, 16
    %v5164 = vrot.slane %v5162, 5
    %v5165 = vsel %vm442, %v5160, %v5164
    %v5167 = vshrl.u32 %v4587, 16
    %v5169 = vrot.slane %v5167, 4
    %v5170 = vshll.u32 %v4587, 16
    %v5172 = vrot.slane %v5170, 5
    %v5173 = vor.u32 %v5169, %v5172
    %v5174 = vrot.slane %v5173, 4
    %v5176 = vshll.u32 %v4588, 16
    %v5178 = vrot.slane %v5176, 5
    %v5179 = vsel %vm442, %v5174, %v5178
    %v5180 = vshrl.u32 %v4588, 16
    %v5182 = vrot.slane %v5180, 4
    %v5183 = vor.u32 %v5182, %v5178
    %v5184 = vrot.slane %v5183, 4
    %v5186 = vshll.u32 %v4589, 16
    %v5188 = vrot.slane %v5186, 5
    %v5189 = vsel %vm442, %v5184, %v5188
    %v5191 = vshrl.u32 %v4590, 16
    %v5193 = vrot.slane %v5191, 4
    %v5194 = vshll.u32 %v4590, 16
    %v5196 = vrot.slane %v5194, 5
    %v5197 = vor.u32 %v5193, %v5196
    %v5198 = vrot.slane %v5197, 4
    %v5200 = vshll.u32 %v4591, 16
    %v5202 = vrot.slane %v5200, 5
    %v5203 = vsel %vm442, %v5198, %v5202
    %v5204 = vshrl.u32 %v4591, 16
    %v5206 = vrot.slane %v5204, 4
    %v5207 = vor.u32 %v5206, %v5202
    %v5208 = vrot.slane %v5207, 4
    %v5210 = vshll.u32 %v4592, 16
    %v5212 = vrot.slane %v5210, 5
    %v5213 = vsel %vm442, %v5208, %v5212
    %v5215 = vshrl.u32 %v4593, 16
    %v5217 = vrot.slane %v5215, 4
    %v5218 = vshll.u32 %v4593, 16
    %v5220 = vrot.slane %v5218, 5
    %v5221 = vor.u32 %v5217, %v5220
    %v5222 = vrot.slane %v5221, 4
    %v5224 = vshll.u32 %v4594, 16
    %v5226 = vrot.slane %v5224, 5
    %v5227 = vsel %vm442, %v5222, %v5226
    %v5228 = vshrl.u32 %v4594, 16
    %v5230 = vrot.slane %v5228, 4
    %v5231 = vor.u32 %v5230, %v5226
    %v5232 = vrot.slane %v5231, 4
    %v5234 = vshll.u32 %v4595, 16
    %v5236 = vrot.slane %v5234, 5
    %v5237 = vsel %vm442, %v5232, %v5236
    %v5239 = vshrl.u32 %v4596, 16
    %v5241 = vrot.slane %v5239, 4
    %v5242 = vshll.u32 %v4596, 16
    %v5244 = vrot.slane %v5242, 5
    %v5245 = vor.u32 %v5241, %v5244
    %v5246 = vrot.slane %v5245, 4
    %v5248 = vshll.u32 %v4597, 16
    %v5250 = vrot.slane %v5248, 5
    %v5251 = vsel %vm442, %v5246, %v5250
    %v5252 = vshrl.u32 %v4597, 16
    %v5254 = vrot.slane %v5252, 4
    %v5255 = vor.u32 %v5254, %v5250
    %v5256 = vrot.slane %v5255, 4
    %v5258 = vshll.u32 %v4598, 16
    %v5260 = vrot.slane %v5258, 5
    %v5261 = vsel %vm442, %v5256, %v5260
    %v5263 = vshrl.u32 %v4599, 16
    %v5265 = vrot.slane %v5263, 4
    %v5266 = vshll.u32 %v4599, 16
    %v5268 = vrot.slane %v5266, 5
    %v5269 = vor.u32 %v5265, %v5268
    %v5270 = vrot.slane %v5269, 4
    %v5272 = vshll.u32 %v4600, 16
    %v5274 = vrot.slane %v5272, 5
    %v5275 = vsel %vm442, %v5270, %v5274
    %v5276 = vshrl.u32 %v4600, 16
    %v5278 = vrot.slane %v5276, 4
    %v5279 = vor.u32 %v5278, %v5274
    %v5280 = vrot.slane %v5279, 4
    %v5282 = vshll.u32 %v4601, 16
    %v5284 = vrot.slane %v5282, 5
    %v5285 = vsel %vm442, %v5280, %v5284
    %v5287 = vshrl.u32 %v4602, 16
    %v5289 = vrot.slane %v5287, 4
    %v5290 = vshll.u32 %v4602, 16
    %v5292 = vrot.slane %v5290, 5
    %v5293 = vor.u32 %v5289, %v5292
    %v5294 = vrot.slane %v5293, 4
    %v5296 = vshll.u32 %v4603, 16
    %v5298 = vrot.slane %v5296, 5
    %v5299 = vsel %vm442, %v5294, %v5298
    %v5300 = vshrl.u32 %v4603, 16
    %v5302 = vrot.slane %v5300, 4
    %v5303 = vor.u32 %v5302, %v5298
    %v5304 = vrot.slane %v5303, 4
    %v5306 = vshll.u32 %v4604, 16
    %v5308 = vrot.slane %v5306, 5
    %v5309 = vsel %vm442, %v5304, %v5308
    %v5311 = vshrl.u32 %v4605, 16
    %v5313 = vrot.slane %v5311, 4
    %v5314 = vshll.u32 %v4605, 16
    %v5316 = vrot.slane %v5314, 5
    %v5317 = vor.u32 %v5313, %v5316
    %v5318 = vrot.slane %v5317, 4
    %v5320 = vshll.u32 %v4606, 16
    %v5322 = vrot.slane %v5320, 5
    %v5323 = vsel %vm442, %v5318, %v5322
    %v5324 = vshrl.u32 %v4606, 16
    %v5326 = vrot.slane %v5324, 4
    %v5327 = vor.u32 %v5326, %v5322
    %v5328 = vrot.slane %v5327, 4
    %v5330 = vshll.u32 %v4607, 16
    %v5332 = vrot.slane %v5330, 5
    %v5333 = vsel %vm442, %v5328, %v5332
    %v5335 = vshrl.u32 %v4608, 16
    %v5337 = vrot.slane %v5335, 4
    %v5338 = vshll.u32 %v4608, 16
    %v5340 = vrot.slane %v5338, 5
    %v5341 = vor.u32 %v5337, %v5340
    %v5342 = vrot.slane %v5341, 4
    %v5344 = vshll.u32 %v4609, 16
    %v5346 = vrot.slane %v5344, 5
    %v5347 = vsel %vm442, %v5342, %v5346
    %v5348 = vshrl.u32 %v4609, 16
    %v5350 = vrot.slane %v5348, 4
    %v5351 = vor.u32 %v5350, %v5346
    %v5352 = vrot.slane %v5351, 4
    %v5354 = vshll.u32 %v4610, 16
    %v5356 = vrot.slane %v5354, 5
    %v5357 = vsel %vm442, %v5352, %v5356
    %v5359 = vshrl.u32 %v4611, 16
    %v5361 = vrot.slane %v5359, 4
    %v5362 = vshll.u32 %v4611, 16
    %v5364 = vrot.slane %v5362, 5
    %v5365 = vor.u32 %v5361, %v5364
    %v5366 = vrot.slane %v5365, 4
    %v5368 = vshll.u32 %v4612, 16
    %v5370 = vrot.slane %v5368, 5
    %v5371 = vsel %vm442, %v5366, %v5370
    %v5372 = vshrl.u32 %v4612, 16
    %v5374 = vrot.slane %v5372, 4
    %v5375 = vor.u32 %v5374, %v5370
    %v5376 = vrot.slane %v5375, 4
    %v5378 = vshll.u32 %v4613, 16
    %v5380 = vrot.slane %v5378, 5
    %v5381 = vsel %vm442, %v5376, %v5380
    %v5382 = vunpack.c.l.b16 %v4627
    %v5383 = vunpack.c.l.b16 %v4637
    %v5384 = vunpack.c.l.b16 %v4651
    %v5385 = vunpack.c.l.b16 %v4661
    %v5386 = vunpack.c.l.b16 %v4675
    %v5387 = vunpack.c.l.b16 %v4685
    %v5388 = vunpack.c.l.b16 %v4699
    %v5389 = vunpack.c.l.b16 %v4709
    %v5390 = vunpack.c.l.b16 %v4723
    %v5391 = vunpack.c.l.b16 %v4733
    %v5392 = vunpack.c.l.b16 %v4747
    %v5393 = vunpack.c.l.b16 %v4757
    %v5394 = vunpack.c.l.b16 %v4771
    %v5395 = vunpack.c.l.b16 %v4781
    %v5396 = vunpack.c.l.b16 %v4795
    %v5397 = vunpack.c.l.b16 %v4805
    %v5398 = vunpack.c.l.b16 %v4819
    %v5399 = vunpack.c.l.b16 %v4829
    %v5400 = vunpack.c.l.b16 %v4843
    %v5401 = vunpack.c.l.b16 %v4853
    %v5402 = vunpack.c.l.b16 %v4867
    %v5403 = vunpack.c.l.b16 %v4877
    %v5404 = vunpack.c.l.b16 %v4891
    %v5405 = vunpack.c.l.b16 %v4901
    %v5406 = vunpack.c.l.b16 %v4915
    %v5407 = vunpack.c.l.b16 %v4925
    %v5408 = vunpack.c.l.b16 %v4939
    %v5409 = vunpack.c.l.b16 %v4949
    %v5410 = vunpack.c.l.b16 %v4963
    %v5411 = vunpack.c.l.b16 %v4973
    %v5412 = vunpack.c.l.b16 %v4987
    %v5413 = vunpack.c.l.b16 %v4997
    %v5414 = vunpack.c.l.b16 %v5011
    %v5415 = vunpack.c.l.b16 %v5021
    %v5416 = vunpack.c.l.b16 %v5035
    %v5417 = vunpack.c.l.b16 %v5045
    %v5418 = vunpack.c.l.b16 %v5059
    %v5419 = vunpack.c.l.b16 %v5069
    %v5420 = vunpack.c.l.b16 %v5083
    %v5421 = vunpack.c.l.b16 %v5093
    %v5422 = vunpack.c.l.b16 %v5107
    %v5423 = vunpack.c.l.b16 %v5117
    %v5424 = vunpack.c.l.b16 %v5131
    %v5425 = vunpack.c.l.b16 %v5141
    %v5426 = vunpack.c.l.b16 %v5155
    %v5427 = vunpack.c.l.b16 %v5165
    %v5428 = vunpack.c.l.b16 %v5179
    %v5429 = vunpack.c.l.b16 %v5189
    %v5430 = vunpack.c.l.b16 %v5203
    %v5431 = vunpack.c.l.b16 %v5213
    %v5432 = vunpack.c.l.b16 %v5227
    %v5433 = vunpack.c.l.b16 %v5237
    %v5434 = vunpack.c.l.b16 %v5251
    %v5435 = vunpack.c.l.b16 %v5261
    %v5436 = vunpack.c.l.b16 %v5275
    %v5437 = vunpack.c.l.b16 %v5285
    %v5438 = vunpack.c.l.b16 %v5299
    %v5439 = vunpack.c.l.b16 %v5309
    %v5440 = vunpack.c.l.b16 %v5323
    %v5441 = vunpack.c.l.b16 %v5333
    %v5442 = vunpack.c.l.b16 %v5347
    %v5443 = vunpack.c.l.b16 %v5357
    %v5444 = vunpack.c.l.b16 %v5371
    %v5445 = vunpack.c.l.b16 %v5381
    %v5446 = vpack.c.b16 %v5383, %v5382
    %v5447 = vpack.c.b16 %v5385, %v5384
    %v5448 = vpack.c.b16 %v5387, %v5386
    %v5449 = vpack.c.b16 %v5389, %v5388
    %v5450 = vpack.c.b16 %v5391, %v5390
    %v5451 = vpack.c.b16 %v5393, %v5392
    %v5452 = vpack.c.b16 %v5395, %v5394
    %v5453 = vpack.c.b16 %v5397, %v5396
    %v5454 = vpack.c.b16 %v5399, %v5398
    %v5455 = vpack.c.b16 %v5401, %v5400
    %v5456 = vpack.c.b16 %v5403, %v5402
    %v5457 = vpack.c.b16 %v5405, %v5404
    %v5458 = vpack.c.b16 %v5407, %v5406
    %v5459 = vpack.c.b16 %v5409, %v5408
    %v5460 = vpack.c.b16 %v5411, %v5410
    %v5461 = vpack.c.b16 %v5413, %v5412
    %v5462 = vpack.c.b16 %v5415, %v5414
    %v5463 = vpack.c.b16 %v5417, %v5416
    %v5464 = vpack.c.b16 %v5419, %v5418
    %v5465 = vpack.c.b16 %v5421, %v5420
    %v5466 = vpack.c.b16 %v5423, %v5422
    %v5467 = vpack.c.b16 %v5425, %v5424
    %v5468 = vpack.c.b16 %v5427, %v5426
    %v5469 = vpack.c.b16 %v5429, %v5428
    %v5470 = vpack.c.b16 %v5431, %v5430
    %v5471 = vpack.c.b16 %v5433, %v5432
    %v5472 = vpack.c.b16 %v5435, %v5434
    %v5473 = vpack.c.b16 %v5437, %v5436
    %v5474 = vpack.c.b16 %v5439, %v5438
    %v5475 = vpack.c.b16 %v5441, %v5440
    %v5476 = vpack.c.b16 %v5443, %v5442
    %v5477 = vpack.c.b16 %v5445, %v5444
    %5478 = vrot.lane.b32.xlu0 %v5446, 28
    %v5479 = vpop.permute.xlu0 %5478
    %5480 = vrot.lane.b32.xlu0 %v5447, 28
    %v5481 = vpop.permute.xlu0 %5480
    %5482 = vrot.lane.b32.xlu0 %v5448, 28
    %v5483 = vpop.permute.xlu0 %5482
    %5484 = vrot.lane.b32.xlu0 %v5449, 28
    %v5485 = vpop.permute.xlu0 %5484
    %5486 = vrot.lane.b32.xlu0 %v5450, 28
    %v5487 = vpop.permute.xlu0 %5486
    %5488 = vrot.lane.b32.xlu0 %v5451, 28
    %v5489 = vpop.permute.xlu0 %5488
    %5490 = vrot.lane.b32.xlu0 %v5452, 28
    %v5491 = vpop.permute.xlu0 %5490
    %5492 = vrot.lane.b32.xlu0 %v5453, 28
    %v5493 = vpop.permute.xlu0 %5492
    %5494 = vrot.lane.b32.xlu0 %v5454, 28
    %v5495 = vpop.permute.xlu0 %5494
    %5496 = vrot.lane.b32.xlu0 %v5455, 28
    %v5497 = vpop.permute.xlu0 %5496
    %5498 = vrot.lane.b32.xlu0 %v5456, 28
    %v5499 = vpop.permute.xlu0 %5498
    %5500 = vrot.lane.b32.xlu0 %v5457, 28
    %v5501 = vpop.permute.xlu0 %5500
    %5502 = vrot.lane.b32.xlu0 %v5458, 28
    %v5503 = vpop.permute.xlu0 %5502
    %5504 = vrot.lane.b32.xlu0 %v5459, 28
    %v5505 = vpop.permute.xlu0 %5504
    %5506 = vrot.lane.b32.xlu0 %v5460, 28
    %v5507 = vpop.permute.xlu0 %5506
    %5508 = vrot.lane.b32.xlu0 %v5461, 28
    %v5509 = vpop.permute.xlu0 %5508
    %5510 = vrot.lane.b32.xlu0 %v5462, 28
    %v5511 = vpop.permute.xlu0 %5510
    %5512 = vrot.lane.b32.xlu0 %v5463, 28
    %v5513 = vpop.permute.xlu0 %5512
    %5514 = vrot.lane.b32.xlu0 %v5464, 28
    %v5515 = vpop.permute.xlu0 %5514
    %5516 = vrot.lane.b32.xlu0 %v5465, 28
    %v5517 = vpop.permute.xlu0 %5516
    %5518 = vrot.lane.b32.xlu0 %v5466, 28
    %v5519 = vpop.permute.xlu0 %5518
    %5520 = vrot.lane.b32.xlu0 %v5467, 28
    %v5521 = vpop.permute.xlu0 %5520
    %5522 = vrot.lane.b32.xlu0 %v5468, 28
    %v5523 = vpop.permute.xlu0 %5522
    %5524 = vrot.lane.b32.xlu0 %v5469, 28
    %v5525 = vpop.permute.xlu0 %5524
    %5526 = vrot.lane.b32.xlu0 %v5470, 28
    %v5527 = vpop.permute.xlu0 %5526
    %5528 = vrot.lane.b32.xlu0 %v5471, 28
    %v5529 = vpop.permute.xlu0 %5528
    %5530 = vrot.lane.b32.xlu0 %v5472, 28
    %v5531 = vpop.permute.xlu0 %5530
    %5532 = vrot.lane.b32.xlu0 %v5473, 28
    %v5533 = vpop.permute.xlu0 %5532
    %5534 = vrot.lane.b32.xlu0 %v5474, 28
    %v5535 = vpop.permute.xlu0 %5534
    %5536 = vrot.lane.b32.xlu0 %v5475, 28
    %v5537 = vpop.permute.xlu0 %5536
    %5538 = vrot.lane.b32.xlu0 %v5476, 28
    %v5539 = vpop.permute.xlu0 %5538
    %5540 = vrot.lane.b32.xlu0 %v5477, 28
    %v5541 = vpop.permute.xlu0 %5540
    %vm5574 = vcmask 261344
    %5575 = vst.msk [vmem:[#allocation2] sm:$0xff] %vm5574, %v5479
    %5576 = vst.msk [vmem:[#allocation2 + $0x8] sm:$0xff] %vm5574, %v5481
    %5577 = vst.msk [vmem:[#allocation2 + $0x10] sm:$0xff] %vm5574, %v5483
    %5578 = vst.msk [vmem:[#allocation2 + $0x18] sm:$0xff] %vm5574, %v5485
    %5579 = vst.msk [vmem:[#allocation2 + $0x20] sm:$0xff] %vm5574, %v5487
    %5580 = vst.msk [vmem:[#allocation2 + $0x28] sm:$0xff] %vm5574, %v5489
    %5581 = vst.msk [vmem:[#allocation2 + $0x30] sm:$0xff] %vm5574, %v5491
    %5582 = vst.msk [vmem:[#allocation2 + $0x38] sm:$0xff] %vm5574, %v5493
    %5583 = vst.msk [vmem:[#allocation2 + $0x40] sm:$0xff] %vm5574, %v5495
    %5584 = vst.msk [vmem:[#allocation2 + $0x48] sm:$0xff] %vm5574, %v5497
    %5585 = vst.msk [vmem:[#allocation2 + $0x50] sm:$0xff] %vm5574, %v5499
    %5586 = vst.msk [vmem:[#allocation2 + $0x58] sm:$0xff] %vm5574, %v5501
    %5587 = vst.msk [vmem:[#allocation2 + $0x60] sm:$0xff] %vm5574, %v5503
    %5588 = vst.msk [vmem:[#allocation2 + $0x68] sm:$0xff] %vm5574, %v5505
    %5589 = vst.msk [vmem:[#allocation2 + $0x70] sm:$0xff] %vm5574, %v5507
    %5590 = vst.msk [vmem:[#allocation2 + $0x78] sm:$0xff] %vm5574, %v5509
    %5591 = vst.msk [vmem:[#allocation2 + $0x80] sm:$0xff] %vm5574, %v5511
    %5592 = vst.msk [vmem:[#allocation2 + $0x88] sm:$0xff] %vm5574, %v5513
    %5593 = vst.msk [vmem:[#allocation2 + $0x90] sm:$0xff] %vm5574, %v5515
    %5594 = vst.msk [vmem:[#allocation2 + $0x98] sm:$0xff] %vm5574, %v5517
    %5595 = vst.msk [vmem:[#allocation2 + $0xa0] sm:$0xff] %vm5574, %v5519
    %5596 = vst.msk [vmem:[#allocation2 + $0xa8] sm:$0xff] %vm5574, %v5521
    %5597 = vst.msk [vmem:[#allocation2 + $0xb0] sm:$0xff] %vm5574, %v5523
    %5598 = vst.msk [vmem:[#allocation2 + $0xb8] sm:$0xff] %vm5574, %v5525
    %5599 = vst.msk [vmem:[#allocation2 + $0xc0] sm:$0xff] %vm5574, %v5527
    %5600 = vst.msk [vmem:[#allocation2 + $0xc8] sm:$0xff] %vm5574, %v5529
    %5601 = vst.msk [vmem:[#allocation2 + $0xd0] sm:$0xff] %vm5574, %v5531
    %5602 = vst.msk [vmem:[#allocation2 + $0xd8] sm:$0xff] %vm5574, %v5533
    %5603 = vst.msk [vmem:[#allocation2 + $0xe0] sm:$0xff] %vm5574, %v5535
    %5604 = vst.msk [vmem:[#allocation2 + $0xe8] sm:$0xff] %vm5574, %v5537
    %5605 = vst.msk [vmem:[#allocation2 + $0xf0] sm:$0xff] %vm5574, %v5539
    %5606 = vst.msk [vmem:[#allocation2 + $0xf8] sm:$0xff] %vm5574, %v5541
    %v5607 = vld [vmem:[%s4164] sm:$0xe]
    %v5608 = vld [vmem:[%s4164 + $0x4] sm:$0xf]
    %v5609 = vld [vmem:[%s4164 + $0x8] sm:$0x1]
    %v5610 = vld [vmem:[%s4164 + $0xc] sm:$0xe]
    %v5611 = vld [vmem:[%s4164 + $0x10] sm:$0xf]
    %v5612 = vld [vmem:[%s4164 + $0x14] sm:$0x1]
    %v5613 = vld [vmem:[%s4164 + $0x18] sm:$0xe]
    %v5614 = vld [vmem:[%s4164 + $0x1c] sm:$0xf]
    %v5615 = vld [vmem:[%s4164 + $0x20] sm:$0x1]
    %v5616 = vld [vmem:[%s4164 + $0x24] sm:$0xe]
    %v5617 = vld [vmem:[%s4164 + $0x28] sm:$0xf]
    %v5618 = vld [vmem:[%s4164 + $0x2c] sm:$0x1]
    %v5619 = vld [vmem:[%s4164 + $0x30] sm:$0xe]
    %v5620 = vld [vmem:[%s4164 + $0x34] sm:$0xf]
    %v5621 = vld [vmem:[%s4164 + $0x38] sm:$0x1]
    %v5622 = vld [vmem:[%s4164 + $0x3c] sm:$0xe]
    %v5623 = vld [vmem:[%s4164 + $0x40] sm:$0xf]
    %v5624 = vld [vmem:[%s4164 + $0x44] sm:$0x1]
    %v5625 = vld [vmem:[%s4164 + $0x48] sm:$0xe]
    %v5626 = vld [vmem:[%s4164 + $0x4c] sm:$0xf]
    %v5627 = vld [vmem:[%s4164 + $0x50] sm:$0x1]
    %v5628 = vld [vmem:[%s4164 + $0x54] sm:$0xe]
    %v5629 = vld [vmem:[%s4164 + $0x58] sm:$0xf]
    %v5630 = vld [vmem:[%s4164 + $0x5c] sm:$0x1]
    %v5631 = vld [vmem:[%s4164 + $0x60] sm:$0xe]
    %v5632 = vld [vmem:[%s4164 + $0x64] sm:$0xf]
    %v5633 = vld [vmem:[%s4164 + $0x68] sm:$0x1]
    %v5634 = vld [vmem:[%s4164 + $0x6c] sm:$0xe]
    %v5635 = vld [vmem:[%s4164 + $0x70] sm:$0xf]
    %v5636 = vld [vmem:[%s4164 + $0x74] sm:$0x1]
    %v5637 = vld [vmem:[%s4164 + $0x78] sm:$0xe]
    %v5638 = vld [vmem:[%s4164 + $0x7c] sm:$0xf]
    %v5639 = vld [vmem:[%s4164 + $0x80] sm:$0x1]
    %v5640 = vld [vmem:[%s4164 + $0x84] sm:$0xe]
    %v5641 = vld [vmem:[%s4164 + $0x88] sm:$0xf]
    %v5642 = vld [vmem:[%s4164 + $0x8c] sm:$0x1]
    %v5643 = vld [vmem:[%s4164 + $0x90] sm:$0xe]
    %v5644 = vld [vmem:[%s4164 + $0x94] sm:$0xf]
    %v5645 = vld [vmem:[%s4164 + $0x98] sm:$0x1]
    %v5646 = vld [vmem:[%s4164 + $0x9c] sm:$0xe]
    %v5647 = vld [vmem:[%s4164 + $0xa0] sm:$0xf]
    %v5648 = vld [vmem:[%s4164 + $0xa4] sm:$0x1]
    %v5649 = vld [vmem:[%s4164 + $0xa8] sm:$0xe]
    %v5650 = vld [vmem:[%s4164 + $0xac] sm:$0xf]
    %v5651 = vld [vmem:[%s4164 + $0xb0] sm:$0x1]
    %v5652 = vld [vmem:[%s4164 + $0xb4] sm:$0xe]
    %v5653 = vld [vmem:[%s4164 + $0xb8] sm:$0xf]
    %v5654 = vld [vmem:[%s4164 + $0xbc] sm:$0x1]
    %v5655 = vld [vmem:[%s4164 + $0xd8] sm:$0xe]
    %v5656 = vld [vmem:[%s4164 + $0xdc] sm:$0xf]
    %v5657 = vld [vmem:[%s4164 + $0xe0] sm:$0x1]
    %v5658 = vld [vmem:[%s4164 + $0xe4] sm:$0xe]
    %v5659 = vld [vmem:[%s4164 + $0xe8] sm:$0xf]
    %v5660 = vld [vmem:[%s4164 + $0xec] sm:$0x1]
    %v5661 = vld [vmem:[%s4164 + $0xf0] sm:$0xe]
    %v5662 = vld [vmem:[%s4164 + $0xf4] sm:$0xf]
    %v5663 = vld [vmem:[%s4164 + $0xf8] sm:$0x1]
    %v5664 = vld [vmem:[%s4164 + $0xfc] sm:$0xe]
    %v5665 = vld [vmem:[%s4164 + $0x100] sm:$0xf]
    %v5666 = vld [vmem:[%s4164 + $0x104] sm:$0x1]
    %v5667 = vld [vmem:[%s4164 + $0x108] sm:$0xe]
    %v5668 = vld [vmem:[%s4164 + $0x10c] sm:$0xf]
    %v5669 = vld [vmem:[%s4164 + $0x110] sm:$0x1]
    %v5670 = vld [vmem:[%s4164 + $0x114] sm:$0xe]
    %v5671 = vld [vmem:[%s4164 + $0x118] sm:$0xf]
    %v5672 = vld [vmem:[%s4164 + $0x11c] sm:$0x1]
    %v5673 = vld [vmem:[%s4164 + $0x120] sm:$0xe]
    %v5674 = vld [vmem:[%s4164 + $0x124] sm:$0xf]
    %v5675 = vld [vmem:[%s4164 + $0x128] sm:$0x1]
    %v5676 = vld [vmem:[%s4164 + $0x12c] sm:$0xe]
    %v5677 = vld [vmem:[%s4164 + $0x130] sm:$0xf]
    %v5678 = vld [vmem:[%s4164 + $0x134] sm:$0x1]
    %v5679 = vld [vmem:[%s4164 + $0x138] sm:$0xe]
    %v5680 = vld [vmem:[%s4164 + $0x13c] sm:$0xf]
    %v5681 = vld [vmem:[%s4164 + $0x140] sm:$0x1]
    %v5682 = vld [vmem:[%s4164 + $0x144] sm:$0xe]
    %v5683 = vld [vmem:[%s4164 + $0x148] sm:$0xf]
    %v5684 = vld [vmem:[%s4164 + $0x14c] sm:$0x1]
    %v5685 = vld [vmem:[%s4164 + $0x150] sm:$0xe]
    %v5686 = vld [vmem:[%s4164 + $0x154] sm:$0xf]
    %v5687 = vld [vmem:[%s4164 + $0x158] sm:$0x1]
    %v5688 = vld [vmem:[%s4164 + $0x15c] sm:$0xe]
    %v5689 = vld [vmem:[%s4164 + $0x160] sm:$0xf]
    %v5690 = vld [vmem:[%s4164 + $0x164] sm:$0x1]
    %v5691 = vld [vmem:[%s4164 + $0x168] sm:$0xe]
    %v5692 = vld [vmem:[%s4164 + $0x16c] sm:$0xf]
    %v5693 = vld [vmem:[%s4164 + $0x170] sm:$0x1]
    %v5694 = vld [vmem:[%s4164 + $0x174] sm:$0xe]
    %v5695 = vld [vmem:[%s4164 + $0x178] sm:$0xf]
    %v5696 = vld [vmem:[%s4164 + $0x17c] sm:$0x1]
    %v5697 = vld [vmem:[%s4164 + $0x180] sm:$0xe]
    %v5698 = vld [vmem:[%s4164 + $0x184] sm:$0xf]
    %v5699 = vld [vmem:[%s4164 + $0x188] sm:$0x1]
    %v5700 = vld [vmem:[%s4164 + $0x18c] sm:$0xe]
    %v5701 = vld [vmem:[%s4164 + $0x190] sm:$0xf]
    %v5702 = vld [vmem:[%s4164 + $0x194] sm:$0x1]
    %v5799 = vrot.slane %v5607, 5
    %v5800 = vrot.slane %v5799, 4
    %v5801 = vrot.slane %v5608, 5
    %v5802 = vsel %vm1630, %v5800, %v5801
    %v5803 = vrot.slane %v5801, 4
    %v5804 = vrot.slane %v5609, 5
    %v5805 = vsel %vm1630, %v5803, %v5804
    %v5806 = vrot.slane %v5610, 5
    %v5807 = vrot.slane %v5806, 4
    %v5808 = vrot.slane %v5611, 5
    %v5809 = vsel %vm1630, %v5807, %v5808
    %v5810 = vrot.slane %v5808, 4
    %v5811 = vrot.slane %v5612, 5
    %v5812 = vsel %vm1630, %v5810, %v5811
    %v5813 = vrot.slane %v5613, 5
    %v5814 = vrot.slane %v5813, 4
    %v5815 = vrot.slane %v5614, 5
    %v5816 = vsel %vm1630, %v5814, %v5815
    %v5817 = vrot.slane %v5815, 4
    %v5818 = vrot.slane %v5615, 5
    %v5819 = vsel %vm1630, %v5817, %v5818
    %v5820 = vrot.slane %v5616, 5
    %v5821 = vrot.slane %v5820, 4
    %v5822 = vrot.slane %v5617, 5
    %v5823 = vsel %vm1630, %v5821, %v5822
    %v5824 = vrot.slane %v5822, 4
    %v5825 = vrot.slane %v5618, 5
    %v5826 = vsel %vm1630, %v5824, %v5825
    %v5827 = vrot.slane %v5619, 5
    %v5828 = vrot.slane %v5827, 4
    %v5829 = vrot.slane %v5620, 5
    %v5830 = vsel %vm1630, %v5828, %v5829
    %v5831 = vrot.slane %v5829, 4
    %v5832 = vrot.slane %v5621, 5
    %v5833 = vsel %vm1630, %v5831, %v5832
    %v5834 = vrot.slane %v5622, 5
    %v5835 = vrot.slane %v5834, 4
    %v5836 = vrot.slane %v5623, 5
    %v5837 = vsel %vm1630, %v5835, %v5836
    %v5838 = vrot.slane %v5836, 4
    %v5839 = vrot.slane %v5624, 5
    %v5840 = vsel %vm1630, %v5838, %v5839
    %v5841 = vrot.slane %v5625, 5
    %v5842 = vrot.slane %v5841, 4
    %v5843 = vrot.slane %v5626, 5
    %v5844 = vsel %vm1630, %v5842, %v5843
    %v5845 = vrot.slane %v5843, 4
    %v5846 = vrot.slane %v5627, 5
    %v5847 = vsel %vm1630, %v5845, %v5846
    %v5848 = vrot.slane %v5628, 5
    %v5849 = vrot.slane %v5848, 4
    %v5850 = vrot.slane %v5629, 5
    %v5851 = vsel %vm1630, %v5849, %v5850
    %v5852 = vrot.slane %v5850, 4
    %v5853 = vrot.slane %v5630, 5
    %v5854 = vsel %vm1630, %v5852, %v5853
    %v5855 = vrot.slane %v5631, 5
    %v5856 = vrot.slane %v5855, 4
    %v5857 = vrot.slane %v5632, 5
    %v5858 = vsel %vm1630, %v5856, %v5857
    %v5859 = vrot.slane %v5857, 4
    %v5860 = vrot.slane %v5633, 5
    %v5861 = vsel %vm1630, %v5859, %v5860
    %v5862 = vrot.slane %v5634, 5
    %v5863 = vrot.slane %v5862, 4
    %v5864 = vrot.slane %v5635, 5
    %v5865 = vsel %vm1630, %v5863, %v5864
    %v5866 = vrot.slane %v5864, 4
    %v5867 = vrot.slane %v5636, 5
    %v5868 = vsel %vm1630, %v5866, %v5867
    %v5869 = vrot.slane %v5637, 5
    %v5870 = vrot.slane %v5869, 4
    %v5871 = vrot.slane %v5638, 5
    %v5872 = vsel %vm1630, %v5870, %v5871
    %v5873 = vrot.slane %v5871, 4
    %v5874 = vrot.slane %v5639, 5
    %v5875 = vsel %vm1630, %v5873, %v5874
    %v5876 = vrot.slane %v5640, 5
    %v5877 = vrot.slane %v5876, 4
    %v5878 = vrot.slane %v5641, 5
    %v5879 = vsel %vm1630, %v5877, %v5878
    %v5880 = vrot.slane %v5878, 4
    %v5881 = vrot.slane %v5642, 5
    %v5882 = vsel %vm1630, %v5880, %v5881
    %v5883 = vrot.slane %v5643, 5
    %v5884 = vrot.slane %v5883, 4
    %v5885 = vrot.slane %v5644, 5
    %v5886 = vsel %vm1630, %v5884, %v5885
    %v5887 = vrot.slane %v5885, 4
    %v5888 = vrot.slane %v5645, 5
    %v5889 = vsel %vm1630, %v5887, %v5888
    %v5890 = vrot.slane %v5646, 5
    %v5891 = vrot.slane %v5890, 4
    %v5892 = vrot.slane %v5647, 5
    %v5893 = vsel %vm1630, %v5891, %v5892
    %v5894 = vrot.slane %v5892, 4
    %v5895 = vrot.slane %v5648, 5
    %v5896 = vsel %vm1630, %v5894, %v5895
    %v5897 = vrot.slane %v5649, 5
    %v5898 = vrot.slane %v5897, 4
    %v5899 = vrot.slane %v5650, 5
    %v5900 = vsel %vm1630, %v5898, %v5899
    %v5901 = vrot.slane %v5899, 4
    %v5902 = vrot.slane %v5651, 5
    %v5903 = vsel %vm1630, %v5901, %v5902
    %v5904 = vrot.slane %v5652, 5
    %v5905 = vrot.slane %v5904, 4
    %v5906 = vrot.slane %v5653, 5
    %v5907 = vsel %vm1630, %v5905, %v5906
    %v5908 = vrot.slane %v5906, 4
    %v5909 = vrot.slane %v5654, 5
    %v5910 = vsel %vm1630, %v5908, %v5909
    %v5911 = vrot.slane %v5655, 5
    %v5912 = vrot.slane %v5911, 4
    %v5913 = vrot.slane %v5656, 5
    %v5914 = vsel %vm1630, %v5912, %v5913
    %v5915 = vrot.slane %v5913, 4
    %v5916 = vrot.slane %v5657, 5
    %v5917 = vsel %vm1630, %v5915, %v5916
    %v5918 = vrot.slane %v5658, 5
    %v5919 = vrot.slane %v5918, 4
    %v5920 = vrot.slane %v5659, 5
    %v5921 = vsel %vm1630, %v5919, %v5920
    %v5922 = vrot.slane %v5920, 4
    %v5923 = vrot.slane %v5660, 5
    %v5924 = vsel %vm1630, %v5922, %v5923
    %v5925 = vrot.slane %v5661, 5
    %v5926 = vrot.slane %v5925, 4
    %v5927 = vrot.slane %v5662, 5
    %v5928 = vsel %vm1630, %v5926, %v5927
    %v5929 = vrot.slane %v5927, 4
    %v5930 = vrot.slane %v5663, 5
    %v5931 = vsel %vm1630, %v5929, %v5930
    %v5932 = vrot.slane %v5664, 5
    %v5933 = vrot.slane %v5932, 4
    %v5934 = vrot.slane %v5665, 5
    %v5935 = vsel %vm1630, %v5933, %v5934
    %v5936 = vrot.slane %v5934, 4
    %v5937 = vrot.slane %v5666, 5
    %v5938 = vsel %vm1630, %v5936, %v5937
    %v5939 = vrot.slane %v5667, 5
    %v5940 = vrot.slane %v5939, 4
    %v5941 = vrot.slane %v5668, 5
    %v5942 = vsel %vm1630, %v5940, %v5941
    %v5943 = vrot.slane %v5941, 4
    %v5944 = vrot.slane %v5669, 5
    %v5945 = vsel %vm1630, %v5943, %v5944
    %v5946 = vrot.slane %v5670, 5
    %v5947 = vrot.slane %v5946, 4
    %v5948 = vrot.slane %v5671, 5
    %v5949 = vsel %vm1630, %v5947, %v5948
    %v5950 = vrot.slane %v5948, 4
    %v5951 = vrot.slane %v5672, 5
    %v5952 = vsel %vm1630, %v5950, %v5951
    %v5953 = vrot.slane %v5673, 5
    %v5954 = vrot.slane %v5953, 4
    %v5955 = vrot.slane %v5674, 5
    %v5956 = vsel %vm1630, %v5954, %v5955
    %v5957 = vrot.slane %v5955, 4
    %v5958 = vrot.slane %v5675, 5
    %v5959 = vsel %vm1630, %v5957, %v5958
    %v5960 = vrot.slane %v5676, 5
    %v5961 = vrot.slane %v5960, 4
    %v5962 = vrot.slane %v5677, 5
    %v5963 = vsel %vm1630, %v5961, %v5962
    %v5964 = vrot.slane %v5962, 4
    %v5965 = vrot.slane %v5678, 5
    %v5966 = vsel %vm1630, %v5964, %v5965
    %v5967 = vrot.slane %v5679, 5
    %v5968 = vrot.slane %v5967, 4
    %v5969 = vrot.slane %v5680, 5
    %v5970 = vsel %vm1630, %v5968, %v5969
    %v5971 = vrot.slane %v5969, 4
    %v5972 = vrot.slane %v5681, 5
    %v5973 = vsel %vm1630, %v5971, %v5972
    %v5974 = vrot.slane %v5682, 5
    %v5975 = vrot.slane %v5974, 4
    %v5976 = vrot.slane %v5683, 5
    %v5977 = vsel %vm1630, %v5975, %v5976
    %v5978 = vrot.slane %v5976, 4
    %v5979 = vrot.slane %v5684, 5
    %v5980 = vsel %vm1630, %v5978, %v5979
    %v5981 = vrot.slane %v5685, 5
    %v5982 = vrot.slane %v5981, 4
    %v5983 = vrot.slane %v5686, 5
    %v5984 = vsel %vm1630, %v5982, %v5983
    %v5985 = vrot.slane %v5983, 4
    %v5986 = vrot.slane %v5687, 5
    %v5987 = vsel %vm1630, %v5985, %v5986
    %v5988 = vrot.slane %v5688, 5
    %v5989 = vrot.slane %v5988, 4
    %v5990 = vrot.slane %v5689, 5
    %v5991 = vsel %vm1630, %v5989, %v5990
    %v5992 = vrot.slane %v5990, 4
    %v5993 = vrot.slane %v5690, 5
    %v5994 = vsel %vm1630, %v5992, %v5993
    %v5995 = vrot.slane %v5691, 5
    %v5996 = vrot.slane %v5995, 4
    %v5997 = vrot.slane %v5692, 5
    %v5998 = vsel %vm1630, %v5996, %v5997
    %v5999 = vrot.slane %v5997, 4
    %v6000 = vrot.slane %v5693, 5
    %v6001 = vsel %vm1630, %v5999, %v6000
    %v6002 = vrot.slane %v5694, 5
    %v6003 = vrot.slane %v6002, 4
    %v6004 = vrot.slane %v5695, 5
    %v6005 = vsel %vm1630, %v6003, %v6004
    %v6006 = vrot.slane %v6004, 4
    %v6007 = vrot.slane %v5696, 5
    %v6008 = vsel %vm1630, %v6006, %v6007
    %v6009 = vrot.slane %v5697, 5
    %v6010 = vrot.slane %v6009, 4
    %v6011 = vrot.slane %v5698, 5
    %v6012 = vsel %vm1630, %v6010, %v6011
    %v6013 = vrot.slane %v6011, 4
    %v6014 = vrot.slane %v5699, 5
    %v6015 = vsel %vm1630, %v6013, %v6014
    %v6016 = vrot.slane %v5700, 5
    %v6017 = vrot.slane %v6016, 4
    %v6018 = vrot.slane %v5701, 5
    %v6019 = vsel %vm1630, %v6017, %v6018
    %v6020 = vrot.slane %v6018, 4
    %v6021 = vrot.slane %v5702, 5
    %v6022 = vsel %vm1630, %v6020, %v6021
    %v6023 = vunpack.c.l.b16 %v5802
    %v6024 = vunpack.c.l.b16 %v5805
    %v6025 = vunpack.c.l.b16 %v5809
    %v6026 = vunpack.c.l.b16 %v5812
    %v6027 = vunpack.c.l.b16 %v5816
    %v6028 = vunpack.c.l.b16 %v5819
    %v6029 = vunpack.c.l.b16 %v5823
    %v6030 = vunpack.c.l.b16 %v5826
    %v6031 = vunpack.c.l.b16 %v5830
    %v6032 = vunpack.c.l.b16 %v5833
    %v6033 = vunpack.c.l.b16 %v5837
    %v6034 = vunpack.c.l.b16 %v5840
    %v6035 = vunpack.c.l.b16 %v5844
    %v6036 = vunpack.c.l.b16 %v5847
    %v6037 = vunpack.c.l.b16 %v5851
    %v6038 = vunpack.c.l.b16 %v5854
    %v6039 = vunpack.c.l.b16 %v5858
    %v6040 = vunpack.c.l.b16 %v5861
    %v6041 = vunpack.c.l.b16 %v5865
    %v6042 = vunpack.c.l.b16 %v5868
    %v6043 = vunpack.c.l.b16 %v5872
    %v6044 = vunpack.c.l.b16 %v5875
    %v6045 = vunpack.c.l.b16 %v5879
    %v6046 = vunpack.c.l.b16 %v5882
    %v6047 = vunpack.c.l.b16 %v5886
    %v6048 = vunpack.c.l.b16 %v5889
    %v6049 = vunpack.c.l.b16 %v5893
    %v6050 = vunpack.c.l.b16 %v5896
    %v6051 = vunpack.c.l.b16 %v5900
    %v6052 = vunpack.c.l.b16 %v5903
    %v6053 = vunpack.c.l.b16 %v5907
    %v6054 = vunpack.c.l.b16 %v5910
    %v6055 = vunpack.c.l.b16 %v5914
    %v6056 = vunpack.c.l.b16 %v5917
    %v6057 = vunpack.c.l.b16 %v5921
    %v6058 = vunpack.c.l.b16 %v5924
    %v6059 = vunpack.c.l.b16 %v5928
    %v6060 = vunpack.c.l.b16 %v5931
    %v6061 = vunpack.c.l.b16 %v5935
    %v6062 = vunpack.c.l.b16 %v5938
    %v6063 = vunpack.c.l.b16 %v5942
    %v6064 = vunpack.c.l.b16 %v5945
    %v6065 = vunpack.c.l.b16 %v5949
    %v6066 = vunpack.c.l.b16 %v5952
    %v6067 = vunpack.c.l.b16 %v5956
    %v6068 = vunpack.c.l.b16 %v5959
    %v6069 = vunpack.c.l.b16 %v5963
    %v6070 = vunpack.c.l.b16 %v5966
    %v6071 = vunpack.c.l.b16 %v5970
    %v6072 = vunpack.c.l.b16 %v5973
    %v6073 = vunpack.c.l.b16 %v5977
    %v6074 = vunpack.c.l.b16 %v5980
    %v6075 = vunpack.c.l.b16 %v5984
    %v6076 = vunpack.c.l.b16 %v5987
    %v6077 = vunpack.c.l.b16 %v5991
    %v6078 = vunpack.c.l.b16 %v5994
    %v6079 = vunpack.c.l.b16 %v5998
    %v6080 = vunpack.c.l.b16 %v6001
    %v6081 = vunpack.c.l.b16 %v6005
    %v6082 = vunpack.c.l.b16 %v6008
    %v6083 = vunpack.c.l.b16 %v6012
    %v6084 = vunpack.c.l.b16 %v6015
    %v6085 = vunpack.c.l.b16 %v6019
    %v6086 = vunpack.c.l.b16 %v6022
    %v6087 = vpack.c.b16 %v6024, %v6023
    %v6088 = vpack.c.b16 %v6026, %v6025
    %v6089 = vpack.c.b16 %v6028, %v6027
    %v6090 = vpack.c.b16 %v6030, %v6029
    %v6091 = vpack.c.b16 %v6032, %v6031
    %v6092 = vpack.c.b16 %v6034, %v6033
    %v6093 = vpack.c.b16 %v6036, %v6035
    %v6094 = vpack.c.b16 %v6038, %v6037
    %v6095 = vpack.c.b16 %v6040, %v6039
    %v6096 = vpack.c.b16 %v6042, %v6041
    %v6097 = vpack.c.b16 %v6044, %v6043
    %v6098 = vpack.c.b16 %v6046, %v6045
    %v6099 = vpack.c.b16 %v6048, %v6047
    %v6100 = vpack.c.b16 %v6050, %v6049
    %v6101 = vpack.c.b16 %v6052, %v6051
    %v6102 = vpack.c.b16 %v6054, %v6053
    %v6103 = vpack.c.b16 %v6056, %v6055
    %v6104 = vpack.c.b16 %v6058, %v6057
    %v6105 = vpack.c.b16 %v6060, %v6059
    %v6106 = vpack.c.b16 %v6062, %v6061
    %v6107 = vpack.c.b16 %v6064, %v6063
    %v6108 = vpack.c.b16 %v6066, %v6065
    %v6109 = vpack.c.b16 %v6068, %v6067
    %v6110 = vpack.c.b16 %v6070, %v6069
    %v6111 = vpack.c.b16 %v6072, %v6071
    %v6112 = vpack.c.b16 %v6074, %v6073
    %v6113 = vpack.c.b16 %v6076, %v6075
    %v6114 = vpack.c.b16 %v6078, %v6077
    %v6115 = vpack.c.b16 %v6080, %v6079
    %v6116 = vpack.c.b16 %v6082, %v6081
    %v6117 = vpack.c.b16 %v6084, %v6083
    %v6118 = vpack.c.b16 %v6086, %v6085
    %6119 = vrot.lane.b32.xlu0 %v6087, 32
    %v6120 = vpop.permute.xlu0 %6119
    %6121 = vrot.lane.b32.xlu0 %v6088, 32
    %v6122 = vpop.permute.xlu0 %6121
    %6123 = vrot.lane.b32.xlu0 %v6089, 32
    %v6124 = vpop.permute.xlu0 %6123
    %6125 = vrot.lane.b32.xlu0 %v6090, 32
    %v6126 = vpop.permute.xlu0 %6125
    %6127 = vrot.lane.b32.xlu0 %v6091, 32
    %v6128 = vpop.permute.xlu0 %6127
    %6129 = vrot.lane.b32.xlu0 %v6092, 32
    %v6130 = vpop.permute.xlu0 %6129
    %6131 = vrot.lane.b32.xlu0 %v6093, 32
    %v6132 = vpop.permute.xlu0 %6131
    %6133 = vrot.lane.b32.xlu0 %v6094, 32
    %v6134 = vpop.permute.xlu0 %6133
    %6135 = vrot.lane.b32.xlu0 %v6095, 32
    %v6136 = vpop.permute.xlu0 %6135
    %6137 = vrot.lane.b32.xlu0 %v6096, 32
    %v6138 = vpop.permute.xlu0 %6137
    %6139 = vrot.lane.b32.xlu0 %v6097, 32
    %v6140 = vpop.permute.xlu0 %6139
    %6141 = vrot.lane.b32.xlu0 %v6098, 32
    %v6142 = vpop.permute.xlu0 %6141
    %6143 = vrot.lane.b32.xlu0 %v6099, 32
    %v6144 = vpop.permute.xlu0 %6143
    %6145 = vrot.lane.b32.xlu0 %v6100, 32
    %v6146 = vpop.permute.xlu0 %6145
    %6147 = vrot.lane.b32.xlu0 %v6101, 32
    %v6148 = vpop.permute.xlu0 %6147
    %6149 = vrot.lane.b32.xlu0 %v6102, 32
    %v6150 = vpop.permute.xlu0 %6149
    %6151 = vrot.lane.b32.xlu0 %v6103, 32
    %v6152 = vpop.permute.xlu0 %6151
    %6153 = vrot.lane.b32.xlu0 %v6104, 32
    %v6154 = vpop.permute.xlu0 %6153
    %6155 = vrot.lane.b32.xlu0 %v6105, 32
    %v6156 = vpop.permute.xlu0 %6155
    %6157 = vrot.lane.b32.xlu0 %v6106, 32
    %v6158 = vpop.permute.xlu0 %6157
    %6159 = vrot.lane.b32.xlu0 %v6107, 32
    %v6160 = vpop.permute.xlu0 %6159
    %6161 = vrot.lane.b32.xlu0 %v6108, 32
    %v6162 = vpop.permute.xlu0 %6161
    %6163 = vrot.lane.b32.xlu0 %v6109, 32
    %v6164 = vpop.permute.xlu0 %6163
    %6165 = vrot.lane.b32.xlu0 %v6110, 32
    %v6166 = vpop.permute.xlu0 %6165
    %6167 = vrot.lane.b32.xlu0 %v6111, 32
    %v6168 = vpop.permute.xlu0 %6167
    %6169 = vrot.lane.b32.xlu0 %v6112, 32
    %v6170 = vpop.permute.xlu0 %6169
    %6171 = vrot.lane.b32.xlu0 %v6113, 32
    %v6172 = vpop.permute.xlu0 %6171
    %6173 = vrot.lane.b32.xlu0 %v6114, 32
    %v6174 = vpop.permute.xlu0 %6173
    %6175 = vrot.lane.b32.xlu0 %v6115, 32
    %v6176 = vpop.permute.xlu0 %6175
    %6177 = vrot.lane.b32.xlu0 %v6116, 32
    %v6178 = vpop.permute.xlu0 %6177
    %6179 = vrot.lane.b32.xlu0 %v6117, 32
    %v6180 = vpop.permute.xlu0 %6179
    %6181 = vrot.lane.b32.xlu0 %v6118, 32
    %v6182 = vpop.permute.xlu0 %6181
    %vm6215 = vcmask 294144
    %6216 = vst.msk [vmem:[#allocation2] sm:$0xff] %vm6215, %v6120
    %6217 = vst.msk [vmem:[#allocation2 + $0x8] sm:$0xff] %vm6215, %v6122
    %6218 = vst.msk [vmem:[#allocation2 + $0x10] sm:$0xff] %vm6215, %v6124
    %6219 = vst.msk [vmem:[#allocation2 + $0x18] sm:$0xff] %vm6215, %v6126
    %6220 = vst.msk [vmem:[#allocation2 + $0x20] sm:$0xff] %vm6215, %v6128
    %6221 = vst.msk [vmem:[#allocation2 + $0x28] sm:$0xff] %vm6215, %v6130
    %6222 = vst.msk [vmem:[#allocation2 + $0x30] sm:$0xff] %vm6215, %v6132
    %6223 = vst.msk [vmem:[#allocation2 + $0x38] sm:$0xff] %vm6215, %v6134
    %6224 = vst.msk [vmem:[#allocation2 + $0x40] sm:$0xff] %vm6215, %v6136
    %6225 = vst.msk [vmem:[#allocation2 + $0x48] sm:$0xff] %vm6215, %v6138
    %6226 = vst.msk [vmem:[#allocation2 + $0x50] sm:$0xff] %vm6215, %v6140
    %6227 = vst.msk [vmem:[#allocation2 + $0x58] sm:$0xff] %vm6215, %v6142
    %6228 = vst.msk [vmem:[#allocation2 + $0x60] sm:$0xff] %vm6215, %v6144
    %6229 = vst.msk [vmem:[#allocation2 + $0x68] sm:$0xff] %vm6215, %v6146
    %6230 = vst.msk [vmem:[#allocation2 + $0x70] sm:$0xff] %vm6215, %v6148
    %6231 = vst.msk [vmem:[#allocation2 + $0x78] sm:$0xff] %vm6215, %v6150
    %6232 = vst.msk [vmem:[#allocation2 + $0x80] sm:$0xff] %vm6215, %v6152
    %6233 = vst.msk [vmem:[#allocation2 + $0x88] sm:$0xff] %vm6215, %v6154
    %6234 = vst.msk [vmem:[#allocation2 + $0x90] sm:$0xff] %vm6215, %v6156
    %6235 = vst.msk [vmem:[#allocation2 + $0x98] sm:$0xff] %vm6215, %v6158
    %6236 = vst.msk [vmem:[#allocation2 + $0xa0] sm:$0xff] %vm6215, %v6160
    %6237 = vst.msk [vmem:[#allocation2 + $0xa8] sm:$0xff] %vm6215, %v6162
    %6238 = vst.msk [vmem:[#allocation2 + $0xb0] sm:$0xff] %vm6215, %v6164
    %6239 = vst.msk [vmem:[#allocation2 + $0xb8] sm:$0xff] %vm6215, %v6166
    %6240 = vst.msk [vmem:[#allocation2 + $0xc0] sm:$0xff] %vm6215, %v6168
    %6241 = vst.msk [vmem:[#allocation2 + $0xc8] sm:$0xff] %vm6215, %v6170
    %6242 = vst.msk [vmem:[#allocation2 + $0xd0] sm:$0xff] %vm6215, %v6172
    %6243 = vst.msk [vmem:[#allocation2 + $0xd8] sm:$0xff] %vm6215, %v6174
    %6244 = vst.msk [vmem:[#allocation2 + $0xe0] sm:$0xff] %vm6215, %v6176
    %6245 = vst.msk [vmem:[#allocation2 + $0xe8] sm:$0xff] %vm6215, %v6178
    %6246 = vst.msk [vmem:[#allocation2 + $0xf0] sm:$0xff] %vm6215, %v6180
    %6247 = vst.msk [vmem:[#allocation2 + $0xf8] sm:$0xff] %vm6215, %v6182
    %v6248 = vld [vmem:[#allocation2] sm:$0xff]
    %v6249 = vld [vmem:[#allocation2 + $0x8] sm:$0xff]
    %v6250 = vld [vmem:[#allocation2 + $0x10] sm:$0xff]
    %v6251 = vld [vmem:[#allocation2 + $0x18] sm:$0xff]
    %v6252 = vld [vmem:[#allocation2 + $0x20] sm:$0xff]
    %v6253 = vld [vmem:[#allocation2 + $0x28] sm:$0xff]
    %v6254 = vld [vmem:[#allocation2 + $0x30] sm:$0xff]
    %v6255 = vld [vmem:[#allocation2 + $0x38] sm:$0xff]
    %v6256 = vld [vmem:[#allocation2 + $0x40] sm:$0xff]
    %v6257 = vld [vmem:[#allocation2 + $0x48] sm:$0xff]
    %v6258 = vld [vmem:[#allocation2 + $0x50] sm:$0xff]
    %v6259 = vld [vmem:[#allocation2 + $0x58] sm:$0xff]
    %v6260 = vld [vmem:[#allocation2 + $0x60] sm:$0xff]
    %v6261 = vld [vmem:[#allocation2 + $0x68] sm:$0xff]
    %v6262 = vld [vmem:[#allocation2 + $0x70] sm:$0xff]
    %v6263 = vld [vmem:[#allocation2 + $0x78] sm:$0xff]
    %v6264 = vld [vmem:[#allocation2 + $0x80] sm:$0xff]
    %v6265 = vld [vmem:[#allocation2 + $0x88] sm:$0xff]
    %v6266 = vld [vmem:[#allocation2 + $0x90] sm:$0xff]
    %v6267 = vld [vmem:[#allocation2 + $0x98] sm:$0xff]
    %v6268 = vld [vmem:[#allocation2 + $0xa0] sm:$0xff]
    %v6269 = vld [vmem:[#allocation2 + $0xa8] sm:$0xff]
    %v6270 = vld [vmem:[#allocation2 + $0xb0] sm:$0xff]
    %v6271 = vld [vmem:[#allocation2 + $0xb8] sm:$0xff]
    %v6272 = vld [vmem:[#allocation2 + $0xc0] sm:$0xff]
    %v6273 = vld [vmem:[#allocation2 + $0xc8] sm:$0xff]
    %v6274 = vld [vmem:[#allocation2 + $0xd0] sm:$0xff]
    %v6275 = vld [vmem:[#allocation2 + $0xd8] sm:$0xff]
    %v6276 = vld [vmem:[#allocation2 + $0xe0] sm:$0xff]
    %v6277 = vld [vmem:[#allocation2 + $0xe8] sm:$0xff]
    %v6278 = vld [vmem:[#allocation2 + $0xf0] sm:$0xff]
    %v6279 = vld [vmem:[#allocation2 + $0xf8] sm:$0xff]
    %v6280 = vld [vmem:[%s1] sm:$0xf]
    %v6281 = vld [vmem:[%s1 + $0x4] sm:$0xf]
    %v6282 = vld [vmem:[%s1 + $0x8] sm:$0xf]
    %v6283 = vld [vmem:[%s1 + $0xc] sm:$0xf]
    %v6284 = vld [vmem:[%s1 + $0x10] sm:$0xf]
    %v6285 = vld [vmem:[%s1 + $0x14] sm:$0xf]
    %v6286 = vld [vmem:[%s1 + $0x18] sm:$0xf]
    %v6287 = vld [vmem:[%s1 + $0x1c] sm:$0xf]
    %v6288 = vld [vmem:[%s1 + $0x20] sm:$0xf]
    %v6289 = vld [vmem:[%s1 + $0x24] sm:$0xf]
    %v6290 = vld [vmem:[%s1 + $0x28] sm:$0xf]
    %v6291 = vld [vmem:[%s1 + $0x2c] sm:$0xf]
    %v6292 = vld [vmem:[%s1 + $0x30] sm:$0xf]
    %v6293 = vld [vmem:[%s1 + $0x34] sm:$0xf]
    %v6294 = vld [vmem:[%s1 + $0x38] sm:$0xf]
    %v6295 = vld [vmem:[%s1 + $0x3c] sm:$0xf]
    %v6296 = vld [vmem:[%s2] sm:$0x1]
    %v6298 = vlaneseq
    %v6299 = vshrl.u32 %v6298, 7
    %v6300 = vsub.s32 0, %v6299
    %v6301 = vrot.slane %v6296, %v6300
    %v6319 = vunpack.c.l.b16 %v6280
    %v6320 = vunpack.c.l.b16 %v6281
    %v6321 = vunpack.c.l.b16 %v6282
    %v6322 = vunpack.c.l.b16 %v6283
    %v6323 = vunpack.c.l.b16 %v6284
    %v6324 = vunpack.c.l.b16 %v6285
    %v6325 = vunpack.c.l.b16 %v6286
    %v6326 = vunpack.c.l.b16 %v6287
    %v6327 = vunpack.c.l.b16 %v6288
    %v6328 = vunpack.c.l.b16 %v6289
    %v6329 = vunpack.c.l.b16 %v6290
    %v6330 = vunpack.c.l.b16 %v6291
    %v6331 = vunpack.c.l.b16 %v6292
    %v6332 = vunpack.c.l.b16 %v6293
    %v6333 = vunpack.c.l.b16 %v6294
    %v6334 = vunpack.c.l.b16 %v6295
    %v6335 = vpack.c.b16 %v6320, %v6319
    %v6336 = vpack.c.b16 %v6322, %v6321
    %v6337 = vpack.c.b16 %v6324, %v6323
    %v6338 = vpack.c.b16 %v6326, %v6325
    %v6339 = vpack.c.b16 %v6328, %v6327
    %v6340 = vpack.c.b16 %v6330, %v6329
    %v6341 = vpack.c.b16 %v6332, %v6331
    %v6342 = vpack.c.b16 %v6334, %v6333
    %6351 = vmatprep.subr.bf16.mxu0 0
    %6352 = vmatpush1.bf16.msra.mxu0 %v6335
    %6353 = vmatprep.subr.bf16.mxu0 0
    %6354 = vmatpush1.bf16.msra.mxu0 %v6336
    %6355 = vmatprep.subr.bf16.mxu0 0
    %6356 = vmatpush1.bf16.msra.mxu0 %v6337
    %6357 = vmatprep.subr.bf16.mxu0 0
    %6358 = vmatpush1.bf16.msra.mxu0 %v6338
    %6359 = vmatprep.subr.bf16.mxu0 0
    %6360 = vmatpush1.bf16.msra.mxu0 %v6339
    %6361 = vmatprep.subr.bf16.mxu0 0
    %6362 = vmatpush1.bf16.msra.mxu0 %v6340
    %6363 = vmatprep.subr.bf16.mxu0 0
    %6364 = vmatpush1.bf16.msra.mxu0 %v6341
    %6365 = vmatprep.subr.bf16.mxu0 0
    %6366 = vmatpush1.bf16.msra.mxu0 %v6342
    %6367 = vmatprep.subr.bf16.mxu0 0
    %6368 = vmatpush1.bf16.msra.mxu0 0
    %6369 = vmatprep.subr.bf16.mxu0 0
    %6370 = vmatpush1.bf16.msra.mxu0 0
    %6371 = vmatprep.subr.bf16.mxu0 0
    %6372 = vmatpush1.bf16.msra.mxu0 0
    %6373 = vmatprep.subr.bf16.mxu0 0
    %6374 = vmatpush1.bf16.msra.mxu0 0
    %6375 = vmatprep.subr.bf16.mxu0 0
    %6376 = vmatpush1.bf16.msra.mxu0 0
    %6377 = vmatprep.subr.bf16.mxu0 0
    %6378 = vmatpush1.bf16.msra.mxu0 0
    %6379 = vmatprep.subr.bf16.mxu0 0
    %6380 = vmatpush1.bf16.msra.mxu0 0
    %6381 = vmatprep.subr.bf16.mxu0 0
    %6382 = vmatpush1.bf16.msra.mxu0 0
    %6383 = vmatprep.mubr.bf16.mxu0 0
    %6384 = vmatmul.mubr.bf16.gmra.mrb[0].mxu0 %v6248
    %v6385 = vpop.f32.mrb[0].mxu0
    %v6386 = vadd.f32 %v6301, %v6385
    %v6387 = vpop.f32.mrb[0].mxu0
    %v6388 = vpop.f32.mrb[0].mxu0
    %v6389 = vadd.f32 %v6301, %v6388
    %v6390 = vpop.f32.mrb[0].mxu0
    %6391 = vmatprep.mubr.bf16.mxu0 0
    %6392 = vmatmul.mubr.bf16.gmra.mrb[0].mxu0 %v6249
    %v6393 = vpop.f32.mrb[0].mxu0
    %v6394 = vadd.f32 %v6301, %v6393
    %v6395 = vpop.f32.mrb[0].mxu0
    %v6396 = vpop.f32.mrb[0].mxu0
    %v6397 = vadd.f32 %v6301, %v6396
    %v6398 = vpop.f32.mrb[0].mxu0
    %6399 = vmatprep.mubr.bf16.mxu0 0
    %6400 = vmatmul.mubr.bf16.gmra.mrb[0].mxu0 %v6250
    %v6401 = vpop.f32.mrb[0].mxu0
    %v6402 = vadd.f32 %v6301, %v6401
    %v6403 = vpop.f32.mrb[0].mxu0
    %v6404 = vpop.f32.mrb[0].mxu0
    %v6405 = vadd.f32 %v6301, %v6404
    %v6406 = vpop.f32.mrb[0].mxu0
    %6407 = vmatprep.mubr.bf16.mxu0 0
    %6408 = vmatmul.mubr.bf16.gmra.mrb[0].mxu0 %v6251
    %v6409 = vpop.f32.mrb[0].mxu0
    %v6410 = vadd.f32 %v6301, %v6409
    %v6411 = vpop.f32.mrb[0].mxu0
    %v6412 = vpop.f32.mrb[0].mxu0
    %v6413 = vadd.f32 %v6301, %v6412
    %v6414 = vpop.f32.mrb[0].mxu0
    %6415 = vmatprep.mubr.bf16.mxu0 0
    %6416 = vmatmul.mubr.bf16.gmra.mrb[0].mxu0 %v6252
    %v6417 = vpop.f32.mrb[0].mxu0
    %v6418 = vadd.f32 %v6301, %v6417
    %v6419 = vpop.f32.mrb[0].mxu0
    %v6420 = vpop.f32.mrb[0].mxu0
    %v6421 = vadd.f32 %v6301, %v6420
    %v6422 = vpop.f32.mrb[0].mxu0
    %6423 = vmatprep.mubr.bf16.mxu0 0
    %6424 = vmatmul.mubr.bf16.gmra.mrb[0].mxu0 %v6253
    %v6425 = vpop.f32.mrb[0].mxu0
    %v6426 = vadd.f32 %v6301, %v6425
    %v6427 = vpop.f32.mrb[0].mxu0
    %v6428 = vpop.f32.mrb[0].mxu0
    %v6429 = vadd.f32 %v6301, %v6428
    %v6430 = vpop.f32.mrb[0].mxu0
    %6431 = vmatprep.mubr.bf16.mxu0 0
    %6432 = vmatmul.mubr.bf16.gmra.mrb[0].mxu0 %v6254
    %v6433 = vpop.f32.mrb[0].mxu0
    %v6434 = vadd.f32 %v6301, %v6433
    %v6435 = vpop.f32.mrb[0].mxu0
    %v6436 = vpop.f32.mrb[0].mxu0
    %v6437 = vadd.f32 %v6301, %v6436
    %v6438 = vpop.f32.mrb[0].mxu0
    %6439 = vmatprep.mubr.bf16.mxu0 0
    %6440 = vmatmul.mubr.bf16.gmra.mrb[0].mxu0 %v6255
    %v6441 = vpop.f32.mrb[0].mxu0
    %v6442 = vadd.f32 %v6301, %v6441
    %v6443 = vpop.f32.mrb[0].mxu0
    %v6444 = vpop.f32.mrb[0].mxu0
    %v6445 = vadd.f32 %v6301, %v6444
    %v6446 = vpop.f32.mrb[0].mxu0
    %6447 = vmatprep.mubr.bf16.mxu0 0
    %6448 = vmatmul.mubr.bf16.gmra.mrb[0].mxu0 %v6256
    %v6449 = vpop.f32.mrb[0].mxu0
    %v6450 = vadd.f32 %v6301, %v6449
    %v6451 = vpop.f32.mrb[0].mxu0
    %v6452 = vpop.f32.mrb[0].mxu0
    %v6453 = vadd.f32 %v6301, %v6452
    %v6454 = vpop.f32.mrb[0].mxu0
    %6455 = vmatprep.mubr.bf16.mxu0 0
    %6456 = vmatmul.mubr.bf16.gmra.mrb[0].mxu0 %v6257
    %v6457 = vpop.f32.mrb[0].mxu0
    %v6458 = vadd.f32 %v6301, %v6457
    %v6459 = vpop.f32.mrb[0].mxu0
    %v6460 = vpop.f32.mrb[0].mxu0
    %v6461 = vadd.f32 %v6301, %v6460
    %v6462 = vpop.f32.mrb[0].mxu0
    %6463 = vmatprep.mubr.bf16.mxu0 0
    %6464 = vmatmul.mubr.bf16.gmra.mrb[0].mxu0 %v6258
    %v6465 = vpop.f32.mrb[0].mxu0
    %v6466 = vadd.f32 %v6301, %v6465
    %v6467 = vpop.f32.mrb[0].mxu0
    %v6468 = vpop.f32.mrb[0].mxu0
    %v6469 = vadd.f32 %v6301, %v6468
    %v6470 = vpop.f32.mrb[0].mxu0
    %6471 = vmatprep.mubr.bf16.mxu0 0
    %6472 = vmatmul.mubr.bf16.gmra.mrb[0].mxu0 %v6259
    %v6473 = vpop.f32.mrb[0].mxu0
    %v6474 = vadd.f32 %v6301, %v6473
    %v6475 = vpop.f32.mrb[0].mxu0
    %v6476 = vpop.f32.mrb[0].mxu0
    %v6477 = vadd.f32 %v6301, %v6476
    %v6478 = vpop.f32.mrb[0].mxu0
    %6479 = vmatprep.mubr.bf16.mxu0 0
    %6480 = vmatmul.mubr.bf16.gmra.mrb[0].mxu0 %v6260
    %v6481 = vpop.f32.mrb[0].mxu0
    %v6482 = vadd.f32 %v6301, %v6481
    %v6483 = vpop.f32.mrb[0].mxu0
    %v6484 = vpop.f32.mrb[0].mxu0
    %v6485 = vadd.f32 %v6301, %v6484
    %v6486 = vpop.f32.mrb[0].mxu0
    %6487 = vmatprep.mubr.bf16.mxu0 0
    %6488 = vmatmul.mubr.bf16.gmra.mrb[0].mxu0 %v6261
    %v6489 = vpop.f32.mrb[0].mxu0
    %v6490 = vadd.f32 %v6301, %v6489
    %v6491 = vpop.f32.mrb[0].mxu0
    %v6492 = vpop.f32.mrb[0].mxu0
    %v6493 = vadd.f32 %v6301, %v6492
    %v6494 = vpop.f32.mrb[0].mxu0
    %6495 = vmatprep.mubr.bf16.mxu0 0
    %6496 = vmatmul.mubr.bf16.gmra.mrb[0].mxu0 %v6262
    %v6497 = vpop.f32.mrb[0].mxu0
    %v6498 = vadd.f32 %v6301, %v6497
    %v6499 = vpop.f32.mrb[0].mxu0
    %v6500 = vpop.f32.mrb[0].mxu0
    %v6501 = vadd.f32 %v6301, %v6500
    %v6502 = vpop.f32.mrb[0].mxu0
    %6503 = vmatprep.mubr.bf16.mxu0 0
    %6504 = vmatmul.mubr.bf16.gmra.mrb[0].mxu0 %v6263
    %v6505 = vpop.f32.mrb[0].mxu0
    %v6506 = vadd.f32 %v6301, %v6505
    %v6507 = vpop.f32.mrb[0].mxu0
    %v6508 = vpop.f32.mrb[0].mxu0
    %v6509 = vadd.f32 %v6301, %v6508
    %v6510 = vpop.f32.mrb[0].mxu0
    %6511 = vmatprep.mubr.bf16.mxu0 0
    %6512 = vmatmul.mubr.bf16.gmra.mrb[0].mxu0 %v6264
    %v6513 = vpop.f32.mrb[0].mxu0
    %v6514 = vadd.f32 %v6301, %v6513
    %v6515 = vpop.f32.mrb[0].mxu0
    %v6516 = vpop.f32.mrb[0].mxu0
    %v6517 = vadd.f32 %v6301, %v6516
    %v6518 = vpop.f32.mrb[0].mxu0
    %6519 = vmatprep.mubr.bf16.mxu0 0
    %6520 = vmatmul.mubr.bf16.gmra.mrb[0].mxu0 %v6265
    %v6521 = vpop.f32.mrb[0].mxu0
    %v6522 = vadd.f32 %v6301, %v6521
    %v6523 = vpop.f32.mrb[0].mxu0
    %v6524 = vpop.f32.mrb[0].mxu0
    %v6525 = vadd.f32 %v6301, %v6524
    %v6526 = vpop.f32.mrb[0].mxu0
    %6527 = vmatprep.mubr.bf16.mxu0 0
    %6528 = vmatmul.mubr.bf16.gmra.mrb[0].mxu0 %v6266
    %v6529 = vpop.f32.mrb[0].mxu0
    %v6530 = vadd.f32 %v6301, %v6529
    %v6531 = vpop.f32.mrb[0].mxu0
    %v6532 = vpop.f32.mrb[0].mxu0
    %v6533 = vadd.f32 %v6301, %v6532
    %v6534 = vpop.f32.mrb[0].mxu0
    %6535 = vmatprep.mubr.bf16.mxu0 0
    %6536 = vmatmul.mubr.bf16.gmra.mrb[0].mxu0 %v6267
    %v6537 = vpop.f32.mrb[0].mxu0
    %v6538 = vadd.f32 %v6301, %v6537
    %v6539 = vpop.f32.mrb[0].mxu0
    %v6540 = vpop.f32.mrb[0].mxu0
    %v6541 = vadd.f32 %v6301, %v6540
    %v6542 = vpop.f32.mrb[0].mxu0
    %6543 = vmatprep.mubr.bf16.mxu0 0
    %6544 = vmatmul.mubr.bf16.gmra.mrb[0].mxu0 %v6268
    %v6545 = vpop.f32.mrb[0].mxu0
    %v6546 = vadd.f32 %v6301, %v6545
    %v6547 = vpop.f32.mrb[0].mxu0
    %v6548 = vpop.f32.mrb[0].mxu0
    %v6549 = vadd.f32 %v6301, %v6548
    %v6550 = vpop.f32.mrb[0].mxu0
    %6551 = vmatprep.mubr.bf16.mxu0 0
    %6552 = vmatmul.mubr.bf16.gmra.mrb[0].mxu0 %v6269
    %v6553 = vpop.f32.mrb[0].mxu0
    %v6554 = vadd.f32 %v6301, %v6553
    %v6555 = vpop.f32.mrb[0].mxu0
    %v6556 = vpop.f32.mrb[0].mxu0
    %v6557 = vadd.f32 %v6301, %v6556
    %v6558 = vpop.f32.mrb[0].mxu0
    %6559 = vmatprep.mubr.bf16.mxu0 0
    %6560 = vmatmul.mubr.bf16.gmra.mrb[0].mxu0 %v6270
    %v6561 = vpop.f32.mrb[0].mxu0
    %v6562 = vadd.f32 %v6301, %v6561
    %v6563 = vpop.f32.mrb[0].mxu0
    %v6564 = vpop.f32.mrb[0].mxu0
    %v6565 = vadd.f32 %v6301, %v6564
    %v6566 = vpop.f32.mrb[0].mxu0
    %6567 = vmatprep.mubr.bf16.mxu0 0
    %6568 = vmatmul.mubr.bf16.gmra.mrb[0].mxu0 %v6271
    %v6569 = vpop.f32.mrb[0].mxu0
    %v6570 = vadd.f32 %v6301, %v6569
    %v6571 = vpop.f32.mrb[0].mxu0
    %v6572 = vpop.f32.mrb[0].mxu0
    %v6573 = vadd.f32 %v6301, %v6572
    %v6574 = vpop.f32.mrb[0].mxu0
    %6575 = vmatprep.mubr.bf16.mxu0 0
    %6576 = vmatmul.mubr.bf16.gmra.mrb[0].mxu0 %v6272
    %v6577 = vpop.f32.mrb[0].mxu0
    %v6578 = vadd.f32 %v6301, %v6577
    %v6579 = vpop.f32.mrb[0].mxu0
    %v6580 = vpop.f32.mrb[0].mxu0
    %v6581 = vadd.f32 %v6301, %v6580
    %v6582 = vpop.f32.mrb[0].mxu0
    %6583 = vmatprep.mubr.bf16.mxu0 0
    %6584 = vmatmul.mubr.bf16.gmra.mrb[0].mxu0 %v6273
    %v6585 = vpop.f32.mrb[0].mxu0
    %v6586 = vadd.f32 %v6301, %v6585
    %v6587 = vpop.f32.mrb[0].mxu0
    %v6588 = vpop.f32.mrb[0].mxu0
    %v6589 = vadd.f32 %v6301, %v6588
    %v6590 = vpop.f32.mrb[0].mxu0
    %6591 = vmatprep.mubr.bf16.mxu0 0
    %6592 = vmatmul.mubr.bf16.gmra.mrb[0].mxu0 %v6274
    %v6593 = vpop.f32.mrb[0].mxu0
    %v6594 = vadd.f32 %v6301, %v6593
    %v6595 = vpop.f32.mrb[0].mxu0
    %v6596 = vpop.f32.mrb[0].mxu0
    %v6597 = vadd.f32 %v6301, %v6596
    %v6598 = vpop.f32.mrb[0].mxu0
    %6599 = vmatprep.mubr.bf16.mxu0 0
    %6600 = vmatmul.mubr.bf16.gmra.mrb[0].mxu0 %v6275
    %v6601 = vpop.f32.mrb[0].mxu0
    %v6602 = vadd.f32 %v6301, %v6601
    %v6603 = vpop.f32.mrb[0].mxu0
    %v6604 = vpop.f32.mrb[0].mxu0
    %v6605 = vadd.f32 %v6301, %v6604
    %v6606 = vpop.f32.mrb[0].mxu0
    %6607 = vmatprep.mubr.bf16.mxu0 0
    %6608 = vmatmul.mubr.bf16.gmra.mrb[0].mxu0 %v6276
    %v6609 = vpop.f32.mrb[0].mxu0
    %v6610 = vadd.f32 %v6301, %v6609
    %v6611 = vpop.f32.mrb[0].mxu0
    %v6612 = vpop.f32.mrb[0].mxu0
    %v6613 = vadd.f32 %v6301, %v6612
    %v6614 = vpop.f32.mrb[0].mxu0
    %6615 = vmatprep.mubr.bf16.mxu0 0
    %6616 = vmatmul.mubr.bf16.gmra.mrb[0].mxu0 %v6277
    %v6617 = vpop.f32.mrb[0].mxu0
    %v6618 = vadd.f32 %v6301, %v6617
    %v6619 = vpop.f32.mrb[0].mxu0
    %v6620 = vpop.f32.mrb[0].mxu0
    %v6621 = vadd.f32 %v6301, %v6620
    %v6622 = vpop.f32.mrb[0].mxu0
    %6623 = vmatprep.mubr.bf16.mxu0 0
    %6624 = vmatmul.mubr.bf16.gmra.mrb[0].mxu0 %v6278
    %v6625 = vpop.f32.mrb[0].mxu0
    %v6626 = vadd.f32 %v6301, %v6625
    %v6627 = vpop.f32.mrb[0].mxu0
    %v6628 = vpop.f32.mrb[0].mxu0
    %v6629 = vadd.f32 %v6301, %v6628
    %v6630 = vpop.f32.mrb[0].mxu0
    %6631 = vmatprep.mubr.bf16.mxu0 0
    %6632 = vmatmul.mubr.bf16.gmra.mrb[0].mxu0 %v6279
    %v6633 = vpop.f32.mrb[0].mxu0
    %v6634 = vadd.f32 %v6301, %v6633
    %v6635 = vpop.f32.mrb[0].mxu0
    %v6636 = vpop.f32.mrb[0].mxu0
    %v6637 = vadd.f32 %v6301, %v6636
    %v6638 = vpop.f32.mrb[0].mxu0
    %6639 = vdwg.mxu0
    %v6640 = vmax.f32 %v6386, 0.0
    %v6641 = vmax.f32 %v6389, 0.0
    %v6642 = vmax.f32 %v6394, 0.0
    %v6643 = vmax.f32 %v6397, 0.0
    %v6644 = vmax.f32 %v6402, 0.0
    %v6645 = vmax.f32 %v6405, 0.0
    %v6646 = vmax.f32 %v6410, 0.0
    %v6647 = vmax.f32 %v6413, 0.0
    %v6648 = vmax.f32 %v6418, 0.0
    %v6649 = vmax.f32 %v6421, 0.0
    %v6650 = vmax.f32 %v6426, 0.0
    %v6651 = vmax.f32 %v6429, 0.0
    %v6652 = vmax.f32 %v6434, 0.0
    %v6653 = vmax.f32 %v6437, 0.0
    %v6654 = vmax.f32 %v6442, 0.0
    %v6655 = vmax.f32 %v6445, 0.0
    %v6656 = vmax.f32 %v6450, 0.0
    %v6657 = vmax.f32 %v6453, 0.0
    %v6658 = vmax.f32 %v6458, 0.0
    %v6659 = vmax.f32 %v6461, 0.0
    %v6660 = vmax.f32 %v6466, 0.0
    %v6661 = vmax.f32 %v6469, 0.0
    %v6662 = vmax.f32 %v6474, 0.0
    %v6663 = vmax.f32 %v6477, 0.0
    %v6664 = vmax.f32 %v6482, 0.0
    %v6665 = vmax.f32 %v6485, 0.0
    %v6666 = vmax.f32 %v6490, 0.0
    %v6667 = vmax.f32 %v6493, 0.0
    %v6668 = vmax.f32 %v6498, 0.0
    %v6669 = vmax.f32 %v6501, 0.0
    %v6670 = vmax.f32 %v6506, 0.0
    %v6671 = vmax.f32 %v6509, 0.0
    %v6672 = vmax.f32 %v6514, 0.0
    %v6673 = vmax.f32 %v6517, 0.0
    %v6674 = vmax.f32 %v6522, 0.0
    %v6675 = vmax.f32 %v6525, 0.0
    %v6676 = vmax.f32 %v6530, 0.0
    %v6677 = vmax.f32 %v6533, 0.0
    %v6678 = vmax.f32 %v6538, 0.0
    %v6679 = vmax.f32 %v6541, 0.0
    %v6680 = vmax.f32 %v6546, 0.0
    %v6681 = vmax.f32 %v6549, 0.0
    %v6682 = vmax.f32 %v6554, 0.0
    %v6683 = vmax.f32 %v6557, 0.0
    %v6684 = vmax.f32 %v6562, 0.0
    %v6685 = vmax.f32 %v6565, 0.0
    %v6686 = vmax.f32 %v6570, 0.0
    %v6687 = vmax.f32 %v6573, 0.0
    %v6688 = vmax.f32 %v6578, 0.0
    %v6689 = vmax.f32 %v6581, 0.0
    %v6690 = vmax.f32 %v6586, 0.0
    %v6691 = vmax.f32 %v6589, 0.0
    %v6692 = vmax.f32 %v6594, 0.0
    %v6693 = vmax.f32 %v6597, 0.0
    %v6694 = vmax.f32 %v6602, 0.0
    %v6695 = vmax.f32 %v6605, 0.0
    %v6696 = vmax.f32 %v6610, 0.0
    %v6697 = vmax.f32 %v6613, 0.0
    %v6698 = vmax.f32 %v6618, 0.0
    %v6699 = vmax.f32 %v6621, 0.0
    %v6700 = vmax.f32 %v6626, 0.0
    %v6701 = vmax.f32 %v6629, 0.0
    %v6702 = vmax.f32 %v6634, 0.0
    %v6703 = vmax.f32 %v6637, 0.0
    %6704 = vst [vmem:[#allocation3] sm:$0xff] %v6640
    %6705 = vst [vmem:[#allocation3 + $0x8] sm:$0xff] %v6641
    %6706 = vst [vmem:[#allocation3 + $0x10] sm:$0xff] %v6642
    %6707 = vst [vmem:[#allocation3 + $0x18] sm:$0xff] %v6643
    %6708 = vst [vmem:[#allocation3 + $0x20] sm:$0xff] %v6644
    %6709 = vst [vmem:[#allocation3 + $0x28] sm:$0xff] %v6645
    %6710 = vst [vmem:[#allocation3 + $0x30] sm:$0xff] %v6646
    %6711 = vst [vmem:[#allocation3 + $0x38] sm:$0xff] %v6647
    %6712 = vst [vmem:[#allocation3 + $0x40] sm:$0xff] %v6648
    %6713 = vst [vmem:[#allocation3 + $0x48] sm:$0xff] %v6649
    %6714 = vst [vmem:[#allocation3 + $0x50] sm:$0xff] %v6650
    %6715 = vst [vmem:[#allocation3 + $0x58] sm:$0xff] %v6651
    %6716 = vst [vmem:[#allocation3 + $0x60] sm:$0xff] %v6652
    %6717 = vst [vmem:[#allocation3 + $0x68] sm:$0xff] %v6653
    %6718 = vst [vmem:[#allocation3 + $0x70] sm:$0xff] %v6654
    %6719 = vst [vmem:[#allocation3 + $0x78] sm:$0xff] %v6655
    %6720 = vst [vmem:[#allocation3 + $0x80] sm:$0xff] %v6656
    %6721 = vst [vmem:[#allocation3 + $0x88] sm:$0xff] %v6657
    %6722 = vst [vmem:[#allocation3 + $0x90] sm:$0xff] %v6658
    %6723 = vst [vmem:[#allocation3 + $0x98] sm:$0xff] %v6659
    %6724 = vst [vmem:[#allocation3 + $0xa0] sm:$0xff] %v6660
    %6725 = vst [vmem:[#allocation3 + $0xa8] sm:$0xff] %v6661
    %6726 = vst [vmem:[#allocation3 + $0xb0] sm:$0xff] %v6662
    %6727 = vst [vmem:[#allocation3 + $0xb8] sm:$0xff] %v6663
    %6728 = vst [vmem:[#allocation3 + $0xc0] sm:$0xff] %v6664
    %6729 = vst [vmem:[#allocation3 + $0xc8] sm:$0xff] %v6665
    %6730 = vst [vmem:[#allocation3 + $0xd0] sm:$0xff] %v6666
    %6731 = vst [vmem:[#allocation3 + $0xd8] sm:$0xff] %v6667
    %6732 = vst [vmem:[#allocation3 + $0xe0] sm:$0xff] %v6668
    %6733 = vst [vmem:[#allocation3 + $0xe8] sm:$0xff] %v6669
    %6734 = vst [vmem:[#allocation3 + $0xf0] sm:$0xff] %v6670
    %6735 = vst [vmem:[#allocation3 + $0xf8] sm:$0xff] %v6671
    %6736 = vst [vmem:[#allocation3 + $0x100] sm:$0xff] %v6672
    %6737 = vst [vmem:[#allocation3 + $0x108] sm:$0xff] %v6673
    %6738 = vst [vmem:[#allocation3 + $0x110] sm:$0xff] %v6674
    %6739 = vst [vmem:[#allocation3 + $0x118] sm:$0xff] %v6675
    %6740 = vst [vmem:[#allocation3 + $0x120] sm:$0xff] %v6676
    %6741 = vst [vmem:[#allocation3 + $0x128] sm:$0xff] %v6677
    %6742 = vst [vmem:[#allocation3 + $0x130] sm:$0xff] %v6678
    %6743 = vst [vmem:[#allocation3 + $0x138] sm:$0xff] %v6679
    %6744 = vst [vmem:[#allocation3 + $0x140] sm:$0xff] %v6680
    %6745 = vst [vmem:[#allocation3 + $0x148] sm:$0xff] %v6681
    %6746 = vst [vmem:[#allocation3 + $0x150] sm:$0xff] %v6682
    %6747 = vst [vmem:[#allocation3 + $0x158] sm:$0xff] %v6683
    %6748 = vst [vmem:[#allocation3 + $0x160] sm:$0xff] %v6684
    %6749 = vst [vmem:[#allocation3 + $0x168] sm:$0xff] %v6685
    %6750 = vst [vmem:[#allocation3 + $0x170] sm:$0xff] %v6686
    %6751 = vst [vmem:[#allocation3 + $0x178] sm:$0xff] %v6687
    %6752 = vst [vmem:[#allocation3 + $0x180] sm:$0xff] %v6688
    %6753 = vst [vmem:[#allocation3 + $0x188] sm:$0xff] %v6689
    %6754 = vst [vmem:[#allocation3 + $0x190] sm:$0xff] %v6690
    %6755 = vst [vmem:[#allocation3 + $0x198] sm:$0xff] %v6691
    %6756 = vst [vmem:[#allocation3 + $0x1a0] sm:$0xff] %v6692
    %6757 = vst [vmem:[#allocation3 + $0x1a8] sm:$0xff] %v6693
    %6758 = vst [vmem:[#allocation3 + $0x1b0] sm:$0xff] %v6694
    %6759 = vst [vmem:[#allocation3 + $0x1b8] sm:$0xff] %v6695
    %6760 = vst [vmem:[#allocation3 + $0x1c0] sm:$0xff] %v6696
    %6761 = vst [vmem:[#allocation3 + $0x1c8] sm:$0xff] %v6697
    %6762 = vst [vmem:[#allocation3 + $0x1d0] sm:$0xff] %v6698
    %6763 = vst [vmem:[#allocation3 + $0x1d8] sm:$0xff] %v6699
    %6764 = vst [vmem:[#allocation3 + $0x1e0] sm:$0xff] %v6700
    %6765 = vst [vmem:[#allocation3 + $0x1e8] sm:$0xff] %v6701
    %6766 = vst [vmem:[#allocation3 + $0x1f0] sm:$0xff] %v6702
    %6767 = vst [vmem:[#allocation3 + $0x1f8] sm:$0xff] %v6703
    %v6768 = vld [vmem:[#allocation3] sm:$0xff]
    %v6769 = vld [vmem:[#allocation3 + $0x8] sm:$0xff]
    %v6770 = vld [vmem:[#allocation3 + $0x10] sm:$0xff]
    %v6771 = vld [vmem:[#allocation3 + $0x18] sm:$0xff]
    %v6772 = vld [vmem:[#allocation3 + $0x20] sm:$0xff]
    %v6773 = vld [vmem:[#allocation3 + $0x28] sm:$0xff]
    %v6774 = vld [vmem:[#allocation3 + $0x30] sm:$0xff]
    %v6775 = vld [vmem:[#allocation3 + $0x38] sm:$0xff]
    %v6776 = vld [vmem:[#allocation3 + $0x40] sm:$0xff]
    %v6777 = vld [vmem:[#allocation3 + $0x48] sm:$0xff]
    %v6778 = vld [vmem:[#allocation3 + $0x50] sm:$0xff]
    %v6779 = vld [vmem:[#allocation3 + $0x58] sm:$0xff]
    %v6780 = vld [vmem:[#allocation3 + $0x60] sm:$0xff]
    %v6781 = vld [vmem:[#allocation3 + $0x68] sm:$0xff]
    %v6782 = vld [vmem:[#allocation3 + $0x70] sm:$0xff]
    %v6783 = vld [vmem:[#allocation3 + $0x78] sm:$0xff]
    %v6784 = vld [vmem:[#allocation3 + $0x80] sm:$0xff]
    %v6785 = vld [vmem:[#allocation3 + $0x88] sm:$0xff]
    %v6786 = vld [vmem:[#allocation3 + $0x90] sm:$0xff]
    %v6787 = vld [vmem:[#allocation3 + $0x98] sm:$0xff]
    %v6788 = vld [vmem:[#allocation3 + $0xa0] sm:$0xff]
    %v6789 = vld [vmem:[#allocation3 + $0xa8] sm:$0xff]
    %v6790 = vld [vmem:[#allocation3 + $0xb0] sm:$0xff]
    %v6791 = vld [vmem:[#allocation3 + $0xb8] sm:$0xff]
    %v6792 = vld [vmem:[#allocation3 + $0xc0] sm:$0xff]
    %v6793 = vld [vmem:[#allocation3 + $0xc8] sm:$0xff]
    %v6794 = vld [vmem:[#allocation3 + $0xd0] sm:$0xff]
    %v6795 = vld [vmem:[#allocation3 + $0xd8] sm:$0xff]
    %v6796 = vld [vmem:[#allocation3 + $0xe0] sm:$0xff]
    %v6797 = vld [vmem:[#allocation3 + $0xe8] sm:$0xff]
    %v6798 = vld [vmem:[#allocation3 + $0xf0] sm:$0xff]
    %v6799 = vld [vmem:[#allocation3 + $0xf8] sm:$0xff]
    %v6800 = vld [vmem:[#allocation3 + $0x100] sm:$0xff]
    %v6801 = vld [vmem:[#allocation3 + $0x108] sm:$0xff]
    %v6802 = vld [vmem:[#allocation3 + $0x110] sm:$0xff]
    %v6803 = vld [vmem:[#allocation3 + $0x118] sm:$0xff]
    %v6804 = vld [vmem:[#allocation3 + $0x120] sm:$0xff]
    %v6805 = vld [vmem:[#allocation3 + $0x128] sm:$0xff]
    %v6806 = vld [vmem:[#allocation3 + $0x130] sm:$0xff]
    %v6807 = vld [vmem:[#allocation3 + $0x138] sm:$0xff]
    %v6808 = vld [vmem:[#allocation3 + $0x140] sm:$0xff]
    %v6809 = vld [vmem:[#allocation3 + $0x148] sm:$0xff]
    %v6810 = vld [vmem:[#allocation3 + $0x150] sm:$0xff]
    %v6811 = vld [vmem:[#allocation3 + $0x158] sm:$0xff]
    %v6812 = vld [vmem:[#allocation3 + $0x160] sm:$0xff]
    %v6813 = vld [vmem:[#allocation3 + $0x168] sm:$0xff]
    %v6814 = vld [vmem:[#allocation3 + $0x170] sm:$0xff]
    %v6815 = vld [vmem:[#allocation3 + $0x178] sm:$0xff]
    %v6816 = vld [vmem:[#allocation3 + $0x180] sm:$0xff]
    %v6817 = vld [vmem:[#allocation3 + $0x188] sm:$0xff]
    %v6818 = vld [vmem:[#allocation3 + $0x190] sm:$0xff]
    %v6819 = vld [vmem:[#allocation3 + $0x198] sm:$0xff]
    %v6820 = vld [vmem:[#allocation3 + $0x1a0] sm:$0xff]
    %v6821 = vld [vmem:[#allocation3 + $0x1a8] sm:$0xff]
    %v6822 = vld [vmem:[#allocation3 + $0x1b0] sm:$0xff]
    %v6823 = vld [vmem:[#allocation3 + $0x1b8] sm:$0xff]
    %v6824 = vld [vmem:[#allocation3 + $0x1c0] sm:$0xff]
    %v6825 = vld [vmem:[#allocation3 + $0x1c8] sm:$0xff]
    %v6826 = vld [vmem:[#allocation3 + $0x1d0] sm:$0xff]
    %v6827 = vld [vmem:[#allocation3 + $0x1d8] sm:$0xff]
    %v6828 = vld [vmem:[#allocation3 + $0x1e0] sm:$0xff]
    %v6829 = vld [vmem:[#allocation3 + $0x1e8] sm:$0xff]
    %v6830 = vld [vmem:[#allocation3 + $0x1f0] sm:$0xff]
    %v6831 = vld [vmem:[#allocation3 + $0x1f8] sm:$0xff]
    %v6832 = vadd.f32 %v6768, %v6769
    %v6833 = vadd.f32 %v6832, %v6770
    %v6834 = vadd.f32 %v6833, %v6771
    %v6835 = vadd.f32 %v6834, %v6772
    %v6836 = vadd.f32 %v6835, %v6773
    %v6837 = vadd.f32 %v6836, %v6774
    %v6838 = vadd.f32 %v6837, %v6775
    %v6839 = vadd.f32 %v6838, %v6776
    %v6840 = vadd.f32 %v6839, %v6777
    %v6841 = vadd.f32 %v6840, %v6778
    %v6842 = vadd.f32 %v6841, %v6779
    %v6843 = vadd.f32 %v6842, %v6780
    %v6844 = vadd.f32 %v6843, %v6781
    %v6845 = vadd.f32 %v6844, %v6782
    %v6846 = vadd.f32 %v6845, %v6783
    %v6847 = vadd.f32 %v6846, %v6784
    %v6848 = vadd.f32 %v6847, %v6785
    %v6849 = vadd.f32 %v6848, %v6786
    %v6850 = vadd.f32 %v6849, %v6787
    %v6851 = vadd.f32 %v6850, %v6788
    %v6852 = vadd.f32 %v6851, %v6789
    %v6853 = vadd.f32 %v6852, %v6790
    %v6854 = vadd.f32 %v6853, %v6791
    %v6855 = vadd.f32 %v6854, %v6792
    %v6856 = vadd.f32 %v6855, %v6793
    %v6857 = vadd.f32 %v6856, %v6794
    %v6858 = vadd.f32 %v6857, %v6795
    %v6859 = vadd.f32 %v6858, %v6796
    %v6860 = vadd.f32 %v6859, %v6797
    %v6861 = vadd.f32 %v6860, %v6798
    %v6862 = vadd.f32 %v6861, %v6799
    %v6863 = vadd.f32 %v6862, %v6800
    %v6864 = vadd.f32 %v6863, %v6801
    %v6865 = vadd.f32 %v6864, %v6802
    %v6866 = vadd.f32 %v6865, %v6803
    %v6867 = vadd.f32 %v6866, %v6804
    %v6868 = vadd.f32 %v6867, %v6805
    %v6869 = vadd.f32 %v6868, %v6806
    %v6870 = vadd.f32 %v6869, %v6807
    %v6871 = vadd.f32 %v6870, %v6808
    %v6872 = vadd.f32 %v6871, %v6809
    %v6873 = vadd.f32 %v6872, %v6810
    %v6874 = vadd.f32 %v6873, %v6811
    %v6875 = vadd.f32 %v6874, %v6812
    %v6876 = vadd.f32 %v6875, %v6813
    %v6877 = vadd.f32 %v6876, %v6814
    %v6878 = vadd.f32 %v6877, %v6815
    %v6879 = vadd.f32 %v6878, %v6816
    %v6880 = vadd.f32 %v6879, %v6817
    %v6881 = vadd.f32 %v6880, %v6818
    %v6882 = vadd.f32 %v6881, %v6819
    %v6883 = vadd.f32 %v6882, %v6820
    %v6884 = vadd.f32 %v6883, %v6821
    %v6885 = vadd.f32 %v6884, %v6822
    %v6886 = vadd.f32 %v6885, %v6823
    %v6887 = vadd.f32 %v6886, %v6824
    %v6888 = vadd.f32 %v6887, %v6825
    %v6889 = vadd.f32 %v6888, %v6826
    %v6890 = vadd.f32 %v6889, %v6827
    %v6891 = vadd.f32 %v6890, %v6828
    %v6892 = vadd.f32 %v6891, %v6829
    %v6893 = vadd.f32 %v6892, %v6830
    %v6894 = vadd.f32 %v6893, %v6831
    %v6895 = vrot.slane %v6894, 4
    %v6896 = vadd.f32 %v6894, %v6895
    %v6897 = vrot.slane %v6896, 2
    %v6898 = vadd.f32 %v6896, %v6897
    %v6899 = vrot.slane %v6898, 1
    %v6900 = vadd.f32 %v6898, %v6899
    %v6901 = vmul.f32 %v6900, 0.001953125
    %v6902 = vmul.f32 %v6768, %v6768
    %v6903 = vmul.f32 %v6769, %v6769
    %v6904 = vmul.f32 %v6770, %v6770
    %v6905 = vmul.f32 %v6771, %v6771
    %v6906 = vmul.f32 %v6772, %v6772
    %v6907 = vmul.f32 %v6773, %v6773
    %v6908 = vmul.f32 %v6774, %v6774
    %v6909 = vmul.f32 %v6775, %v6775
    %v6910 = vmul.f32 %v6776, %v6776
    %v6911 = vmul.f32 %v6777, %v6777
    %v6912 = vmul.f32 %v6778, %v6778
    %v6913 = vmul.f32 %v6779, %v6779
    %v6914 = vmul.f32 %v6780, %v6780
    %v6915 = vmul.f32 %v6781, %v6781
    %v6916 = vmul.f32 %v6782, %v6782
    %v6917 = vmul.f32 %v6783, %v6783
    %v6918 = vmul.f32 %v6784, %v6784
    %v6919 = vmul.f32 %v6785, %v6785
    %v6920 = vmul.f32 %v6786, %v6786
    %v6921 = vmul.f32 %v6787, %v6787
    %v6922 = vmul.f32 %v6788, %v6788
    %v6923 = vmul.f32 %v6789, %v6789
    %v6924 = vmul.f32 %v6790, %v6790
    %v6925 = vmul.f32 %v6791, %v6791
    %v6926 = vmul.f32 %v6792, %v6792
    %v6927 = vmul.f32 %v6793, %v6793
    %v6928 = vmul.f32 %v6794, %v6794
    %v6929 = vmul.f32 %v6795, %v6795
    %v6930 = vmul.f32 %v6796, %v6796
    %v6931 = vmul.f32 %v6797, %v6797
    %v6932 = vmul.f32 %v6798, %v6798
    %v6933 = vmul.f32 %v6799, %v6799
    %v6934 = vmul.f32 %v6800, %v6800
    %v6935 = vmul.f32 %v6801, %v6801
    %v6936 = vmul.f32 %v6802, %v6802
    %v6937 = vmul.f32 %v6803, %v6803
    %v6938 = vmul.f32 %v6804, %v6804
    %v6939 = vmul.f32 %v6805, %v6805
    %v6940 = vmul.f32 %v6806, %v6806
    %v6941 = vmul.f32 %v6807, %v6807
    %v6942 = vmul.f32 %v6808, %v6808
    %v6943 = vmul.f32 %v6809, %v6809
    %v6944 = vmul.f32 %v6810, %v6810
    %v6945 = vmul.f32 %v6811, %v6811
    %v6946 = vmul.f32 %v6812, %v6812
    %v6947 = vmul.f32 %v6813, %v6813
    %v6948 = vmul.f32 %v6814, %v6814
    %v6949 = vmul.f32 %v6815, %v6815
    %v6950 = vmul.f32 %v6816, %v6816
    %v6951 = vmul.f32 %v6817, %v6817
    %v6952 = vmul.f32 %v6818, %v6818
    %v6953 = vmul.f32 %v6819, %v6819
    %v6954 = vmul.f32 %v6820, %v6820
    %v6955 = vmul.f32 %v6821, %v6821
    %v6956 = vmul.f32 %v6822, %v6822
    %v6957 = vmul.f32 %v6823, %v6823
    %v6958 = vmul.f32 %v6824, %v6824
    %v6959 = vmul.f32 %v6825, %v6825
    %v6960 = vmul.f32 %v6826, %v6826
    %v6961 = vmul.f32 %v6827, %v6827
    %v6962 = vmul.f32 %v6828, %v6828
    %v6963 = vmul.f32 %v6829, %v6829
    %v6964 = vmul.f32 %v6830, %v6830
    %v6965 = vmul.f32 %v6831, %v6831
    %v6966 = vadd.f32 %v6902, %v6903
    %v6967 = vadd.f32 %v6966, %v6904
    %v6968 = vadd.f32 %v6967, %v6905
    %v6969 = vadd.f32 %v6968, %v6906
    %v6970 = vadd.f32 %v6969, %v6907
    %v6971 = vadd.f32 %v6970, %v6908
    %v6972 = vadd.f32 %v6971, %v6909
    %v6973 = vadd.f32 %v6972, %v6910
    %v6974 = vadd.f32 %v6973, %v6911
    %v6975 = vadd.f32 %v6974, %v6912
    %v6976 = vadd.f32 %v6975, %v6913
    %v6977 = vadd.f32 %v6976, %v6914
    %v6978 = vadd.f32 %v6977, %v6915
    %v6979 = vadd.f32 %v6978, %v6916
    %v6980 = vadd.f32 %v6979, %v6917
    %v6981 = vadd.f32 %v6980, %v6918
    %v6982 = vadd.f32 %v6981, %v6919
    %v6983 = vadd.f32 %v6982, %v6920
    %v6984 = vadd.f32 %v6983, %v6921
    %v6985 = vadd.f32 %v6984, %v6922
    %v6986 = vadd.f32 %v6985, %v6923
    %v6987 = vadd.f32 %v6986, %v6924
    %v6988 = vadd.f32 %v6987, %v6925
    %v6989 = vadd.f32 %v6988, %v6926
    %v6990 = vadd.f32 %v6989, %v6927
    %v6991 = vadd.f32 %v6990, %v6928
    %v6992 = vadd.f32 %v6991, %v6929
    %v6993 = vadd.f32 %v6992, %v6930
    %v6994 = vadd.f32 %v6993, %v6931
    %v6995 = vadd.f32 %v6994, %v6932
    %v6996 = vadd.f32 %v6995, %v6933
    %v6997 = vadd.f32 %v6996, %v6934
    %v6998 = vadd.f32 %v6997, %v6935
    %v6999 = vadd.f32 %v6998, %v6936
    %v7000 = vadd.f32 %v6999, %v6937
    %v7001 = vadd.f32 %v7000, %v6938
    %v7002 = vadd.f32 %v7001, %v6939
    %v7003 = vadd.f32 %v7002, %v6940
    %v7004 = vadd.f32 %v7003, %v6941
    %v7005 = vadd.f32 %v7004, %v6942
    %v7006 = vadd.f32 %v7005, %v6943
    %v7007 = vadd.f32 %v7006, %v6944
    %v7008 = vadd.f32 %v7007, %v6945
    %v7009 = vadd.f32 %v7008, %v6946
    %v7010 = vadd.f32 %v7009, %v6947
    %v7011 = vadd.f32 %v7010, %v6948
    %v7012 = vadd.f32 %v7011, %v6949
    %v7013 = vadd.f32 %v7012, %v6950
    %v7014 = vadd.f32 %v7013, %v6951
    %v7015 = vadd.f32 %v7014, %v6952
    %v7016 = vadd.f32 %v7015, %v6953
    %v7017 = vadd.f32 %v7016, %v6954
    %v7018 = vadd.f32 %v7017, %v6955
    %v7019 = vadd.f32 %v7018, %v6956
    %v7020 = vadd.f32 %v7019, %v6957
    %v7021 = vadd.f32 %v7020, %v6958
    %v7022 = vadd.f32 %v7021, %v6959
    %v7023 = vadd.f32 %v7022, %v6960
    %v7024 = vadd.f32 %v7023, %v6961
    %v7025 = vadd.f32 %v7024, %v6962
    %v7026 = vadd.f32 %v7025, %v6963
    %v7027 = vadd.f32 %v7026, %v6964
    %v7028 = vadd.f32 %v7027, %v6965
    %v7029 = vrot.slane %v7028, 4
    %v7030 = vadd.f32 %v7028, %v7029
    %v7031 = vrot.slane %v7030, 2
    %v7032 = vadd.f32 %v7030, %v7031
    %v7033 = vrot.slane %v7032, 1
    %v7034 = vadd.f32 %v7032, %v7033
    %v7035 = vmul.f32 %v7034, 0.001953125
    %v7036 = vmul.f32 %v6901, %v6901
    %v7037 = vsub.f32 %v7035, %v7036
    %v7038 = vmax.f32 %v7037, 0.0
    %v7039 = vld [vmem:[%s3] sm:$0x1]
    %v7040 = vadd.f32 %v7038, 1e-05
    %v7041 = vrsqrt.pop %v7040
    %v7042 = vmul.f32 %v7039, %v7041
    %v7043 = vld [vmem:[%s4] sm:$0x1]
    %v7044 = vmul.f32 %v6901, %v7042
    %v7045 = vsub.f32 %v7043, %v7044
    %v7047 = vlaneseq
    %v7048 = vshrl.u32 %v7047, 7
    %v7049 = vsub.s32 0, %v7048
    %v7050 = vrot.slane %v7042, %v7049
    %v7052 = vmul.f32 %v6768, %v7050
    %v7053 = vmul.f32 %v6769, %v7050
    %v7054 = vmul.f32 %v6770, %v7050
    %v7055 = vmul.f32 %v6771, %v7050
    %v7056 = vmul.f32 %v6772, %v7050
    %v7057 = vmul.f32 %v6773, %v7050
    %v7058 = vmul.f32 %v6774, %v7050
    %v7059 = vmul.f32 %v6775, %v7050
    %v7060 = vmul.f32 %v6776, %v7050
    %v7061 = vmul.f32 %v6777, %v7050
    %v7062 = vmul.f32 %v6778, %v7050
    %v7063 = vmul.f32 %v6779, %v7050
    %v7064 = vmul.f32 %v6780, %v7050
    %v7065 = vmul.f32 %v6781, %v7050
    %v7066 = vmul.f32 %v6782, %v7050
    %v7067 = vmul.f32 %v6783, %v7050
    %v7068 = vmul.f32 %v6784, %v7050
    %v7069 = vmul.f32 %v6785, %v7050
    %v7070 = vmul.f32 %v6786, %v7050
    %v7071 = vmul.f32 %v6787, %v7050
    %v7072 = vmul.f32 %v6788, %v7050
    %v7073 = vmul.f32 %v6789, %v7050
    %v7074 = vmul.f32 %v6790, %v7050
    %v7075 = vmul.f32 %v6791, %v7050
    %v7076 = vmul.f32 %v6792, %v7050
    %v7077 = vmul.f32 %v6793, %v7050
    %v7078 = vmul.f32 %v6794, %v7050
    %v7079 = vmul.f32 %v6795, %v7050
    %v7080 = vmul.f32 %v6796, %v7050
    %v7081 = vmul.f32 %v6797, %v7050
    %v7082 = vmul.f32 %v6798, %v7050
    %v7083 = vmul.f32 %v6799, %v7050
    %v7084 = vmul.f32 %v6800, %v7050
    %v7085 = vmul.f32 %v6801, %v7050
    %v7086 = vmul.f32 %v6802, %v7050
    %v7087 = vmul.f32 %v6803, %v7050
    %v7088 = vmul.f32 %v6804, %v7050
    %v7089 = vmul.f32 %v6805, %v7050
    %v7090 = vmul.f32 %v6806, %v7050
    %v7091 = vmul.f32 %v6807, %v7050
    %v7092 = vmul.f32 %v6808, %v7050
    %v7093 = vmul.f32 %v6809, %v7050
    %v7094 = vmul.f32 %v6810, %v7050
    %v7095 = vmul.f32 %v6811, %v7050
    %v7096 = vmul.f32 %v6812, %v7050
    %v7097 = vmul.f32 %v6813, %v7050
    %v7098 = vmul.f32 %v6814, %v7050
    %v7099 = vmul.f32 %v6815, %v7050
    %v7100 = vmul.f32 %v6816, %v7050
    %v7101 = vmul.f32 %v6817, %v7050
    %v7102 = vmul.f32 %v6818, %v7050
    %v7103 = vmul.f32 %v6819, %v7050
    %v7104 = vmul.f32 %v6820, %v7050
    %v7105 = vmul.f32 %v6821, %v7050
    %v7106 = vmul.f32 %v6822, %v7050
    %v7107 = vmul.f32 %v6823, %v7050
    %v7108 = vmul.f32 %v6824, %v7050
    %v7109 = vmul.f32 %v6825, %v7050
    %v7110 = vmul.f32 %v6826, %v7050
    %v7111 = vmul.f32 %v6827, %v7050
    %v7112 = vmul.f32 %v6828, %v7050
    %v7113 = vmul.f32 %v6829, %v7050
    %v7114 = vmul.f32 %v6830, %v7050
    %v7115 = vmul.f32 %v6831, %v7050
    %v7117 = vlaneseq
    %v7118 = vshrl.u32 %v7117, 7
    %v7119 = vsub.s32 0, %v7118
    %v7120 = vrot.slane %v7045, %v7119
    %v7122 = vadd.f32 %v7052, %v7120
    %v7123 = vadd.f32 %v7053, %v7120
    %v7124 = vadd.f32 %v7054, %v7120
    %v7125 = vadd.f32 %v7055, %v7120
    %v7126 = vadd.f32 %v7056, %v7120
    %v7127 = vadd.f32 %v7057, %v7120
    %v7128 = vadd.f32 %v7058, %v7120
    %v7129 = vadd.f32 %v7059, %v7120
    %v7130 = vadd.f32 %v7060, %v7120
    %v7131 = vadd.f32 %v7061, %v7120
    %v7132 = vadd.f32 %v7062, %v7120
    %v7133 = vadd.f32 %v7063, %v7120
    %v7134 = vadd.f32 %v7064, %v7120
    %v7135 = vadd.f32 %v7065, %v7120
    %v7136 = vadd.f32 %v7066, %v7120
    %v7137 = vadd.f32 %v7067, %v7120
    %v7138 = vadd.f32 %v7068, %v7120
    %v7139 = vadd.f32 %v7069, %v7120
    %v7140 = vadd.f32 %v7070, %v7120
    %v7141 = vadd.f32 %v7071, %v7120
    %v7142 = vadd.f32 %v7072, %v7120
    %v7143 = vadd.f32 %v7073, %v7120
    %v7144 = vadd.f32 %v7074, %v7120
    %v7145 = vadd.f32 %v7075, %v7120
    %v7146 = vadd.f32 %v7076, %v7120
    %v7147 = vadd.f32 %v7077, %v7120
    %v7148 = vadd.f32 %v7078, %v7120
    %v7149 = vadd.f32 %v7079, %v7120
    %v7150 = vadd.f32 %v7080, %v7120
    %v7151 = vadd.f32 %v7081, %v7120
    %v7152 = vadd.f32 %v7082, %v7120
    %v7153 = vadd.f32 %v7083, %v7120
    %v7154 = vadd.f32 %v7084, %v7120
    %v7155 = vadd.f32 %v7085, %v7120
    %v7156 = vadd.f32 %v7086, %v7120
    %v7157 = vadd.f32 %v7087, %v7120
    %v7158 = vadd.f32 %v7088, %v7120
    %v7159 = vadd.f32 %v7089, %v7120
    %v7160 = vadd.f32 %v7090, %v7120
    %v7161 = vadd.f32 %v7091, %v7120
    %v7162 = vadd.f32 %v7092, %v7120
    %v7163 = vadd.f32 %v7093, %v7120
    %v7164 = vadd.f32 %v7094, %v7120
    %v7165 = vadd.f32 %v7095, %v7120
    %v7166 = vadd.f32 %v7096, %v7120
    %v7167 = vadd.f32 %v7097, %v7120
    %v7168 = vadd.f32 %v7098, %v7120
    %v7169 = vadd.f32 %v7099, %v7120
    %v7170 = vadd.f32 %v7100, %v7120
    %v7171 = vadd.f32 %v7101, %v7120
    %v7172 = vadd.f32 %v7102, %v7120
    %v7173 = vadd.f32 %v7103, %v7120
    %v7174 = vadd.f32 %v7104, %v7120
    %v7175 = vadd.f32 %v7105, %v7120
    %v7176 = vadd.f32 %v7106, %v7120
    %v7177 = vadd.f32 %v7107, %v7120
    %v7178 = vadd.f32 %v7108, %v7120
    %v7179 = vadd.f32 %v7109, %v7120
    %v7180 = vadd.f32 %v7110, %v7120
    %v7181 = vadd.f32 %v7111, %v7120
    %v7182 = vadd.f32 %v7112, %v7120
    %v7183 = vadd.f32 %v7113, %v7120
    %v7184 = vadd.f32 %v7114, %v7120
    %v7185 = vadd.f32 %v7115, %v7120
    %7186 = vst [vmem:[#allocation3] sm:$0xff] %v7122
    %7187 = vst [vmem:[#allocation3 + $0x8] sm:$0xff] %v7123
    %7188 = vst [vmem:[#allocation3 + $0x10] sm:$0xff] %v7124
    %7189 = vst [vmem:[#allocation3 + $0x18] sm:$0xff] %v7125
    %7190 = vst [vmem:[#allocation3 + $0x20] sm:$0xff] %v7126
    %7191 = vst [vmem:[#allocation3 + $0x28] sm:$0xff] %v7127
    %7192 = vst [vmem:[#allocation3 + $0x30] sm:$0xff] %v7128
    %7193 = vst [vmem:[#allocation3 + $0x38] sm:$0xff] %v7129
    %7194 = vst [vmem:[#allocation3 + $0x40] sm:$0xff] %v7130
    %7195 = vst [vmem:[#allocation3 + $0x48] sm:$0xff] %v7131
    %7196 = vst [vmem:[#allocation3 + $0x50] sm:$0xff] %v7132
    %7197 = vst [vmem:[#allocation3 + $0x58] sm:$0xff] %v7133
    %7198 = vst [vmem:[#allocation3 + $0x60] sm:$0xff] %v7134
    %7199 = vst [vmem:[#allocation3 + $0x68] sm:$0xff] %v7135
    %7200 = vst [vmem:[#allocation3 + $0x70] sm:$0xff] %v7136
    %7201 = vst [vmem:[#allocation3 + $0x78] sm:$0xff] %v7137
    %7202 = vst [vmem:[#allocation3 + $0x80] sm:$0xff] %v7138
    %7203 = vst [vmem:[#allocation3 + $0x88] sm:$0xff] %v7139
    %7204 = vst [vmem:[#allocation3 + $0x90] sm:$0xff] %v7140
    %7205 = vst [vmem:[#allocation3 + $0x98] sm:$0xff] %v7141
    %7206 = vst [vmem:[#allocation3 + $0xa0] sm:$0xff] %v7142
    %7207 = vst [vmem:[#allocation3 + $0xa8] sm:$0xff] %v7143
    %7208 = vst [vmem:[#allocation3 + $0xb0] sm:$0xff] %v7144
    %7209 = vst [vmem:[#allocation3 + $0xb8] sm:$0xff] %v7145
    %7210 = vst [vmem:[#allocation3 + $0xc0] sm:$0xff] %v7146
    %7211 = vst [vmem:[#allocation3 + $0xc8] sm:$0xff] %v7147
    %7212 = vst [vmem:[#allocation3 + $0xd0] sm:$0xff] %v7148
    %7213 = vst [vmem:[#allocation3 + $0xd8] sm:$0xff] %v7149
    %7214 = vst [vmem:[#allocation3 + $0xe0] sm:$0xff] %v7150
    %7215 = vst [vmem:[#allocation3 + $0xe8] sm:$0xff] %v7151
    %7216 = vst [vmem:[#allocation3 + $0xf0] sm:$0xff] %v7152
    %7217 = vst [vmem:[#allocation3 + $0xf8] sm:$0xff] %v7153
    %7218 = vst [vmem:[#allocation3 + $0x100] sm:$0xff] %v7154
    %7219 = vst [vmem:[#allocation3 + $0x108] sm:$0xff] %v7155
    %7220 = vst [vmem:[#allocation3 + $0x110] sm:$0xff] %v7156
    %7221 = vst [vmem:[#allocation3 + $0x118] sm:$0xff] %v7157
    %7222 = vst [vmem:[#allocation3 + $0x120] sm:$0xff] %v7158
    %7223 = vst [vmem:[#allocation3 + $0x128] sm:$0xff] %v7159
    %7224 = vst [vmem:[#allocation3 + $0x130] sm:$0xff] %v7160
    %7225 = vst [vmem:[#allocation3 + $0x138] sm:$0xff] %v7161
    %7226 = vst [vmem:[#allocation3 + $0x140] sm:$0xff] %v7162
    %7227 = vst [vmem:[#allocation3 + $0x148] sm:$0xff] %v7163
    %7228 = vst [vmem:[#allocation3 + $0x150] sm:$0xff] %v7164
    %7229 = vst [vmem:[#allocation3 + $0x158] sm:$0xff] %v7165
    %7230 = vst [vmem:[#allocation3 + $0x160] sm:$0xff] %v7166
    %7231 = vst [vmem:[#allocation3 + $0x168] sm:$0xff] %v7167
    %7232 = vst [vmem:[#allocation3 + $0x170] sm:$0xff] %v7168
    %7233 = vst [vmem:[#allocation3 + $0x178] sm:$0xff] %v7169
    %7234 = vst [vmem:[#allocation3 + $0x180] sm:$0xff] %v7170
    %7235 = vst [vmem:[#allocation3 + $0x188] sm:$0xff] %v7171
    %7236 = vst [vmem:[#allocation3 + $0x190] sm:$0xff] %v7172
    %7237 = vst [vmem:[#allocation3 + $0x198] sm:$0xff] %v7173
    %7238 = vst [vmem:[#allocation3 + $0x1a0] sm:$0xff] %v7174
    %7239 = vst [vmem:[#allocation3 + $0x1a8] sm:$0xff] %v7175
    %7240 = vst [vmem:[#allocation3 + $0x1b0] sm:$0xff] %v7176
    %7241 = vst [vmem:[#allocation3 + $0x1b8] sm:$0xff] %v7177
    %7242 = vst [vmem:[#allocation3 + $0x1c0] sm:$0xff] %v7178
    %7243 = vst [vmem:[#allocation3 + $0x1c8] sm:$0xff] %v7179
    %7244 = vst [vmem:[#allocation3 + $0x1d0] sm:$0xff] %v7180
    %7245 = vst [vmem:[#allocation3 + $0x1d8] sm:$0xff] %v7181
    %7246 = vst [vmem:[#allocation3 + $0x1e0] sm:$0xff] %v7182
    %7247 = vst [vmem:[#allocation3 + $0x1e8] sm:$0xff] %v7183
    %7248 = vst [vmem:[#allocation3 + $0x1f0] sm:$0xff] %v7184
    %7249 = vst [vmem:[#allocation3 + $0x1f8] sm:$0xff] %v7185
    // Predicated region
    $region22: #{cbr2d_forward.1} parent=1 // pred_check
      _
    $region23: #{cbr2d_forward.1} parent=1 // pred_check_branch
      %7251 = sbr.rel (0) target = $region25
    $region24: #{cbr2d_forward.1} parent=1 // pred_region
      %s7253 = ssub.s32 8192, 8192
      %7254 = vsyncadd [#allocation4], %s7253
      %s7255 = sshll.u32 [#allocation3], 4
      %s7256 = int_to_ptr.vmem [resolvable:$true] %s7255
      %7261 = dma.vmem_to_hbm [thread:$0]  %s7256, 8192, %s5, [#allocation4], 128, 128, 8
    $region25: #{cbr2d_forward.1} parent=1 // pred_fallthru
      _
    // Predicated region
    $region26: #{cbr2d_forward.1} parent=1 // pred_check
      _
    $region27: #{cbr2d_forward.1} parent=1 // pred_check_branch
      %7263 = sbr.rel (0) target = $region29
    $region28: #{cbr2d_forward.1} parent=1 // pred_region
      %7264 = dma.done [#allocation4], 8192
    $region29: #{cbr2d_forward.1} parent=1 // pred_fallthru
      _
    %7265 = vsyncpa [#allocation4], 1

</llo_original>
